<compile_context>
chip_gen: v7x
topology: tpu7x:2x2x1
jax: 0.10.0
libtpu: 0.0.40
codegen_flags: <defaults>
</compile_context>

<pallas_src>
import functools

import jax
import jax.numpy as jnp
import numpy as np
from jax import lax
from jax.experimental import pallas as pl
from jax.experimental.pallas import tpu as pltpu


def _im2col_flat(a, *, W, K, pad, col_mod_w):
    """im2col for a stride-1, SAME, KxK conv on a channels-major flat activation.

    a:          (C, P) activation, P = H*W (row-major pixels) on the lane axis.
    col_mod_w:  (1, P) int32, pixel column index (q % W).
    Returns (K*K*C, P); row-block t = ky*K+kx is `a` shifted by (ky-pad, kx-pad)
    with out-of-image pixels zeroed (zero-padding semantics).
    """
    C, P = a.shape
    padn = pad * W + pad                            # covers all row shifts
    z = jnp.zeros((C, padn), dtype=a.dtype)
    aflat = jnp.concatenate([z, a, z], axis=1)      # (C, P + 2*padn), zero halo
    rows = []
    for ky in range(K):
        dy = ky - pad
        for kx in range(K):
            dx = kx - pad
            start = padn + dy * W + dx              # static lane offset
            sl = aflat[:, start:start + P]          # (C, P)
            if dx != 0:
                # Kill pixels whose width shift wrapped across a row boundary.
                wc = col_mod_w + dx
                valid = jnp.logical_and(wc >= 0, wc < W)
                sl = jnp.where(valid, sl, 0.0)
            rows.append(sl)
    return jnp.concatenate(rows, axis=0)            # (K*K*C, P)


def _inception_a_kernel(x_ref, w_first_ref, b_first_ref,
                        w32_ref, b32_ref, w33_ref, b33_ref,
                        w52_ref, b52_ref, wpool_ref, bpool_ref,
                        o_ref, *, H, W):
    P = H * W
    col_mod_w = lax.broadcasted_iota(jnp.int32, (1, P), 1) % W

    x = x_ref[0]                                    # (C_in, P)

    # Fused 1x1 convs: [branch1x1 ; branch3x3_1 ; branch5x5_1].
    first = jnp.dot(w_first_ref[...], x, preferred_element_type=jnp.float32)
    first = first + b_first_ref[...]
    y1 = first[0:16, :]        # branch1x1 output
    t = first[16:32, :]        # branch3x3_1 output
    s = first[32:48, :]        # branch5x5_1 output

    # branch3x3: two 3x3 SAME convs, each as one packed matmul.
    cols_t = _im2col_flat(t, W=W, K=3, pad=1, col_mod_w=col_mod_w)
    u = jnp.dot(w32_ref[...], cols_t,
                preferred_element_type=jnp.float32) + b32_ref[...]
    cols_u = _im2col_flat(u, W=W, K=3, pad=1, col_mod_w=col_mod_w)
    y3 = jnp.dot(w33_ref[...], cols_u,
                 preferred_element_type=jnp.float32) + b33_ref[...]

    # branch5x5: one 5x5 SAME conv as one packed matmul.
    cols_s = _im2col_flat(s, W=W, K=5, pad=2, col_mod_w=col_mod_w)
    y5 = jnp.dot(w52_ref[...], cols_s,
                 preferred_element_type=jnp.float32) + b52_ref[...]

    # branch_pool: avg_pool(3x3, pad=1) folded into the 1x1 conv (weights /9,
    # tiled over the 9 taps) -> single packed matmul on im2col(x).
    cols_x = _im2col_flat(x, W=W, K=3, pad=1, col_mod_w=col_mod_w)
    yp = jnp.dot(wpool_ref[...], cols_x,
                 preferred_element_type=jnp.float32) + bpool_ref[...]

    dt = o_ref.dtype
    # Channel order matches torch.cat([branch1x1, branch3x3, branch5x5, pool]).
    o_ref[0, 0:16, :] = y1.astype(dt)
    o_ref[0, 16:40, :] = y3.astype(dt)
    o_ref[0, 40:64, :] = y5.astype(dt)
    o_ref[0, 64:88, :] = yp.astype(dt)


def _pack_conv_weight(w):
    """OIHW (O, I, K, K) -> (O, K*K*I), tap order matching _im2col_flat."""
    O, I, K, _ = w.shape
    return jnp.transpose(w, (0, 2, 3, 1)).reshape(O, K * K * I)


def _const_spec(arr):
    return pl.BlockSpec(arr.shape, lambda b, _n=arr.ndim: (0,) * _n)


def inception_a(x_nchw, params):
    """Forward of InceptionA. x: (B, C_in, H, W) -> (B, 88, H, W)."""
    (w_pool, b_pool, w1, b1, w51, b51, w52, b52,
     w31, b31, w32, b32, w33, b33) = params
    B, C_in, H, W = x_nchw.shape
    P = H * W

    # Fuse the three 1x1 convs into one (48, C_in) matmul.
    w_first = jnp.concatenate([w1.reshape(16, C_in),
                               w31.reshape(16, C_in),
                               w51.reshape(16, C_in)], axis=0)
    b_first = jnp.concatenate([b1, b31, b51], axis=0)[:, None]          # (48, 1)

    w32p = _pack_conv_weight(w32)                                       # (24, 144)
    w33p = _pack_conv_weight(w33)                                       # (24, 216)
    w52p = _pack_conv_weight(w52)                                       # (24, 400)
    wpoolp = jnp.tile(w_pool.reshape(24, C_in) / 9.0, (1, 9))           # (24, 9*C_in)

    x_flat = x_nchw.reshape(B, C_in, P)   # free reshape: NCHW is channels-major

    out_flat = pl.pallas_call(
        functools.partial(_inception_a_kernel, H=H, W=W),
        out_shape=jax.ShapeDtypeStruct((B, 88, P), x_nchw.dtype),
        grid=(B,),
        in_specs=[
            pl.BlockSpec((1, C_in, P), lambda b: (b, 0, 0)),
            _const_spec(w_first), _const_spec(b_first),
            _const_spec(w32p), _const_spec(b32[:, None]),
            _const_spec(w33p), _const_spec(b33[:, None]),
            _const_spec(w52p), _const_spec(b52[:, None]),
            _const_spec(wpoolp), _const_spec(b_pool[:, None]),
        ],
        out_specs=pl.BlockSpec((1, 88, P), lambda b: (b, 0, 0)),
        compiler_params=pltpu.CompilerParams(
            dimension_semantics=("parallel",)),
    )(x_flat, w_first, b_first,
      w32p, b32[:, None], w33p, b33[:, None],
      w52p, b52[:, None], wpoolp, b_pool[:, None])

    return out_flat.reshape(B, 88, H, W)


if __name__ == "__main__":
    B, C_in, H, W = 2, 4, 16, 16
    key = jax.random.PRNGKey(0)
    keys = jax.random.split(key, 15)

    def conv_init(kw, kb, o, i, k):
        bound = 1.0 / np.sqrt(i * k * k)
        w = jax.random.uniform(kw, (o, i, k, k), jnp.float32, -bound, bound)
        b = jax.random.uniform(kb, (o,), jnp.float32, -bound, bound)
        return w, b

    x = jax.random.normal(keys[0], (B, C_in, H, W), dtype=jnp.float32)
    w_pool, b_pool = conv_init(keys[1], keys[2], 24, C_in, 1)
    w1, b1 = conv_init(keys[3], keys[4], 16, C_in, 1)
    w51, b51 = conv_init(keys[5], keys[6], 16, C_in, 1)
    w52, b52 = conv_init(keys[7], keys[8], 24, 16, 5)
    w31, b31 = conv_init(keys[9], keys[10], 16, C_in, 1)
    w32, b32 = conv_init(keys[11], keys[12], 24, 16, 3)
    w33, b33 = conv_init(keys[13], keys[14], 24, 24, 3)

    params = (w_pool, b_pool, w1, b1, w51, b51, w52, b52,
              w31, b31, w32, b32, w33, b33)

    out = jax.jit(inception_a)(x, params)
    out = jax.block_until_ready(out)

    # Reference via XLA convolutions (same semantics as the nn.Module).
    def conv(inp, w, b, pad):
        dn = lax.conv_dimension_numbers(inp.shape, w.shape,
                                        ("NCHW", "OIHW", "NCHW"))
        y = lax.conv_general_dilated(inp, w, (1, 1), [(pad, pad), (pad, pad)],
                                     dimension_numbers=dn)
        return y + b[None, :, None, None]

    # F.avg_pool2d(x, 3, stride=1, padding=1) with count_include_pad=True.
    pooled = lax.reduce_window(x, 0.0, lax.add, (1, 1, 3, 3), (1, 1, 1, 1),
                               ((0, 0), (0, 0), (1, 1), (1, 1))) / 9.0
    ref_pool = conv(pooled, w_pool, b_pool, 0)
    ref_1x1 = conv(x, w1, b1, 0)
    ref_5x5 = conv(conv(x, w51, b51, 0), w52, b52, 2)
    ref_3x3 = conv(conv(conv(x, w31, b31, 0), w32, b32, 1), w33, b33, 1)
    ref = jnp.concatenate([ref_1x1, ref_3x3, ref_5x5, ref_pool], axis=1)

    assert out.shape == ref.shape == (B, 88, H, W)
    assert np.allclose(np.asarray(out), np.asarray(ref), atol=1e-4, rtol=1e-4)
    print("KERNEL_OK")
</pallas_src>

<mosaic_0001>
module attributes {stable_mosaic.version = 11 : i64} {
  func.func @_inception_a_kernel(%arg0: i32, %arg1: memref<1x4x256xf32, #tpu.memory_space<vmem>>, %arg2: memref<48x4xf32, #tpu.memory_space<vmem>>, %arg3: memref<48x1xf32, #tpu.memory_space<vmem>>, %arg4: memref<24x144xf32, #tpu.memory_space<vmem>>, %arg5: memref<24x1xf32, #tpu.memory_space<vmem>>, %arg6: memref<24x216xf32, #tpu.memory_space<vmem>>, %arg7: memref<24x1xf32, #tpu.memory_space<vmem>>, %arg8: memref<24x400xf32, #tpu.memory_space<vmem>>, %arg9: memref<24x1xf32, #tpu.memory_space<vmem>>, %arg10: memref<24x36xf32, #tpu.memory_space<vmem>>, %arg11: memref<24x1xf32, #tpu.memory_space<vmem>>, %arg12: memref<1x88x256xf32, #tpu.memory_space<vmem>>) attributes {dimension_semantics = [#tpu.dimension_semantics<parallel>], iteration_bounds = array<i64: 2>, scalar_prefetch = 0 : i64, scratch_operands = 0 : i64, tpu.core_type = #tpu.core_type<tc>, window_params = [{transform_indices = @transform_0, window_bounds = array<i64: 1, 4, 256>}, {pipeline_mode = #tpu.pipeline_mode<synchronous>, transform_indices = @transform_1, window_bounds = array<i64: 48, 4>}, {pipeline_mode = #tpu.pipeline_mode<synchronous>, transform_indices = @transform_2, window_bounds = array<i64: 48, 1>}, {pipeline_mode = #tpu.pipeline_mode<synchronous>, transform_indices = @transform_3, window_bounds = array<i64: 24, 144>}, {pipeline_mode = #tpu.pipeline_mode<synchronous>, transform_indices = @transform_4, window_bounds = array<i64: 24, 1>}, {pipeline_mode = #tpu.pipeline_mode<synchronous>, transform_indices = @transform_5, window_bounds = array<i64: 24, 216>}, {pipeline_mode = #tpu.pipeline_mode<synchronous>, transform_indices = @transform_6, window_bounds = array<i64: 24, 1>}, {pipeline_mode = #tpu.pipeline_mode<synchronous>, transform_indices = @transform_7, window_bounds = array<i64: 24, 400>}, {pipeline_mode = #tpu.pipeline_mode<synchronous>, transform_indices = @transform_8, window_bounds = array<i64: 24, 1>}, {pipeline_mode = #tpu.pipeline_mode<synchronous>, transform_indices = @transform_9, window_bounds = array<i64: 24, 36>}, {pipeline_mode = #tpu.pipeline_mode<synchronous>, transform_indices = @transform_10, window_bounds = array<i64: 24, 1>}, {transform_indices = @transform_11, window_bounds = array<i64: 1, 88, 256>}]} {
    %0 = tpu.iota {dimensions = array<i32: 1>} : vector<1x256xi32>
    %c16_i32 = arith.constant 16 : i32
    %c0_i32 = arith.constant 0 : i32
    %1 = arith.cmpi eq, %c16_i32, %c0_i32 : i32
    %c1_i32 = arith.constant 1 : i32
    %2 = arith.select %1, %c1_i32, %c16_i32 : i32
    %3 = vector.broadcast %2 : i32 to vector<1x256xi32>
    %4 = arith.remsi %0, %3 : vector<1x256xi32>
    %c0_i32_0 = arith.constant 0 : i32
    %5 = vector.broadcast %c0_i32_0 : i32 to vector<1x256xi32>
    %6 = arith.cmpi ne, %4, %5 : vector<1x256xi32>
    %c0_i32_1 = arith.constant 0 : i32
    %7 = vector.broadcast %c0_i32_1 : i32 to vector<1x256xi32>
    %8 = arith.cmpi slt, %4, %7 : vector<1x256xi32>
    %c0_i32_2 = arith.constant 0 : i32
    %9 = arith.cmpi slt, %2, %c0_i32_2 : i32
    %10 = vector.broadcast %9 : i1 to vector<1x256xi1>
    %11 = vector.broadcast %10 : vector<1x256xi1> to vector<1x256xi1>
    %12 = arith.xori %8, %11 : vector<1x256xi1>
    %13 = arith.andi %12, %6 : vector<1x256xi1>
    %14 = vector.broadcast %2 : i32 to vector<1x256xi32>
    %15 = arith.addi %4, %14 : vector<1x256xi32>
    %16 = arith.select %13, %15, %4 : vector<1x256xi1>, vector<1x256xi32>
    %c0 = arith.constant 0 : index
    %c0_3 = arith.constant 0 : index
    %c0_4 = arith.constant 0 : index
    %17 = vector.load %arg1[%c0, %c0_3, %c0_4] : memref<1x4x256xf32, #tpu.memory_space<vmem>>, vector<1x4x256xf32>
    %18 = vector.shape_cast %17 : vector<1x4x256xf32> to vector<4x256xf32>
    %c0_5 = arith.constant 0 : index
    %c0_6 = arith.constant 0 : index
    %19 = vector.load %arg2[%c0_5, %c0_6] : memref<48x4xf32, #tpu.memory_space<vmem>>, vector<48x4xf32>
    %cst = arith.constant dense<0.000000e+00> : vector<48x256xf32>
    %20 = tpu.matmul %19, %18, %cst {dimension_numbers = #tpu.dot_dimension_numbers<[1], [0], [0], [1], [0, 0, 1, 1], [], []>} : vector<48x4xf32>, vector<4x256xf32>, vector<48x256xf32> -> vector<48x256xf32>
    %c0_7 = arith.constant 0 : index
    %c0_8 = arith.constant 0 : index
    %21 = vector.load %arg3[%c0_7, %c0_8] : memref<48x1xf32, #tpu.memory_space<vmem>>, vector<48x1xf32>
    %22 = vector.broadcast %21 : vector<48x1xf32> to vector<48x256xf32>
    %23 = arith.addf %20, %22 : vector<48x256xf32>
    %24 = vector.extract_strided_slice %23 {offsets = [0, 0], sizes = [16, 256], strides = [1, 1]} : vector<48x256xf32> to vector<16x256xf32>
    %25 = vector.extract_strided_slice %23 {offsets = [16, 0], sizes = [16, 256], strides = [1, 1]} : vector<48x256xf32> to vector<16x256xf32>
    %26 = vector.extract_strided_slice %23 {offsets = [32, 0], sizes = [16, 256], strides = [1, 1]} : vector<48x256xf32> to vector<16x256xf32>
    %cst_9 = arith.constant 0.000000e+00 : f32
    %27 = vector.broadcast %cst_9 : f32 to vector<16x17xf32>
    %28 = tpu.concatenate %27, %25, %27 in 1 : vector<16x17xf32>, vector<16x256xf32>, vector<16x17xf32> -> vector<16x290xf32>
    %29 = vector.extract_strided_slice %28 {offsets = [0, 0], sizes = [16, 256], strides = [1, 1]} : vector<16x290xf32> to vector<16x256xf32>
    %c-1_i32 = arith.constant -1 : i32
    %30 = vector.broadcast %c-1_i32 : i32 to vector<1x256xi32>
    %31 = arith.addi %16, %30 : vector<1x256xi32>
    %c0_i32_10 = arith.constant 0 : i32
    %32 = vector.broadcast %c0_i32_10 : i32 to vector<1x256xi32>
    %33 = arith.cmpi sge, %31, %32 : vector<1x256xi32>
    %c16_i32_11 = arith.constant 16 : i32
    %34 = vector.broadcast %c16_i32_11 : i32 to vector<1x256xi32>
    %35 = arith.cmpi slt, %31, %34 : vector<1x256xi32>
    %36 = arith.andi %33, %35 : vector<1x256xi1>
    %cst_12 = arith.constant 0.000000e+00 : f32
    %37 = vector.shape_cast %36 : vector<1x256xi1> to vector<1x256xi1>
    %38 = vector.broadcast %37 : vector<1x256xi1> to vector<16x256xi1>
    %39 = vector.broadcast %cst_12 : f32 to vector<16x256xf32>
    %40 = arith.select %38, %29, %39 : vector<16x256xi1>, vector<16x256xf32>
    %41 = vector.extract_strided_slice %28 {offsets = [0, 1], sizes = [16, 256], strides = [1, 1]} : vector<16x290xf32> to vector<16x256xf32>
    %42 = vector.extract_strided_slice %28 {offsets = [0, 2], sizes = [16, 256], strides = [1, 1]} : vector<16x290xf32> to vector<16x256xf32>
    %c1_i32_13 = arith.constant 1 : i32
    %43 = vector.broadcast %c1_i32_13 : i32 to vector<1x256xi32>
    %44 = arith.addi %16, %43 : vector<1x256xi32>
    %c0_i32_14 = arith.constant 0 : i32
    %45 = vector.broadcast %c0_i32_14 : i32 to vector<1x256xi32>
    %46 = arith.cmpi sge, %44, %45 : vector<1x256xi32>
    %c16_i32_15 = arith.constant 16 : i32
    %47 = vector.broadcast %c16_i32_15 : i32 to vector<1x256xi32>
    %48 = arith.cmpi slt, %44, %47 : vector<1x256xi32>
    %49 = arith.andi %46, %48 : vector<1x256xi1>
    %cst_16 = arith.constant 0.000000e+00 : f32
    %50 = vector.shape_cast %49 : vector<1x256xi1> to vector<1x256xi1>
    %51 = vector.broadcast %50 : vector<1x256xi1> to vector<16x256xi1>
    %52 = vector.broadcast %cst_16 : f32 to vector<16x256xf32>
    %53 = arith.select %51, %42, %52 : vector<16x256xi1>, vector<16x256xf32>
    %54 = vector.extract_strided_slice %28 {offsets = [0, 16], sizes = [16, 256], strides = [1, 1]} : vector<16x290xf32> to vector<16x256xf32>
    %c-1_i32_17 = arith.constant -1 : i32
    %55 = vector.broadcast %c-1_i32_17 : i32 to vector<1x256xi32>
    %56 = arith.addi %16, %55 : vector<1x256xi32>
    %c0_i32_18 = arith.constant 0 : i32
    %57 = vector.broadcast %c0_i32_18 : i32 to vector<1x256xi32>
    %58 = arith.cmpi sge, %56, %57 : vector<1x256xi32>
    %c16_i32_19 = arith.constant 16 : i32
    %59 = vector.broadcast %c16_i32_19 : i32 to vector<1x256xi32>
    %60 = arith.cmpi slt, %56, %59 : vector<1x256xi32>
    %61 = arith.andi %58, %60 : vector<1x256xi1>
    %cst_20 = arith.constant 0.000000e+00 : f32
    %62 = vector.shape_cast %61 : vector<1x256xi1> to vector<1x256xi1>
    %63 = vector.broadcast %62 : vector<1x256xi1> to vector<16x256xi1>
    %64 = vector.broadcast %cst_20 : f32 to vector<16x256xf32>
    %65 = arith.select %63, %54, %64 : vector<16x256xi1>, vector<16x256xf32>
    %66 = vector.extract_strided_slice %28 {offsets = [0, 17], sizes = [16, 256], strides = [1, 1]} : vector<16x290xf32> to vector<16x256xf32>
    %67 = vector.extract_strided_slice %28 {offsets = [0, 18], sizes = [16, 256], strides = [1, 1]} : vector<16x290xf32> to vector<16x256xf32>
    %c1_i32_21 = arith.constant 1 : i32
    %68 = vector.broadcast %c1_i32_21 : i32 to vector<1x256xi32>
    %69 = arith.addi %16, %68 : vector<1x256xi32>
    %c0_i32_22 = arith.constant 0 : i32
    %70 = vector.broadcast %c0_i32_22 : i32 to vector<1x256xi32>
    %71 = arith.cmpi sge, %69, %70 : vector<1x256xi32>
    %c16_i32_23 = arith.constant 16 : i32
    %72 = vector.broadcast %c16_i32_23 : i32 to vector<1x256xi32>
    %73 = arith.cmpi slt, %69, %72 : vector<1x256xi32>
    %74 = arith.andi %71, %73 : vector<1x256xi1>
    %cst_24 = arith.constant 0.000000e+00 : f32
    %75 = vector.shape_cast %74 : vector<1x256xi1> to vector<1x256xi1>
    %76 = vector.broadcast %75 : vector<1x256xi1> to vector<16x256xi1>
    %77 = vector.broadcast %cst_24 : f32 to vector<16x256xf32>
    %78 = arith.select %76, %67, %77 : vector<16x256xi1>, vector<16x256xf32>
    %79 = vector.extract_strided_slice %28 {offsets = [0, 32], sizes = [16, 256], strides = [1, 1]} : vector<16x290xf32> to vector<16x256xf32>
    %c-1_i32_25 = arith.constant -1 : i32
    %80 = vector.broadcast %c-1_i32_25 : i32 to vector<1x256xi32>
    %81 = arith.addi %16, %80 : vector<1x256xi32>
    %c0_i32_26 = arith.constant 0 : i32
    %82 = vector.broadcast %c0_i32_26 : i32 to vector<1x256xi32>
    %83 = arith.cmpi sge, %81, %82 : vector<1x256xi32>
    %c16_i32_27 = arith.constant 16 : i32
    %84 = vector.broadcast %c16_i32_27 : i32 to vector<1x256xi32>
    %85 = arith.cmpi slt, %81, %84 : vector<1x256xi32>
    %86 = arith.andi %83, %85 : vector<1x256xi1>
    %cst_28 = arith.constant 0.000000e+00 : f32
    %87 = vector.shape_cast %86 : vector<1x256xi1> to vector<1x256xi1>
    %88 = vector.broadcast %87 : vector<1x256xi1> to vector<16x256xi1>
    %89 = vector.broadcast %cst_28 : f32 to vector<16x256xf32>
    %90 = arith.select %88, %79, %89 : vector<16x256xi1>, vector<16x256xf32>
    %91 = vector.extract_strided_slice %28 {offsets = [0, 33], sizes = [16, 256], strides = [1, 1]} : vector<16x290xf32> to vector<16x256xf32>
    %92 = vector.extract_strided_slice %28 {offsets = [0, 34], sizes = [16, 256], strides = [1, 1]} : vector<16x290xf32> to vector<16x256xf32>
    %c1_i32_29 = arith.constant 1 : i32
    %93 = vector.broadcast %c1_i32_29 : i32 to vector<1x256xi32>
    %94 = arith.addi %16, %93 : vector<1x256xi32>
    %c0_i32_30 = arith.constant 0 : i32
    %95 = vector.broadcast %c0_i32_30 : i32 to vector<1x256xi32>
    %96 = arith.cmpi sge, %94, %95 : vector<1x256xi32>
    %c16_i32_31 = arith.constant 16 : i32
    %97 = vector.broadcast %c16_i32_31 : i32 to vector<1x256xi32>
    %98 = arith.cmpi slt, %94, %97 : vector<1x256xi32>
    %99 = arith.andi %96, %98 : vector<1x256xi1>
    %cst_32 = arith.constant 0.000000e+00 : f32
    %100 = vector.shape_cast %99 : vector<1x256xi1> to vector<1x256xi1>
    %101 = vector.broadcast %100 : vector<1x256xi1> to vector<16x256xi1>
    %102 = vector.broadcast %cst_32 : f32 to vector<16x256xf32>
    %103 = arith.select %101, %92, %102 : vector<16x256xi1>, vector<16x256xf32>
    %104 = tpu.concatenate %40, %41, %53, %65, %66, %78, %90, %91, %103 in 0 : vector<16x256xf32>, vector<16x256xf32>, vector<16x256xf32>, vector<16x256xf32>, vector<16x256xf32>, vector<16x256xf32>, vector<16x256xf32>, vector<16x256xf32>, vector<16x256xf32> -> vector<144x256xf32>
    %c0_33 = arith.constant 0 : index
    %c0_34 = arith.constant 0 : index
    %105 = vector.load %arg4[%c0_33, %c0_34] : memref<24x144xf32, #tpu.memory_space<vmem>>, vector<24x144xf32>
    %cst_35 = arith.constant dense<0.000000e+00> : vector<24x256xf32>
    %106 = tpu.matmul %105, %104, %cst_35 {dimension_numbers = #tpu.dot_dimension_numbers<[1], [0], [0], [1], [0, 0, 1, 1], [], []>} : vector<24x144xf32>, vector<144x256xf32>, vector<24x256xf32> -> vector<24x256xf32>
    %c0_36 = arith.constant 0 : index
    %c0_37 = arith.constant 0 : index
    %107 = vector.load %arg5[%c0_36, %c0_37] : memref<24x1xf32, #tpu.memory_space<vmem>>, vector<24x1xf32>
    %108 = vector.broadcast %107 : vector<24x1xf32> to vector<24x256xf32>
    %109 = arith.addf %106, %108 : vector<24x256xf32>
    %cst_38 = arith.constant 0.000000e+00 : f32
    %110 = vector.broadcast %cst_38 : f32 to vector<24x17xf32>
    %111 = tpu.concatenate %110, %109, %110 in 1 : vector<24x17xf32>, vector<24x256xf32>, vector<24x17xf32> -> vector<24x290xf32>
    %112 = vector.extract_strided_slice %111 {offsets = [0, 0], sizes = [24, 256], strides = [1, 1]} : vector<24x290xf32> to vector<24x256xf32>
    %c-1_i32_39 = arith.constant -1 : i32
    %113 = vector.broadcast %c-1_i32_39 : i32 to vector<1x256xi32>
    %114 = arith.addi %16, %113 : vector<1x256xi32>
    %c0_i32_40 = arith.constant 0 : i32
    %115 = vector.broadcast %c0_i32_40 : i32 to vector<1x256xi32>
    %116 = arith.cmpi sge, %114, %115 : vector<1x256xi32>
    %c16_i32_41 = arith.constant 16 : i32
    %117 = vector.broadcast %c16_i32_41 : i32 to vector<1x256xi32>
    %118 = arith.cmpi slt, %114, %117 : vector<1x256xi32>
    %119 = arith.andi %116, %118 : vector<1x256xi1>
    %cst_42 = arith.constant 0.000000e+00 : f32
    %120 = vector.shape_cast %119 : vector<1x256xi1> to vector<1x256xi1>
    %121 = vector.broadcast %120 : vector<1x256xi1> to vector<24x256xi1>
    %122 = vector.broadcast %cst_42 : f32 to vector<24x256xf32>
    %123 = arith.select %121, %112, %122 : vector<24x256xi1>, vector<24x256xf32>
    %124 = vector.extract_strided_slice %111 {offsets = [0, 1], sizes = [24, 256], strides = [1, 1]} : vector<24x290xf32> to vector<24x256xf32>
    %125 = vector.extract_strided_slice %111 {offsets = [0, 2], sizes = [24, 256], strides = [1, 1]} : vector<24x290xf32> to vector<24x256xf32>
    %c1_i32_43 = arith.constant 1 : i32
    %126 = vector.broadcast %c1_i32_43 : i32 to vector<1x256xi32>
    %127 = arith.addi %16, %126 : vector<1x256xi32>
    %c0_i32_44 = arith.constant 0 : i32
    %128 = vector.broadcast %c0_i32_44 : i32 to vector<1x256xi32>
    %129 = arith.cmpi sge, %127, %128 : vector<1x256xi32>
    %c16_i32_45 = arith.constant 16 : i32
    %130 = vector.broadcast %c16_i32_45 : i32 to vector<1x256xi32>
    %131 = arith.cmpi slt, %127, %130 : vector<1x256xi32>
    %132 = arith.andi %129, %131 : vector<1x256xi1>
    %cst_46 = arith.constant 0.000000e+00 : f32
    %133 = vector.shape_cast %132 : vector<1x256xi1> to vector<1x256xi1>
    %134 = vector.broadcast %133 : vector<1x256xi1> to vector<24x256xi1>
    %135 = vector.broadcast %cst_46 : f32 to vector<24x256xf32>
    %136 = arith.select %134, %125, %135 : vector<24x256xi1>, vector<24x256xf32>
    %137 = vector.extract_strided_slice %111 {offsets = [0, 16], sizes = [24, 256], strides = [1, 1]} : vector<24x290xf32> to vector<24x256xf32>
    %c-1_i32_47 = arith.constant -1 : i32
    %138 = vector.broadcast %c-1_i32_47 : i32 to vector<1x256xi32>
    %139 = arith.addi %16, %138 : vector<1x256xi32>
    %c0_i32_48 = arith.constant 0 : i32
    %140 = vector.broadcast %c0_i32_48 : i32 to vector<1x256xi32>
    %141 = arith.cmpi sge, %139, %140 : vector<1x256xi32>
    %c16_i32_49 = arith.constant 16 : i32
    %142 = vector.broadcast %c16_i32_49 : i32 to vector<1x256xi32>
    %143 = arith.cmpi slt, %139, %142 : vector<1x256xi32>
    %144 = arith.andi %141, %143 : vector<1x256xi1>
    %cst_50 = arith.constant 0.000000e+00 : f32
    %145 = vector.shape_cast %144 : vector<1x256xi1> to vector<1x256xi1>
    %146 = vector.broadcast %145 : vector<1x256xi1> to vector<24x256xi1>
    %147 = vector.broadcast %cst_50 : f32 to vector<24x256xf32>
    %148 = arith.select %146, %137, %147 : vector<24x256xi1>, vector<24x256xf32>
    %149 = vector.extract_strided_slice %111 {offsets = [0, 17], sizes = [24, 256], strides = [1, 1]} : vector<24x290xf32> to vector<24x256xf32>
    %150 = vector.extract_strided_slice %111 {offsets = [0, 18], sizes = [24, 256], strides = [1, 1]} : vector<24x290xf32> to vector<24x256xf32>
    %c1_i32_51 = arith.constant 1 : i32
    %151 = vector.broadcast %c1_i32_51 : i32 to vector<1x256xi32>
    %152 = arith.addi %16, %151 : vector<1x256xi32>
    %c0_i32_52 = arith.constant 0 : i32
    %153 = vector.broadcast %c0_i32_52 : i32 to vector<1x256xi32>
    %154 = arith.cmpi sge, %152, %153 : vector<1x256xi32>
    %c16_i32_53 = arith.constant 16 : i32
    %155 = vector.broadcast %c16_i32_53 : i32 to vector<1x256xi32>
    %156 = arith.cmpi slt, %152, %155 : vector<1x256xi32>
    %157 = arith.andi %154, %156 : vector<1x256xi1>
    %cst_54 = arith.constant 0.000000e+00 : f32
    %158 = vector.shape_cast %157 : vector<1x256xi1> to vector<1x256xi1>
    %159 = vector.broadcast %158 : vector<1x256xi1> to vector<24x256xi1>
    %160 = vector.broadcast %cst_54 : f32 to vector<24x256xf32>
    %161 = arith.select %159, %150, %160 : vector<24x256xi1>, vector<24x256xf32>
    %162 = vector.extract_strided_slice %111 {offsets = [0, 32], sizes = [24, 256], strides = [1, 1]} : vector<24x290xf32> to vector<24x256xf32>
    %c-1_i32_55 = arith.constant -1 : i32
    %163 = vector.broadcast %c-1_i32_55 : i32 to vector<1x256xi32>
    %164 = arith.addi %16, %163 : vector<1x256xi32>
    %c0_i32_56 = arith.constant 0 : i32
    %165 = vector.broadcast %c0_i32_56 : i32 to vector<1x256xi32>
    %166 = arith.cmpi sge, %164, %165 : vector<1x256xi32>
    %c16_i32_57 = arith.constant 16 : i32
    %167 = vector.broadcast %c16_i32_57 : i32 to vector<1x256xi32>
    %168 = arith.cmpi slt, %164, %167 : vector<1x256xi32>
    %169 = arith.andi %166, %168 : vector<1x256xi1>
    %cst_58 = arith.constant 0.000000e+00 : f32
    %170 = vector.shape_cast %169 : vector<1x256xi1> to vector<1x256xi1>
    %171 = vector.broadcast %170 : vector<1x256xi1> to vector<24x256xi1>
    %172 = vector.broadcast %cst_58 : f32 to vector<24x256xf32>
    %173 = arith.select %171, %162, %172 : vector<24x256xi1>, vector<24x256xf32>
    %174 = vector.extract_strided_slice %111 {offsets = [0, 33], sizes = [24, 256], strides = [1, 1]} : vector<24x290xf32> to vector<24x256xf32>
    %175 = vector.extract_strided_slice %111 {offsets = [0, 34], sizes = [24, 256], strides = [1, 1]} : vector<24x290xf32> to vector<24x256xf32>
    %c1_i32_59 = arith.constant 1 : i32
    %176 = vector.broadcast %c1_i32_59 : i32 to vector<1x256xi32>
    %177 = arith.addi %16, %176 : vector<1x256xi32>
    %c0_i32_60 = arith.constant 0 : i32
    %178 = vector.broadcast %c0_i32_60 : i32 to vector<1x256xi32>
    %179 = arith.cmpi sge, %177, %178 : vector<1x256xi32>
    %c16_i32_61 = arith.constant 16 : i32
    %180 = vector.broadcast %c16_i32_61 : i32 to vector<1x256xi32>
    %181 = arith.cmpi slt, %177, %180 : vector<1x256xi32>
    %182 = arith.andi %179, %181 : vector<1x256xi1>
    %cst_62 = arith.constant 0.000000e+00 : f32
    %183 = vector.shape_cast %182 : vector<1x256xi1> to vector<1x256xi1>
    %184 = vector.broadcast %183 : vector<1x256xi1> to vector<24x256xi1>
    %185 = vector.broadcast %cst_62 : f32 to vector<24x256xf32>
    %186 = arith.select %184, %175, %185 : vector<24x256xi1>, vector<24x256xf32>
    %187 = tpu.concatenate %123, %124, %136, %148, %149, %161, %173, %174, %186 in 0 : vector<24x256xf32>, vector<24x256xf32>, vector<24x256xf32>, vector<24x256xf32>, vector<24x256xf32>, vector<24x256xf32>, vector<24x256xf32>, vector<24x256xf32>, vector<24x256xf32> -> vector<216x256xf32>
    %c0_63 = arith.constant 0 : index
    %c0_64 = arith.constant 0 : index
    %188 = vector.load %arg6[%c0_63, %c0_64] : memref<24x216xf32, #tpu.memory_space<vmem>>, vector<24x216xf32>
    %cst_65 = arith.constant dense<0.000000e+00> : vector<24x256xf32>
    %189 = tpu.matmul %188, %187, %cst_65 {dimension_numbers = #tpu.dot_dimension_numbers<[1], [0], [0], [1], [0, 0, 1, 1], [], []>} : vector<24x216xf32>, vector<216x256xf32>, vector<24x256xf32> -> vector<24x256xf32>
    %c0_66 = arith.constant 0 : index
    %c0_67 = arith.constant 0 : index
    %190 = vector.load %arg7[%c0_66, %c0_67] : memref<24x1xf32, #tpu.memory_space<vmem>>, vector<24x1xf32>
    %191 = vector.broadcast %190 : vector<24x1xf32> to vector<24x256xf32>
    %192 = arith.addf %189, %191 : vector<24x256xf32>
    %cst_68 = arith.constant 0.000000e+00 : f32
    %193 = vector.broadcast %cst_68 : f32 to vector<16x34xf32>
    %194 = tpu.concatenate %193, %26, %193 in 1 : vector<16x34xf32>, vector<16x256xf32>, vector<16x34xf32> -> vector<16x324xf32>
    %195 = vector.extract_strided_slice %194 {offsets = [0, 0], sizes = [16, 256], strides = [1, 1]} : vector<16x324xf32> to vector<16x256xf32>
    %c-2_i32 = arith.constant -2 : i32
    %196 = vector.broadcast %c-2_i32 : i32 to vector<1x256xi32>
    %197 = arith.addi %16, %196 : vector<1x256xi32>
    %c0_i32_69 = arith.constant 0 : i32
    %198 = vector.broadcast %c0_i32_69 : i32 to vector<1x256xi32>
    %199 = arith.cmpi sge, %197, %198 : vector<1x256xi32>
    %c16_i32_70 = arith.constant 16 : i32
    %200 = vector.broadcast %c16_i32_70 : i32 to vector<1x256xi32>
    %201 = arith.cmpi slt, %197, %200 : vector<1x256xi32>
    %202 = arith.andi %199, %201 : vector<1x256xi1>
    %cst_71 = arith.constant 0.000000e+00 : f32
    %203 = vector.shape_cast %202 : vector<1x256xi1> to vector<1x256xi1>
    %204 = vector.broadcast %203 : vector<1x256xi1> to vector<16x256xi1>
    %205 = vector.broadcast %cst_71 : f32 to vector<16x256xf32>
    %206 = arith.select %204, %195, %205 : vector<16x256xi1>, vector<16x256xf32>
    %207 = vector.extract_strided_slice %194 {offsets = [0, 1], sizes = [16, 256], strides = [1, 1]} : vector<16x324xf32> to vector<16x256xf32>
    %c-1_i32_72 = arith.constant -1 : i32
    %208 = vector.broadcast %c-1_i32_72 : i32 to vector<1x256xi32>
    %209 = arith.addi %16, %208 : vector<1x256xi32>
    %c0_i32_73 = arith.constant 0 : i32
    %210 = vector.broadcast %c0_i32_73 : i32 to vector<1x256xi32>
    %211 = arith.cmpi sge, %209, %210 : vector<1x256xi32>
    %c16_i32_74 = arith.constant 16 : i32
    %212 = vector.broadcast %c16_i32_74 : i32 to vector<1x256xi32>
    %213 = arith.cmpi slt, %209, %212 : vector<1x256xi32>
    %214 = arith.andi %211, %213 : vector<1x256xi1>
    %cst_75 = arith.constant 0.000000e+00 : f32
    %215 = vector.shape_cast %214 : vector<1x256xi1> to vector<1x256xi1>
    %216 = vector.broadcast %215 : vector<1x256xi1> to vector<16x256xi1>
    %217 = vector.broadcast %cst_75 : f32 to vector<16x256xf32>
    %218 = arith.select %216, %207, %217 : vector<16x256xi1>, vector<16x256xf32>
    %219 = vector.extract_strided_slice %194 {offsets = [0, 2], sizes = [16, 256], strides = [1, 1]} : vector<16x324xf32> to vector<16x256xf32>
    %220 = vector.extract_strided_slice %194 {offsets = [0, 3], sizes = [16, 256], strides = [1, 1]} : vector<16x324xf32> to vector<16x256xf32>
    %c1_i32_76 = arith.constant 1 : i32
    %221 = vector.broadcast %c1_i32_76 : i32 to vector<1x256xi32>
    %222 = arith.addi %16, %221 : vector<1x256xi32>
    %c0_i32_77 = arith.constant 0 : i32
    %223 = vector.broadcast %c0_i32_77 : i32 to vector<1x256xi32>
    %224 = arith.cmpi sge, %222, %223 : vector<1x256xi32>
    %c16_i32_78 = arith.constant 16 : i32
    %225 = vector.broadcast %c16_i32_78 : i32 to vector<1x256xi32>
    %226 = arith.cmpi slt, %222, %225 : vector<1x256xi32>
    %227 = arith.andi %224, %226 : vector<1x256xi1>
    %cst_79 = arith.constant 0.000000e+00 : f32
    %228 = vector.shape_cast %227 : vector<1x256xi1> to vector<1x256xi1>
    %229 = vector.broadcast %228 : vector<1x256xi1> to vector<16x256xi1>
    %230 = vector.broadcast %cst_79 : f32 to vector<16x256xf32>
    %231 = arith.select %229, %220, %230 : vector<16x256xi1>, vector<16x256xf32>
    %232 = vector.extract_strided_slice %194 {offsets = [0, 4], sizes = [16, 256], strides = [1, 1]} : vector<16x324xf32> to vector<16x256xf32>
    %c2_i32 = arith.constant 2 : i32
    %233 = vector.broadcast %c2_i32 : i32 to vector<1x256xi32>
    %234 = arith.addi %16, %233 : vector<1x256xi32>
    %c0_i32_80 = arith.constant 0 : i32
    %235 = vector.broadcast %c0_i32_80 : i32 to vector<1x256xi32>
    %236 = arith.cmpi sge, %234, %235 : vector<1x256xi32>
    %c16_i32_81 = arith.constant 16 : i32
    %237 = vector.broadcast %c16_i32_81 : i32 to vector<1x256xi32>
    %238 = arith.cmpi slt, %234, %237 : vector<1x256xi32>
    %239 = arith.andi %236, %238 : vector<1x256xi1>
    %cst_82 = arith.constant 0.000000e+00 : f32
    %240 = vector.shape_cast %239 : vector<1x256xi1> to vector<1x256xi1>
    %241 = vector.broadcast %240 : vector<1x256xi1> to vector<16x256xi1>
    %242 = vector.broadcast %cst_82 : f32 to vector<16x256xf32>
    %243 = arith.select %241, %232, %242 : vector<16x256xi1>, vector<16x256xf32>
    %244 = vector.extract_strided_slice %194 {offsets = [0, 16], sizes = [16, 256], strides = [1, 1]} : vector<16x324xf32> to vector<16x256xf32>
    %c-2_i32_83 = arith.constant -2 : i32
    %245 = vector.broadcast %c-2_i32_83 : i32 to vector<1x256xi32>
    %246 = arith.addi %16, %245 : vector<1x256xi32>
    %c0_i32_84 = arith.constant 0 : i32
    %247 = vector.broadcast %c0_i32_84 : i32 to vector<1x256xi32>
    %248 = arith.cmpi sge, %246, %247 : vector<1x256xi32>
    %c16_i32_85 = arith.constant 16 : i32
    %249 = vector.broadcast %c16_i32_85 : i32 to vector<1x256xi32>
    %250 = arith.cmpi slt, %246, %249 : vector<1x256xi32>
    %251 = arith.andi %248, %250 : vector<1x256xi1>
    %cst_86 = arith.constant 0.000000e+00 : f32
    %252 = vector.shape_cast %251 : vector<1x256xi1> to vector<1x256xi1>
    %253 = vector.broadcast %252 : vector<1x256xi1> to vector<16x256xi1>
    %254 = vector.broadcast %cst_86 : f32 to vector<16x256xf32>
    %255 = arith.select %253, %244, %254 : vector<16x256xi1>, vector<16x256xf32>
    %256 = vector.extract_strided_slice %194 {offsets = [0, 17], sizes = [16, 256], strides = [1, 1]} : vector<16x324xf32> to vector<16x256xf32>
    %c-1_i32_87 = arith.constant -1 : i32
    %257 = vector.broadcast %c-1_i32_87 : i32 to vector<1x256xi32>
    %258 = arith.addi %16, %257 : vector<1x256xi32>
    %c0_i32_88 = arith.constant 0 : i32
    %259 = vector.broadcast %c0_i32_88 : i32 to vector<1x256xi32>
    %260 = arith.cmpi sge, %258, %259 : vector<1x256xi32>
    %c16_i32_89 = arith.constant 16 : i32
    %261 = vector.broadcast %c16_i32_89 : i32 to vector<1x256xi32>
    %262 = arith.cmpi slt, %258, %261 : vector<1x256xi32>
    %263 = arith.andi %260, %262 : vector<1x256xi1>
    %cst_90 = arith.constant 0.000000e+00 : f32
    %264 = vector.shape_cast %263 : vector<1x256xi1> to vector<1x256xi1>
    %265 = vector.broadcast %264 : vector<1x256xi1> to vector<16x256xi1>
    %266 = vector.broadcast %cst_90 : f32 to vector<16x256xf32>
    %267 = arith.select %265, %256, %266 : vector<16x256xi1>, vector<16x256xf32>
    %268 = vector.extract_strided_slice %194 {offsets = [0, 18], sizes = [16, 256], strides = [1, 1]} : vector<16x324xf32> to vector<16x256xf32>
    %269 = vector.extract_strided_slice %194 {offsets = [0, 19], sizes = [16, 256], strides = [1, 1]} : vector<16x324xf32> to vector<16x256xf32>
    %c1_i32_91 = arith.constant 1 : i32
    %270 = vector.broadcast %c1_i32_91 : i32 to vector<1x256xi32>
    %271 = arith.addi %16, %270 : vector<1x256xi32>
    %c0_i32_92 = arith.constant 0 : i32
    %272 = vector.broadcast %c0_i32_92 : i32 to vector<1x256xi32>
    %273 = arith.cmpi sge, %271, %272 : vector<1x256xi32>
    %c16_i32_93 = arith.constant 16 : i32
    %274 = vector.broadcast %c16_i32_93 : i32 to vector<1x256xi32>
    %275 = arith.cmpi slt, %271, %274 : vector<1x256xi32>
    %276 = arith.andi %273, %275 : vector<1x256xi1>
    %cst_94 = arith.constant 0.000000e+00 : f32
    %277 = vector.shape_cast %276 : vector<1x256xi1> to vector<1x256xi1>
    %278 = vector.broadcast %277 : vector<1x256xi1> to vector<16x256xi1>
    %279 = vector.broadcast %cst_94 : f32 to vector<16x256xf32>
    %280 = arith.select %278, %269, %279 : vector<16x256xi1>, vector<16x256xf32>
    %281 = vector.extract_strided_slice %194 {offsets = [0, 20], sizes = [16, 256], strides = [1, 1]} : vector<16x324xf32> to vector<16x256xf32>
    %c2_i32_95 = arith.constant 2 : i32
    %282 = vector.broadcast %c2_i32_95 : i32 to vector<1x256xi32>
    %283 = arith.addi %16, %282 : vector<1x256xi32>
    %c0_i32_96 = arith.constant 0 : i32
    %284 = vector.broadcast %c0_i32_96 : i32 to vector<1x256xi32>
    %285 = arith.cmpi sge, %283, %284 : vector<1x256xi32>
    %c16_i32_97 = arith.constant 16 : i32
    %286 = vector.broadcast %c16_i32_97 : i32 to vector<1x256xi32>
    %287 = arith.cmpi slt, %283, %286 : vector<1x256xi32>
    %288 = arith.andi %285, %287 : vector<1x256xi1>
    %cst_98 = arith.constant 0.000000e+00 : f32
    %289 = vector.shape_cast %288 : vector<1x256xi1> to vector<1x256xi1>
    %290 = vector.broadcast %289 : vector<1x256xi1> to vector<16x256xi1>
    %291 = vector.broadcast %cst_98 : f32 to vector<16x256xf32>
    %292 = arith.select %290, %281, %291 : vector<16x256xi1>, vector<16x256xf32>
    %293 = vector.extract_strided_slice %194 {offsets = [0, 32], sizes = [16, 256], strides = [1, 1]} : vector<16x324xf32> to vector<16x256xf32>
    %c-2_i32_99 = arith.constant -2 : i32
    %294 = vector.broadcast %c-2_i32_99 : i32 to vector<1x256xi32>
    %295 = arith.addi %16, %294 : vector<1x256xi32>
    %c0_i32_100 = arith.constant 0 : i32
    %296 = vector.broadcast %c0_i32_100 : i32 to vector<1x256xi32>
    %297 = arith.cmpi sge, %295, %296 : vector<1x256xi32>
    %c16_i32_101 = arith.constant 16 : i32
    %298 = vector.broadcast %c16_i32_101 : i32 to vector<1x256xi32>
    %299 = arith.cmpi slt, %295, %298 : vector<1x256xi32>
    %300 = arith.andi %297, %299 : vector<1x256xi1>
    %cst_102 = arith.constant 0.000000e+00 : f32
    %301 = vector.shape_cast %300 : vector<1x256xi1> to vector<1x256xi1>
    %302 = vector.broadcast %301 : vector<1x256xi1> to vector<16x256xi1>
    %303 = vector.broadcast %cst_102 : f32 to vector<16x256xf32>
    %304 = arith.select %302, %293, %303 : vector<16x256xi1>, vector<16x256xf32>
    %305 = vector.extract_strided_slice %194 {offsets = [0, 33], sizes = [16, 256], strides = [1, 1]} : vector<16x324xf32> to vector<16x256xf32>
    %c-1_i32_103 = arith.constant -1 : i32
    %306 = vector.broadcast %c-1_i32_103 : i32 to vector<1x256xi32>
    %307 = arith.addi %16, %306 : vector<1x256xi32>
    %c0_i32_104 = arith.constant 0 : i32
    %308 = vector.broadcast %c0_i32_104 : i32 to vector<1x256xi32>
    %309 = arith.cmpi sge, %307, %308 : vector<1x256xi32>
    %c16_i32_105 = arith.constant 16 : i32
    %310 = vector.broadcast %c16_i32_105 : i32 to vector<1x256xi32>
    %311 = arith.cmpi slt, %307, %310 : vector<1x256xi32>
    %312 = arith.andi %309, %311 : vector<1x256xi1>
    %cst_106 = arith.constant 0.000000e+00 : f32
    %313 = vector.shape_cast %312 : vector<1x256xi1> to vector<1x256xi1>
    %314 = vector.broadcast %313 : vector<1x256xi1> to vector<16x256xi1>
    %315 = vector.broadcast %cst_106 : f32 to vector<16x256xf32>
    %316 = arith.select %314, %305, %315 : vector<16x256xi1>, vector<16x256xf32>
    %317 = vector.extract_strided_slice %194 {offsets = [0, 34], sizes = [16, 256], strides = [1, 1]} : vector<16x324xf32> to vector<16x256xf32>
    %318 = vector.extract_strided_slice %194 {offsets = [0, 35], sizes = [16, 256], strides = [1, 1]} : vector<16x324xf32> to vector<16x256xf32>
    %c1_i32_107 = arith.constant 1 : i32
    %319 = vector.broadcast %c1_i32_107 : i32 to vector<1x256xi32>
    %320 = arith.addi %16, %319 : vector<1x256xi32>
    %c0_i32_108 = arith.constant 0 : i32
    %321 = vector.broadcast %c0_i32_108 : i32 to vector<1x256xi32>
    %322 = arith.cmpi sge, %320, %321 : vector<1x256xi32>
    %c16_i32_109 = arith.constant 16 : i32
    %323 = vector.broadcast %c16_i32_109 : i32 to vector<1x256xi32>
    %324 = arith.cmpi slt, %320, %323 : vector<1x256xi32>
    %325 = arith.andi %322, %324 : vector<1x256xi1>
    %cst_110 = arith.constant 0.000000e+00 : f32
    %326 = vector.shape_cast %325 : vector<1x256xi1> to vector<1x256xi1>
    %327 = vector.broadcast %326 : vector<1x256xi1> to vector<16x256xi1>
    %328 = vector.broadcast %cst_110 : f32 to vector<16x256xf32>
    %329 = arith.select %327, %318, %328 : vector<16x256xi1>, vector<16x256xf32>
    %330 = vector.extract_strided_slice %194 {offsets = [0, 36], sizes = [16, 256], strides = [1, 1]} : vector<16x324xf32> to vector<16x256xf32>
    %c2_i32_111 = arith.constant 2 : i32
    %331 = vector.broadcast %c2_i32_111 : i32 to vector<1x256xi32>
    %332 = arith.addi %16, %331 : vector<1x256xi32>
    %c0_i32_112 = arith.constant 0 : i32
    %333 = vector.broadcast %c0_i32_112 : i32 to vector<1x256xi32>
    %334 = arith.cmpi sge, %332, %333 : vector<1x256xi32>
    %c16_i32_113 = arith.constant 16 : i32
    %335 = vector.broadcast %c16_i32_113 : i32 to vector<1x256xi32>
    %336 = arith.cmpi slt, %332, %335 : vector<1x256xi32>
    %337 = arith.andi %334, %336 : vector<1x256xi1>
    %cst_114 = arith.constant 0.000000e+00 : f32
    %338 = vector.shape_cast %337 : vector<1x256xi1> to vector<1x256xi1>
    %339 = vector.broadcast %338 : vector<1x256xi1> to vector<16x256xi1>
    %340 = vector.broadcast %cst_114 : f32 to vector<16x256xf32>
    %341 = arith.select %339, %330, %340 : vector<16x256xi1>, vector<16x256xf32>
    %342 = vector.extract_strided_slice %194 {offsets = [0, 48], sizes = [16, 256], strides = [1, 1]} : vector<16x324xf32> to vector<16x256xf32>
    %c-2_i32_115 = arith.constant -2 : i32
    %343 = vector.broadcast %c-2_i32_115 : i32 to vector<1x256xi32>
    %344 = arith.addi %16, %343 : vector<1x256xi32>
    %c0_i32_116 = arith.constant 0 : i32
    %345 = vector.broadcast %c0_i32_116 : i32 to vector<1x256xi32>
    %346 = arith.cmpi sge, %344, %345 : vector<1x256xi32>
    %c16_i32_117 = arith.constant 16 : i32
    %347 = vector.broadcast %c16_i32_117 : i32 to vector<1x256xi32>
    %348 = arith.cmpi slt, %344, %347 : vector<1x256xi32>
    %349 = arith.andi %346, %348 : vector<1x256xi1>
    %cst_118 = arith.constant 0.000000e+00 : f32
    %350 = vector.shape_cast %349 : vector<1x256xi1> to vector<1x256xi1>
    %351 = vector.broadcast %350 : vector<1x256xi1> to vector<16x256xi1>
    %352 = vector.broadcast %cst_118 : f32 to vector<16x256xf32>
    %353 = arith.select %351, %342, %352 : vector<16x256xi1>, vector<16x256xf32>
    %354 = vector.extract_strided_slice %194 {offsets = [0, 49], sizes = [16, 256], strides = [1, 1]} : vector<16x324xf32> to vector<16x256xf32>
    %c-1_i32_119 = arith.constant -1 : i32
    %355 = vector.broadcast %c-1_i32_119 : i32 to vector<1x256xi32>
    %356 = arith.addi %16, %355 : vector<1x256xi32>
    %c0_i32_120 = arith.constant 0 : i32
    %357 = vector.broadcast %c0_i32_120 : i32 to vector<1x256xi32>
    %358 = arith.cmpi sge, %356, %357 : vector<1x256xi32>
    %c16_i32_121 = arith.constant 16 : i32
    %359 = vector.broadcast %c16_i32_121 : i32 to vector<1x256xi32>
    %360 = arith.cmpi slt, %356, %359 : vector<1x256xi32>
    %361 = arith.andi %358, %360 : vector<1x256xi1>
    %cst_122 = arith.constant 0.000000e+00 : f32
    %362 = vector.shape_cast %361 : vector<1x256xi1> to vector<1x256xi1>
    %363 = vector.broadcast %362 : vector<1x256xi1> to vector<16x256xi1>
    %364 = vector.broadcast %cst_122 : f32 to vector<16x256xf32>
    %365 = arith.select %363, %354, %364 : vector<16x256xi1>, vector<16x256xf32>
    %366 = vector.extract_strided_slice %194 {offsets = [0, 50], sizes = [16, 256], strides = [1, 1]} : vector<16x324xf32> to vector<16x256xf32>
    %367 = vector.extract_strided_slice %194 {offsets = [0, 51], sizes = [16, 256], strides = [1, 1]} : vector<16x324xf32> to vector<16x256xf32>
    %c1_i32_123 = arith.constant 1 : i32
    %368 = vector.broadcast %c1_i32_123 : i32 to vector<1x256xi32>
    %369 = arith.addi %16, %368 : vector<1x256xi32>
    %c0_i32_124 = arith.constant 0 : i32
    %370 = vector.broadcast %c0_i32_124 : i32 to vector<1x256xi32>
    %371 = arith.cmpi sge, %369, %370 : vector<1x256xi32>
    %c16_i32_125 = arith.constant 16 : i32
    %372 = vector.broadcast %c16_i32_125 : i32 to vector<1x256xi32>
    %373 = arith.cmpi slt, %369, %372 : vector<1x256xi32>
    %374 = arith.andi %371, %373 : vector<1x256xi1>
    %cst_126 = arith.constant 0.000000e+00 : f32
    %375 = vector.shape_cast %374 : vector<1x256xi1> to vector<1x256xi1>
    %376 = vector.broadcast %375 : vector<1x256xi1> to vector<16x256xi1>
    %377 = vector.broadcast %cst_126 : f32 to vector<16x256xf32>
    %378 = arith.select %376, %367, %377 : vector<16x256xi1>, vector<16x256xf32>
    %379 = vector.extract_strided_slice %194 {offsets = [0, 52], sizes = [16, 256], strides = [1, 1]} : vector<16x324xf32> to vector<16x256xf32>
    %c2_i32_127 = arith.constant 2 : i32
    %380 = vector.broadcast %c2_i32_127 : i32 to vector<1x256xi32>
    %381 = arith.addi %16, %380 : vector<1x256xi32>
    %c0_i32_128 = arith.constant 0 : i32
    %382 = vector.broadcast %c0_i32_128 : i32 to vector<1x256xi32>
    %383 = arith.cmpi sge, %381, %382 : vector<1x256xi32>
    %c16_i32_129 = arith.constant 16 : i32
    %384 = vector.broadcast %c16_i32_129 : i32 to vector<1x256xi32>
    %385 = arith.cmpi slt, %381, %384 : vector<1x256xi32>
    %386 = arith.andi %383, %385 : vector<1x256xi1>
    %cst_130 = arith.constant 0.000000e+00 : f32
    %387 = vector.shape_cast %386 : vector<1x256xi1> to vector<1x256xi1>
    %388 = vector.broadcast %387 : vector<1x256xi1> to vector<16x256xi1>
    %389 = vector.broadcast %cst_130 : f32 to vector<16x256xf32>
    %390 = arith.select %388, %379, %389 : vector<16x256xi1>, vector<16x256xf32>
    %391 = vector.extract_strided_slice %194 {offsets = [0, 64], sizes = [16, 256], strides = [1, 1]} : vector<16x324xf32> to vector<16x256xf32>
    %c-2_i32_131 = arith.constant -2 : i32
    %392 = vector.broadcast %c-2_i32_131 : i32 to vector<1x256xi32>
    %393 = arith.addi %16, %392 : vector<1x256xi32>
    %c0_i32_132 = arith.constant 0 : i32
    %394 = vector.broadcast %c0_i32_132 : i32 to vector<1x256xi32>
    %395 = arith.cmpi sge, %393, %394 : vector<1x256xi32>
    %c16_i32_133 = arith.constant 16 : i32
    %396 = vector.broadcast %c16_i32_133 : i32 to vector<1x256xi32>
    %397 = arith.cmpi slt, %393, %396 : vector<1x256xi32>
    %398 = arith.andi %395, %397 : vector<1x256xi1>
    %cst_134 = arith.constant 0.000000e+00 : f32
    %399 = vector.shape_cast %398 : vector<1x256xi1> to vector<1x256xi1>
    %400 = vector.broadcast %399 : vector<1x256xi1> to vector<16x256xi1>
    %401 = vector.broadcast %cst_134 : f32 to vector<16x256xf32>
    %402 = arith.select %400, %391, %401 : vector<16x256xi1>, vector<16x256xf32>
    %403 = vector.extract_strided_slice %194 {offsets = [0, 65], sizes = [16, 256], strides = [1, 1]} : vector<16x324xf32> to vector<16x256xf32>
    %c-1_i32_135 = arith.constant -1 : i32
    %404 = vector.broadcast %c-1_i32_135 : i32 to vector<1x256xi32>
    %405 = arith.addi %16, %404 : vector<1x256xi32>
    %c0_i32_136 = arith.constant 0 : i32
    %406 = vector.broadcast %c0_i32_136 : i32 to vector<1x256xi32>
    %407 = arith.cmpi sge, %405, %406 : vector<1x256xi32>
    %c16_i32_137 = arith.constant 16 : i32
    %408 = vector.broadcast %c16_i32_137 : i32 to vector<1x256xi32>
    %409 = arith.cmpi slt, %405, %408 : vector<1x256xi32>
    %410 = arith.andi %407, %409 : vector<1x256xi1>
    %cst_138 = arith.constant 0.000000e+00 : f32
    %411 = vector.shape_cast %410 : vector<1x256xi1> to vector<1x256xi1>
    %412 = vector.broadcast %411 : vector<1x256xi1> to vector<16x256xi1>
    %413 = vector.broadcast %cst_138 : f32 to vector<16x256xf32>
    %414 = arith.select %412, %403, %413 : vector<16x256xi1>, vector<16x256xf32>
    %415 = vector.extract_strided_slice %194 {offsets = [0, 66], sizes = [16, 256], strides = [1, 1]} : vector<16x324xf32> to vector<16x256xf32>
    %416 = vector.extract_strided_slice %194 {offsets = [0, 67], sizes = [16, 256], strides = [1, 1]} : vector<16x324xf32> to vector<16x256xf32>
    %c1_i32_139 = arith.constant 1 : i32
    %417 = vector.broadcast %c1_i32_139 : i32 to vector<1x256xi32>
    %418 = arith.addi %16, %417 : vector<1x256xi32>
    %c0_i32_140 = arith.constant 0 : i32
    %419 = vector.broadcast %c0_i32_140 : i32 to vector<1x256xi32>
    %420 = arith.cmpi sge, %418, %419 : vector<1x256xi32>
    %c16_i32_141 = arith.constant 16 : i32
    %421 = vector.broadcast %c16_i32_141 : i32 to vector<1x256xi32>
    %422 = arith.cmpi slt, %418, %421 : vector<1x256xi32>
    %423 = arith.andi %420, %422 : vector<1x256xi1>
    %cst_142 = arith.constant 0.000000e+00 : f32
    %424 = vector.shape_cast %423 : vector<1x256xi1> to vector<1x256xi1>
    %425 = vector.broadcast %424 : vector<1x256xi1> to vector<16x256xi1>
    %426 = vector.broadcast %cst_142 : f32 to vector<16x256xf32>
    %427 = arith.select %425, %416, %426 : vector<16x256xi1>, vector<16x256xf32>
    %428 = vector.extract_strided_slice %194 {offsets = [0, 68], sizes = [16, 256], strides = [1, 1]} : vector<16x324xf32> to vector<16x256xf32>
    %c2_i32_143 = arith.constant 2 : i32
    %429 = vector.broadcast %c2_i32_143 : i32 to vector<1x256xi32>
    %430 = arith.addi %16, %429 : vector<1x256xi32>
    %c0_i32_144 = arith.constant 0 : i32
    %431 = vector.broadcast %c0_i32_144 : i32 to vector<1x256xi32>
    %432 = arith.cmpi sge, %430, %431 : vector<1x256xi32>
    %c16_i32_145 = arith.constant 16 : i32
    %433 = vector.broadcast %c16_i32_145 : i32 to vector<1x256xi32>
    %434 = arith.cmpi slt, %430, %433 : vector<1x256xi32>
    %435 = arith.andi %432, %434 : vector<1x256xi1>
    %cst_146 = arith.constant 0.000000e+00 : f32
    %436 = vector.shape_cast %435 : vector<1x256xi1> to vector<1x256xi1>
    %437 = vector.broadcast %436 : vector<1x256xi1> to vector<16x256xi1>
    %438 = vector.broadcast %cst_146 : f32 to vector<16x256xf32>
    %439 = arith.select %437, %428, %438 : vector<16x256xi1>, vector<16x256xf32>
    %440 = tpu.concatenate %206, %218, %219, %231, %243, %255, %267, %268, %280, %292, %304, %316, %317, %329, %341, %353 in 0 : vector<16x256xf32>, vector<16x256xf32>, vector<16x256xf32>, vector<16x256xf32>, vector<16x256xf32>, vector<16x256xf32>, vector<16x256xf32>, vector<16x256xf32>, vector<16x256xf32>, vector<16x256xf32>, vector<16x256xf32>, vector<16x256xf32>, vector<16x256xf32>, vector<16x256xf32>, vector<16x256xf32>, vector<16x256xf32> -> vector<256x256xf32>
    %441 = tpu.concatenate %365, %366, %378, %390, %402, %414, %415, %427, %439 in 0 : vector<16x256xf32>, vector<16x256xf32>, vector<16x256xf32>, vector<16x256xf32>, vector<16x256xf32>, vector<16x256xf32>, vector<16x256xf32>, vector<16x256xf32>, vector<16x256xf32> -> vector<144x256xf32>
    %442 = tpu.concatenate %440, %441 in 0 : vector<256x256xf32>, vector<144x256xf32> -> vector<400x256xf32>
    %c0_147 = arith.constant 0 : index
    %c0_148 = arith.constant 0 : index
    %443 = vector.load %arg8[%c0_147, %c0_148] : memref<24x400xf32, #tpu.memory_space<vmem>>, vector<24x400xf32>
    %cst_149 = arith.constant dense<0.000000e+00> : vector<24x256xf32>
    %444 = tpu.matmul %443, %442, %cst_149 {dimension_numbers = #tpu.dot_dimension_numbers<[1], [0], [0], [1], [0, 0, 1, 1], [], []>} : vector<24x400xf32>, vector<400x256xf32>, vector<24x256xf32> -> vector<24x256xf32>
    %c0_150 = arith.constant 0 : index
    %c0_151 = arith.constant 0 : index
    %445 = vector.load %arg9[%c0_150, %c0_151] : memref<24x1xf32, #tpu.memory_space<vmem>>, vector<24x1xf32>
    %446 = vector.broadcast %445 : vector<24x1xf32> to vector<24x256xf32>
    %447 = arith.addf %444, %446 : vector<24x256xf32>
    %cst_152 = arith.constant 0.000000e+00 : f32
    %448 = vector.broadcast %cst_152 : f32 to vector<4x17xf32>
    %449 = tpu.concatenate %448, %18, %448 in 1 : vector<4x17xf32>, vector<4x256xf32>, vector<4x17xf32> -> vector<4x290xf32>
    %450 = vector.extract_strided_slice %449 {offsets = [0, 0], sizes = [4, 256], strides = [1, 1]} : vector<4x290xf32> to vector<4x256xf32>
    %c-1_i32_153 = arith.constant -1 : i32
    %451 = vector.broadcast %c-1_i32_153 : i32 to vector<1x256xi32>
    %452 = arith.addi %16, %451 : vector<1x256xi32>
    %c0_i32_154 = arith.constant 0 : i32
    %453 = vector.broadcast %c0_i32_154 : i32 to vector<1x256xi32>
    %454 = arith.cmpi sge, %452, %453 : vector<1x256xi32>
    %c16_i32_155 = arith.constant 16 : i32
    %455 = vector.broadcast %c16_i32_155 : i32 to vector<1x256xi32>
    %456 = arith.cmpi slt, %452, %455 : vector<1x256xi32>
    %457 = arith.andi %454, %456 : vector<1x256xi1>
    %cst_156 = arith.constant 0.000000e+00 : f32
    %458 = vector.shape_cast %457 : vector<1x256xi1> to vector<1x256xi1>
    %459 = vector.broadcast %458 : vector<1x256xi1> to vector<4x256xi1>
    %460 = vector.broadcast %cst_156 : f32 to vector<4x256xf32>
    %461 = arith.select %459, %450, %460 : vector<4x256xi1>, vector<4x256xf32>
    %462 = vector.extract_strided_slice %449 {offsets = [0, 1], sizes = [4, 256], strides = [1, 1]} : vector<4x290xf32> to vector<4x256xf32>
    %463 = vector.extract_strided_slice %449 {offsets = [0, 2], sizes = [4, 256], strides = [1, 1]} : vector<4x290xf32> to vector<4x256xf32>
    %c1_i32_157 = arith.constant 1 : i32
    %464 = vector.broadcast %c1_i32_157 : i32 to vector<1x256xi32>
    %465 = arith.addi %16, %464 : vector<1x256xi32>
    %c0_i32_158 = arith.constant 0 : i32
    %466 = vector.broadcast %c0_i32_158 : i32 to vector<1x256xi32>
    %467 = arith.cmpi sge, %465, %466 : vector<1x256xi32>
    %c16_i32_159 = arith.constant 16 : i32
    %468 = vector.broadcast %c16_i32_159 : i32 to vector<1x256xi32>
    %469 = arith.cmpi slt, %465, %468 : vector<1x256xi32>
    %470 = arith.andi %467, %469 : vector<1x256xi1>
    %cst_160 = arith.constant 0.000000e+00 : f32
    %471 = vector.shape_cast %470 : vector<1x256xi1> to vector<1x256xi1>
    %472 = vector.broadcast %471 : vector<1x256xi1> to vector<4x256xi1>
    %473 = vector.broadcast %cst_160 : f32 to vector<4x256xf32>
    %474 = arith.select %472, %463, %473 : vector<4x256xi1>, vector<4x256xf32>
    %475 = vector.extract_strided_slice %449 {offsets = [0, 16], sizes = [4, 256], strides = [1, 1]} : vector<4x290xf32> to vector<4x256xf32>
    %c-1_i32_161 = arith.constant -1 : i32
    %476 = vector.broadcast %c-1_i32_161 : i32 to vector<1x256xi32>
    %477 = arith.addi %16, %476 : vector<1x256xi32>
    %c0_i32_162 = arith.constant 0 : i32
    %478 = vector.broadcast %c0_i32_162 : i32 to vector<1x256xi32>
    %479 = arith.cmpi sge, %477, %478 : vector<1x256xi32>
    %c16_i32_163 = arith.constant 16 : i32
    %480 = vector.broadcast %c16_i32_163 : i32 to vector<1x256xi32>
    %481 = arith.cmpi slt, %477, %480 : vector<1x256xi32>
    %482 = arith.andi %479, %481 : vector<1x256xi1>
    %cst_164 = arith.constant 0.000000e+00 : f32
    %483 = vector.shape_cast %482 : vector<1x256xi1> to vector<1x256xi1>
    %484 = vector.broadcast %483 : vector<1x256xi1> to vector<4x256xi1>
    %485 = vector.broadcast %cst_164 : f32 to vector<4x256xf32>
    %486 = arith.select %484, %475, %485 : vector<4x256xi1>, vector<4x256xf32>
    %487 = vector.extract_strided_slice %449 {offsets = [0, 17], sizes = [4, 256], strides = [1, 1]} : vector<4x290xf32> to vector<4x256xf32>
    %488 = vector.extract_strided_slice %449 {offsets = [0, 18], sizes = [4, 256], strides = [1, 1]} : vector<4x290xf32> to vector<4x256xf32>
    %c1_i32_165 = arith.constant 1 : i32
    %489 = vector.broadcast %c1_i32_165 : i32 to vector<1x256xi32>
    %490 = arith.addi %16, %489 : vector<1x256xi32>
    %c0_i32_166 = arith.constant 0 : i32
    %491 = vector.broadcast %c0_i32_166 : i32 to vector<1x256xi32>
    %492 = arith.cmpi sge, %490, %491 : vector<1x256xi32>
    %c16_i32_167 = arith.constant 16 : i32
    %493 = vector.broadcast %c16_i32_167 : i32 to vector<1x256xi32>
    %494 = arith.cmpi slt, %490, %493 : vector<1x256xi32>
    %495 = arith.andi %492, %494 : vector<1x256xi1>
    %cst_168 = arith.constant 0.000000e+00 : f32
    %496 = vector.shape_cast %495 : vector<1x256xi1> to vector<1x256xi1>
    %497 = vector.broadcast %496 : vector<1x256xi1> to vector<4x256xi1>
    %498 = vector.broadcast %cst_168 : f32 to vector<4x256xf32>
    %499 = arith.select %497, %488, %498 : vector<4x256xi1>, vector<4x256xf32>
    %500 = vector.extract_strided_slice %449 {offsets = [0, 32], sizes = [4, 256], strides = [1, 1]} : vector<4x290xf32> to vector<4x256xf32>
    %c-1_i32_169 = arith.constant -1 : i32
    %501 = vector.broadcast %c-1_i32_169 : i32 to vector<1x256xi32>
    %502 = arith.addi %16, %501 : vector<1x256xi32>
    %c0_i32_170 = arith.constant 0 : i32
    %503 = vector.broadcast %c0_i32_170 : i32 to vector<1x256xi32>
    %504 = arith.cmpi sge, %502, %503 : vector<1x256xi32>
    %c16_i32_171 = arith.constant 16 : i32
    %505 = vector.broadcast %c16_i32_171 : i32 to vector<1x256xi32>
    %506 = arith.cmpi slt, %502, %505 : vector<1x256xi32>
    %507 = arith.andi %504, %506 : vector<1x256xi1>
    %cst_172 = arith.constant 0.000000e+00 : f32
    %508 = vector.shape_cast %507 : vector<1x256xi1> to vector<1x256xi1>
    %509 = vector.broadcast %508 : vector<1x256xi1> to vector<4x256xi1>
    %510 = vector.broadcast %cst_172 : f32 to vector<4x256xf32>
    %511 = arith.select %509, %500, %510 : vector<4x256xi1>, vector<4x256xf32>
    %512 = vector.extract_strided_slice %449 {offsets = [0, 33], sizes = [4, 256], strides = [1, 1]} : vector<4x290xf32> to vector<4x256xf32>
    %513 = vector.extract_strided_slice %449 {offsets = [0, 34], sizes = [4, 256], strides = [1, 1]} : vector<4x290xf32> to vector<4x256xf32>
    %c1_i32_173 = arith.constant 1 : i32
    %514 = vector.broadcast %c1_i32_173 : i32 to vector<1x256xi32>
    %515 = arith.addi %16, %514 : vector<1x256xi32>
    %c0_i32_174 = arith.constant 0 : i32
    %516 = vector.broadcast %c0_i32_174 : i32 to vector<1x256xi32>
    %517 = arith.cmpi sge, %515, %516 : vector<1x256xi32>
    %c16_i32_175 = arith.constant 16 : i32
    %518 = vector.broadcast %c16_i32_175 : i32 to vector<1x256xi32>
    %519 = arith.cmpi slt, %515, %518 : vector<1x256xi32>
    %520 = arith.andi %517, %519 : vector<1x256xi1>
    %cst_176 = arith.constant 0.000000e+00 : f32
    %521 = vector.shape_cast %520 : vector<1x256xi1> to vector<1x256xi1>
    %522 = vector.broadcast %521 : vector<1x256xi1> to vector<4x256xi1>
    %523 = vector.broadcast %cst_176 : f32 to vector<4x256xf32>
    %524 = arith.select %522, %513, %523 : vector<4x256xi1>, vector<4x256xf32>
    %525 = tpu.concatenate %461, %462, %474, %486, %487, %499, %511, %512, %524 in 0 : vector<4x256xf32>, vector<4x256xf32>, vector<4x256xf32>, vector<4x256xf32>, vector<4x256xf32>, vector<4x256xf32>, vector<4x256xf32>, vector<4x256xf32>, vector<4x256xf32> -> vector<36x256xf32>
    %c0_177 = arith.constant 0 : index
    %c0_178 = arith.constant 0 : index
    %526 = vector.load %arg10[%c0_177, %c0_178] : memref<24x36xf32, #tpu.memory_space<vmem>>, vector<24x36xf32>
    %cst_179 = arith.constant dense<0.000000e+00> : vector<24x256xf32>
    %527 = tpu.matmul %526, %525, %cst_179 {dimension_numbers = #tpu.dot_dimension_numbers<[1], [0], [0], [1], [0, 0, 1, 1], [], []>} : vector<24x36xf32>, vector<36x256xf32>, vector<24x256xf32> -> vector<24x256xf32>
    %c0_180 = arith.constant 0 : index
    %c0_181 = arith.constant 0 : index
    %528 = vector.load %arg11[%c0_180, %c0_181] : memref<24x1xf32, #tpu.memory_space<vmem>>, vector<24x1xf32>
    %529 = vector.broadcast %528 : vector<24x1xf32> to vector<24x256xf32>
    %530 = arith.addf %527, %529 : vector<24x256xf32>
    %c0_182 = arith.constant 0 : index
    %c0_183 = arith.constant 0 : index
    %c0_184 = arith.constant 0 : index
    %531 = vector.load %arg12[%c0_182, %c0_183, %c0_184] : memref<1x88x256xf32, #tpu.memory_space<vmem>>, vector<1x16x256xf32>
    %532 = vector.shape_cast %531 : vector<1x16x256xf32> to vector<16x256xf32>
    %533 = vector.shape_cast %24 : vector<16x256xf32> to vector<1x16x256xf32>
    tpu.vector_store %arg12[%c0_182, %c0_183, %c0_184], %533 {strides = array<i32>} : memref<1x88x256xf32, #tpu.memory_space<vmem>>, vector<1x16x256xf32>,
    %c0_185 = arith.constant 0 : index
    %c16 = arith.constant 16 : index
    %c0_186 = arith.constant 0 : index
    %534 = vector.load %arg12[%c0_185, %c16, %c0_186] : memref<1x88x256xf32, #tpu.memory_space<vmem>>, vector<1x24x256xf32>
    %535 = vector.shape_cast %534 : vector<1x24x256xf32> to vector<24x256xf32>
    %536 = vector.shape_cast %192 : vector<24x256xf32> to vector<1x24x256xf32>
    tpu.vector_store %arg12[%c0_185, %c16, %c0_186], %536 {strides = array<i32>} : memref<1x88x256xf32, #tpu.memory_space<vmem>>, vector<1x24x256xf32>,
    %c0_187 = arith.constant 0 : index
    %c40 = arith.constant 40 : index
    %c0_188 = arith.constant 0 : index
    %537 = vector.load %arg12[%c0_187, %c40, %c0_188] : memref<1x88x256xf32, #tpu.memory_space<vmem>>, vector<1x24x256xf32>
    %538 = vector.shape_cast %537 : vector<1x24x256xf32> to vector<24x256xf32>
    %539 = vector.shape_cast %447 : vector<24x256xf32> to vector<1x24x256xf32>
    tpu.vector_store %arg12[%c0_187, %c40, %c0_188], %539 {strides = array<i32>} : memref<1x88x256xf32, #tpu.memory_space<vmem>>, vector<1x24x256xf32>,
    %c0_189 = arith.constant 0 : index
    %c64 = arith.constant 64 : index
    %c0_190 = arith.constant 0 : index
    %540 = vector.load %arg12[%c0_189, %c64, %c0_190] : memref<1x88x256xf32, #tpu.memory_space<vmem>>, vector<1x24x256xf32>
    %541 = vector.shape_cast %540 : vector<1x24x256xf32> to vector<24x256xf32>
    %542 = vector.shape_cast %530 : vector<24x256xf32> to vector<1x24x256xf32>
    tpu.vector_store %arg12[%c0_189, %c64, %c0_190], %542 {strides = array<i32>} : memref<1x88x256xf32, #tpu.memory_space<vmem>>, vector<1x24x256xf32>,
    return
  }
  func.func @transform_0(%arg0: i32) -> (i32, i32, i32) {
    %c0_i32 = arith.constant 0 : i32
    %c0_i32_0 = arith.constant 0 : i32
    %c0_i32_1 = arith.constant 0 : i32
    return %arg0, %c0_i32, %c0_i32_0 : i32, i32, i32
  }
  func.func @transform_1(%arg0: i32) -> (i32, i32) {
    %c0_i32 = arith.constant 0 : i32
    %c0_i32_0 = arith.constant 0 : i32
    %c0_i32_1 = arith.constant 0 : i32
    return %c0_i32, %c0_i32_0 : i32, i32
  }
  func.func @transform_2(%arg0: i32) -> (i32, i32) {
    %c0_i32 = arith.constant 0 : i32
    %c0_i32_0 = arith.constant 0 : i32
    %c0_i32_1 = arith.constant 0 : i32
    return %c0_i32, %c0_i32_0 : i32, i32
  }
  func.func @transform_3(%arg0: i32) -> (i32, i32) {
    %c0_i32 = arith.constant 0 : i32
    %c0_i32_0 = arith.constant 0 : i32
    %c0_i32_1 = arith.constant 0 : i32
    return %c0_i32, %c0_i32_0 : i32, i32
  }
  func.func @transform_4(%arg0: i32) -> (i32, i32) {
    %c0_i32 = arith.constant 0 : i32
    %c0_i32_0 = arith.constant 0 : i32
    %c0_i32_1 = arith.constant 0 : i32
    return %c0_i32, %c0_i32_0 : i32, i32
  }
  func.func @transform_5(%arg0: i32) -> (i32, i32) {
    %c0_i32 = arith.constant 0 : i32
    %c0_i32_0 = arith.constant 0 : i32
    %c0_i32_1 = arith.constant 0 : i32
    return %c0_i32, %c0_i32_0 : i32, i32
  }
  func.func @transform_6(%arg0: i32) -> (i32, i32) {
    %c0_i32 = arith.constant 0 : i32
    %c0_i32_0 = arith.constant 0 : i32
    %c0_i32_1 = arith.constant 0 : i32
    return %c0_i32, %c0_i32_0 : i32, i32
  }
  func.func @transform_7(%arg0: i32) -> (i32, i32) {
    %c0_i32 = arith.constant 0 : i32
    %c0_i32_0 = arith.constant 0 : i32
    %c0_i32_1 = arith.constant 0 : i32
    return %c0_i32, %c0_i32_0 : i32, i32
  }
  func.func @transform_8(%arg0: i32) -> (i32, i32) {
    %c0_i32 = arith.constant 0 : i32
    %c0_i32_0 = arith.constant 0 : i32
    %c0_i32_1 = arith.constant 0 : i32
    return %c0_i32, %c0_i32_0 : i32, i32
  }
  func.func @transform_9(%arg0: i32) -> (i32, i32) {
    %c0_i32 = arith.constant 0 : i32
    %c0_i32_0 = arith.constant 0 : i32
    %c0_i32_1 = arith.constant 0 : i32
    return %c0_i32, %c0_i32_0 : i32, i32
  }
  func.func @transform_10(%arg0: i32) -> (i32, i32) {
    %c0_i32 = arith.constant 0 : i32
    %c0_i32_0 = arith.constant 0 : i32
    %c0_i32_1 = arith.constant 0 : i32
    return %c0_i32, %c0_i32_0 : i32, i32
  }
  func.func @transform_11(%arg0: i32) -> (i32, i32, i32) {
    %c0_i32 = arith.constant 0 : i32
    %c0_i32_0 = arith.constant 0 : i32
    %c0_i32_1 = arith.constant 0 : i32
    return %arg0, %c0_i32, %c0_i32_0 : i32, i32, i32
  }
}

</mosaic_0001>

<llo_original>
// kernel: tile.9
$region0: #{tile.9}
  %s0 = inlined_call_operand.vmem [shape: f32[24,9,4], index: 0, kind: input, shape index: {}]
  %s1 = inlined_call_operand.vmem [shape: f32[24,36], index: 1, kind: output, shape index: {}]
  $region1: #{tile.9} parent=0
    #allocation0 [shape = 'u8[36864]{0}', space=vmem, size = 0x9000, scoped, tag = 'scoped mem for input reshape']
    %s3 = sshllo.u32 0, 4
    %s4 = smul.addr 4, 8
    %s5 = scalar_lea.vmem %s0, %s4
    %v6 = vld [vmem:[%s5] sm:%s3]
    %s7 = scalar_lea.vmem [#allocation0], 64
    %8 = vst [vmem:[%s7] sm:%s3] %v6
    %s9 = smul.addr 4, 7
    %s10 = scalar_lea.vmem %s0, %s9
    %v11 = vld [vmem:[%s10] sm:%s3]
    %s12 = scalar_lea.vmem [#allocation0], 56
    %13 = vst [vmem:[%s12] sm:%s3] %v11
    %s14 = smul.addr 4, 6
    %s15 = scalar_lea.vmem %s0, %s14
    %v16 = vld [vmem:[%s15] sm:%s3]
    %s17 = scalar_lea.vmem [#allocation0], 48
    %18 = vst [vmem:[%s17] sm:%s3] %v16
    %s19 = smul.addr 4, 5
    %s20 = scalar_lea.vmem %s0, %s19
    %v21 = vld [vmem:[%s20] sm:%s3]
    %s22 = scalar_lea.vmem [#allocation0], 40
    %23 = vst [vmem:[%s22] sm:%s3] %v21
    %s24 = smul.addr 4, 4
    %s25 = scalar_lea.vmem %s0, %s24
    %v26 = vld [vmem:[%s25] sm:%s3]
    %s27 = scalar_lea.vmem [#allocation0], 32
    %28 = vst [vmem:[%s27] sm:%s3] %v26
    %s29 = smul.addr 4, 3
    %s30 = scalar_lea.vmem %s0, %s29
    %v31 = vld [vmem:[%s30] sm:%s3]
    %s32 = scalar_lea.vmem [#allocation0], 24
    %33 = vst [vmem:[%s32] sm:%s3] %v31
    %s34 = smul.addr 4, 2
    %s35 = scalar_lea.vmem %s0, %s34
    %v36 = vld [vmem:[%s35] sm:%s3]
    %s37 = scalar_lea.vmem [#allocation0], 16
    %38 = vst [vmem:[%s37] sm:%s3] %v36
    %s39 = scalar_lea.vmem %s0, 4
    %v40 = vld [vmem:[%s39] sm:%s3]
    %s41 = scalar_lea.vmem [#allocation0], 8
    %42 = vst [vmem:[%s41] sm:%s3] %v40
    %v43 = vld [vmem:[%s0] sm:%s3]
    %44 = vst [vmem:[#allocation0] sm:%s3] %v43
    %v45 = vld [vmem:[#allocation0] sm:$0xf]
    %vm46 = vcmask 195584
    %47 = vst.msk [vmem:[%s1] sm:$0xf] %vm46, %v45
    %s48 = scalar_lea.vmem [#allocation0], 8
    %v49 = vld [vmem:[%s48] sm:$0xf]
    %vm50 = vcmask 195584
    %s51 = scalar_lea.vmem %s1, 4
    %52 = vst.msk [vmem:[%s51] sm:$0xf] %vm50, %v49
    %s53 = scalar_lea.vmem [#allocation0], 16
    %v54 = vld [vmem:[%s53] sm:$0xf]
    %vm55 = vcmask 195584
    %s56 = scalar_lea.vmem %s1, 8
    %57 = vst.msk [vmem:[%s56] sm:$0xf] %vm55, %v54
    %s58 = scalar_lea.vmem [#allocation0], 24
    %v59 = vld [vmem:[%s58] sm:$0xf]
    %vm60 = vcmask 195584
    %s61 = scalar_lea.vmem %s1, 12
    %62 = vst.msk [vmem:[%s61] sm:$0xf] %vm60, %v59
    %s63 = scalar_lea.vmem [#allocation0], 32
    %v64 = vld [vmem:[%s63] sm:$0xf]
    %vm65 = vcmask 195584
    %s66 = scalar_lea.vmem %s1, 16
    %67 = vst.msk [vmem:[%s66] sm:$0xf] %vm65, %v64
    %s68 = scalar_lea.vmem [#allocation0], 40
    %v69 = vld [vmem:[%s68] sm:$0xf]
    %vm70 = vcmask 195584
    %s71 = scalar_lea.vmem %s1, 20
    %72 = vst.msk [vmem:[%s71] sm:$0xf] %vm70, %v69
    %s73 = scalar_lea.vmem [#allocation0], 48
    %v74 = vld [vmem:[%s73] sm:$0xf]
    %vm75 = vcmask 195584
    %s76 = scalar_lea.vmem %s1, 24
    %77 = vst.msk [vmem:[%s76] sm:$0xf] %vm75, %v74
    %s78 = scalar_lea.vmem [#allocation0], 56
    %v79 = vld [vmem:[%s78] sm:$0xf]
    %vm80 = vcmask 195584
    %s81 = scalar_lea.vmem %s1, 28
    %82 = vst.msk [vmem:[%s81] sm:$0xf] %vm80, %v79
    %s83 = scalar_lea.vmem [#allocation0], 64
    %v84 = vld [vmem:[%s83] sm:$0xf]
    %vm85 = vcmask 195584
    %s86 = scalar_lea.vmem %s1, 32
    %87 = vst.msk [vmem:[%s86] sm:$0xf] %vm85, %v84

// kernel: inception_a.1
$region0: #{inception_a.1}
  #allocation0 [shape = 'u32[]', space=smem, size = 0x4, offset = 0x4, fixed_abs, tag = 'smem constant byte address 0x4 - core index']
  #allocation1 [shape = 'u32[144,128]{1,0:T(1,128)}', space=vmem, size = 0x12000, scoped, tag = 'internal scratch']
  %s0 = inlined_call_operand.vmem [shape: f32[2,4,256], index: 0, kind: input, shape index: {}]
  %s1 = inlined_call_operand.vmem [shape: f32[48,4], index: 1, kind: input, shape index: {}]
  %s2 = inlined_call_operand.vmem [shape: f32[48,1], index: 2, kind: input, shape index: {}]
  %s3 = inlined_call_operand.vmem [shape: f32[24,144], index: 3, kind: input, shape index: {}]
  %s4 = inlined_call_operand.vmem [shape: f32[24,1], index: 4, kind: input, shape index: {}]
  %s5 = inlined_call_operand.vmem [shape: f32[24,216], index: 5, kind: input, shape index: {}]
  %s6 = inlined_call_operand.vmem [shape: f32[24,1], index: 6, kind: input, shape index: {}]
  %s7 = inlined_call_operand.vmem [shape: f32[24,400], index: 7, kind: input, shape index: {}]
  %s8 = inlined_call_operand.vmem [shape: f32[24,1], index: 8, kind: input, shape index: {}]
  %s9 = inlined_call_operand.vmem [shape: f32[24,36], index: 9, kind: input, shape index: {}]
  %s10 = inlined_call_operand.vmem [shape: f32[24,1], index: 10, kind: input, shape index: {}]
  %s11 = inlined_call_operand.vmem [shape: f32[2,88,256], index: 11, kind: output, shape index: {}]
  %s12 = sld [smem:[#allocation0]]
  $region77: #{inception_a.1} parent=0
    _
  %s14 = ssub.s32 1, %s12
  %s15 = scalar_select 0, %s14, %s12
  loop: start=0, step=1, limit=4
  $region2: #{inception_a.1} parent=0 // loop_pre_header
    _
  $region3: #{inception_a.1} parent=0 // loop_header
    %s17 = sphi 0, %s21
    %p18 = scmp.ge.s32.totalorder %s17, 4
    %s27 = sphi 0, %s29
    %s30 = sphi 0, %s27
    %s31 = sphi 0, %s30
    %s47 = sphi 0, %s31
    %s51 = sphi 0, %s51
    %s53 = sphi 0, %s51
    %s54 = sphi 0, %s53
    %s68 = sphi 0, %s54
    %s72 = sphi 0, %s72
    %s74 = sphi 0, %s72
    %s75 = sphi 0, %s74
    %s89 = sphi 0, %s75
    %s93 = sphi 0, %s93
    %s95 = sphi 0, %s93
    %s96 = sphi 0, %s95
    %s110 = sphi 0, %s96
    %s114 = sphi 0, %s114
    %s116 = sphi 0, %s114
    %s117 = sphi 0, %s116
    %s131 = sphi 0, %s117
    %s135 = sphi 0, %s135
    %s137 = sphi 0, %s135
    %s138 = sphi 0, %s137
    %s152 = sphi 0, %s138
    %s156 = sphi 0, %s156
    %s158 = sphi 0, %s156
    %s159 = sphi 0, %s158
    %s173 = sphi 0, %s159
    %s177 = sphi 0, %s177
    %s179 = sphi 0, %s177
    %s180 = sphi 0, %s179
    %s194 = sphi 0, %s180
    %s198 = sphi 0, %s198
    %s200 = sphi 0, %s198
    %s201 = sphi 0, %s200
    %s215 = sphi 0, %s201
    %s219 = sphi 0, %s219
    %s221 = sphi 0, %s219
    %s222 = sphi 0, %s221
    %s236 = sphi 0, %s222
    %s240 = sphi 0, %s240
    %s242 = sphi 0, %s240
    %s243 = sphi 0, %s242
    %s257 = sphi 0, %s243
    %s263 = sphi 0, %s265
    %s266 = sphi 0, %s263
    %s267 = sphi 0, %s266
    %s283 = sphi 0, %s267
  $region4: #{inception_a.1} parent=0 // loop_header_branch
    %20 = sbr.rel (%p18) target = $region8
  $region5: #{inception_a.1} parent=0 // loop_body
    %s22 = ssub.s32 %s17, 1
    %s23 = ssub.s32 %s17, 2
    %s24 = sadd.s32 %s17, 1
    %s25 = ssub.s32 %s17, %s24
    %p26 = scmp.eq.s32.totalorder %s25, 0
    %s28 = sadd.s32 %s27, 1
    %s29 = scalar_select %p26, %s27, %s28
    %p32 = pneg %p26
    %p33 = scmp.eq.s32.totalorder %s17, 1
    %p34 = por %p32, %p33
    %p35 = scmp.ne.s32.totalorder %s27, %s30
    %p36 = scmp.eq.s32.totalorder %s17, 0
    %p37 = por %p35, %p36
    %p38 = scmp.ne.s32.totalorder %s27, %s30
    %p39 = scmp.eq.s32.totalorder %s22, 1
    %p40 = por %p38, %p39
    %p41 = scmp.ne.s32.totalorder %s30, %s31
    %p42 = scmp.eq.s32.totalorder %s22, 0
    %p43 = por %p41, %p42
    %p44 = scmp.ne.s32.totalorder %s30, %s31
    %p45 = scmp.eq.s32.totalorder %s23, 1
    %p46 = por %p44, %p45
    %p48 = scmp.ne.s32.totalorder %s31, %s47
    %p49 = scmp.eq.s32.totalorder %s23, 0
    %p50 = por %p48, %p49
    %s52 = sadd.s32 %s51, 1
    %p55 = scmp.eq.s32.totalorder %s17, 1
    %p56 = scmp.ne.s32.totalorder %s51, %s53
    %p57 = scmp.eq.s32.totalorder %s17, 0
    %p58 = por %p56, %p57
    %p59 = scmp.ne.s32.totalorder %s51, %s53
    %p60 = scmp.eq.s32.totalorder %s22, 1
    %p61 = por %p59, %p60
    %p62 = scmp.ne.s32.totalorder %s53, %s54
    %p63 = scmp.eq.s32.totalorder %s22, 0
    %p64 = por %p62, %p63
    %p65 = scmp.ne.s32.totalorder %s53, %s54
    %p66 = scmp.eq.s32.totalorder %s23, 1
    %p67 = por %p65, %p66
    %p69 = scmp.ne.s32.totalorder %s54, %s68
    %p70 = scmp.eq.s32.totalorder %s23, 0
    %p71 = por %p69, %p70
    %s73 = sadd.s32 %s72, 1
    %p76 = scmp.eq.s32.totalorder %s17, 1
    %p77 = scmp.ne.s32.totalorder %s72, %s74
    %p78 = scmp.eq.s32.totalorder %s17, 0
    %p79 = por %p77, %p78
    %p80 = scmp.ne.s32.totalorder %s72, %s74
    %p81 = scmp.eq.s32.totalorder %s22, 1
    %p82 = por %p80, %p81
    %p83 = scmp.ne.s32.totalorder %s74, %s75
    %p84 = scmp.eq.s32.totalorder %s22, 0
    %p85 = por %p83, %p84
    %p86 = scmp.ne.s32.totalorder %s74, %s75
    %p87 = scmp.eq.s32.totalorder %s23, 1
    %p88 = por %p86, %p87
    %p90 = scmp.ne.s32.totalorder %s75, %s89
    %p91 = scmp.eq.s32.totalorder %s23, 0
    %p92 = por %p90, %p91
    %s94 = sadd.s32 %s93, 1
    %p97 = scmp.eq.s32.totalorder %s17, 1
    %p98 = scmp.ne.s32.totalorder %s93, %s95
    %p99 = scmp.eq.s32.totalorder %s17, 0
    %p100 = por %p98, %p99
    %p101 = scmp.ne.s32.totalorder %s93, %s95
    %p102 = scmp.eq.s32.totalorder %s22, 1
    %p103 = por %p101, %p102
    %p104 = scmp.ne.s32.totalorder %s95, %s96
    %p105 = scmp.eq.s32.totalorder %s22, 0
    %p106 = por %p104, %p105
    %p107 = scmp.ne.s32.totalorder %s95, %s96
    %p108 = scmp.eq.s32.totalorder %s23, 1
    %p109 = por %p107, %p108
    %p111 = scmp.ne.s32.totalorder %s96, %s110
    %p112 = scmp.eq.s32.totalorder %s23, 0
    %p113 = por %p111, %p112
    %s115 = sadd.s32 %s114, 1
    %p118 = scmp.eq.s32.totalorder %s17, 1
    %p119 = scmp.ne.s32.totalorder %s114, %s116
    %p120 = scmp.eq.s32.totalorder %s17, 0
    %p121 = por %p119, %p120
    %p122 = scmp.ne.s32.totalorder %s114, %s116
    %p123 = scmp.eq.s32.totalorder %s22, 1
    %p124 = por %p122, %p123
    %p125 = scmp.ne.s32.totalorder %s116, %s117
    %p126 = scmp.eq.s32.totalorder %s22, 0
    %p127 = por %p125, %p126
    %p128 = scmp.ne.s32.totalorder %s116, %s117
    %p129 = scmp.eq.s32.totalorder %s23, 1
    %p130 = por %p128, %p129
    %p132 = scmp.ne.s32.totalorder %s117, %s131
    %p133 = scmp.eq.s32.totalorder %s23, 0
    %p134 = por %p132, %p133
    %s136 = sadd.s32 %s135, 1
    %p139 = scmp.eq.s32.totalorder %s17, 1
    %p140 = scmp.ne.s32.totalorder %s135, %s137
    %p141 = scmp.eq.s32.totalorder %s17, 0
    %p142 = por %p140, %p141
    %p143 = scmp.ne.s32.totalorder %s135, %s137
    %p144 = scmp.eq.s32.totalorder %s22, 1
    %p145 = por %p143, %p144
    %p146 = scmp.ne.s32.totalorder %s137, %s138
    %p147 = scmp.eq.s32.totalorder %s22, 0
    %p148 = por %p146, %p147
    %p149 = scmp.ne.s32.totalorder %s137, %s138
    %p150 = scmp.eq.s32.totalorder %s23, 1
    %p151 = por %p149, %p150
    %p153 = scmp.ne.s32.totalorder %s138, %s152
    %p154 = scmp.eq.s32.totalorder %s23, 0
    %p155 = por %p153, %p154
    %s157 = sadd.s32 %s156, 1
    %p160 = scmp.eq.s32.totalorder %s17, 1
    %p161 = scmp.ne.s32.totalorder %s156, %s158
    %p162 = scmp.eq.s32.totalorder %s17, 0
    %p163 = por %p161, %p162
    %p164 = scmp.ne.s32.totalorder %s156, %s158
    %p165 = scmp.eq.s32.totalorder %s22, 1
    %p166 = por %p164, %p165
    %p167 = scmp.ne.s32.totalorder %s158, %s159
    %p168 = scmp.eq.s32.totalorder %s22, 0
    %p169 = por %p167, %p168
    %p170 = scmp.ne.s32.totalorder %s158, %s159
    %p171 = scmp.eq.s32.totalorder %s23, 1
    %p172 = por %p170, %p171
    %p174 = scmp.ne.s32.totalorder %s159, %s173
    %p175 = scmp.eq.s32.totalorder %s23, 0
    %p176 = por %p174, %p175
    %s178 = sadd.s32 %s177, 1
    %p181 = scmp.eq.s32.totalorder %s17, 1
    %p182 = scmp.ne.s32.totalorder %s177, %s179
    %p183 = scmp.eq.s32.totalorder %s17, 0
    %p184 = por %p182, %p183
    %p185 = scmp.ne.s32.totalorder %s177, %s179
    %p186 = scmp.eq.s32.totalorder %s22, 1
    %p187 = por %p185, %p186
    %p188 = scmp.ne.s32.totalorder %s179, %s180
    %p189 = scmp.eq.s32.totalorder %s22, 0
    %p190 = por %p188, %p189
    %p191 = scmp.ne.s32.totalorder %s179, %s180
    %p192 = scmp.eq.s32.totalorder %s23, 1
    %p193 = por %p191, %p192
    %p195 = scmp.ne.s32.totalorder %s180, %s194
    %p196 = scmp.eq.s32.totalorder %s23, 0
    %p197 = por %p195, %p196
    %s199 = sadd.s32 %s198, 1
    %p202 = scmp.eq.s32.totalorder %s17, 1
    %p203 = scmp.ne.s32.totalorder %s198, %s200
    %p204 = scmp.eq.s32.totalorder %s17, 0
    %p205 = por %p203, %p204
    %p206 = scmp.ne.s32.totalorder %s198, %s200
    %p207 = scmp.eq.s32.totalorder %s22, 1
    %p208 = por %p206, %p207
    %p209 = scmp.ne.s32.totalorder %s200, %s201
    %p210 = scmp.eq.s32.totalorder %s22, 0
    %p211 = por %p209, %p210
    %p212 = scmp.ne.s32.totalorder %s200, %s201
    %p213 = scmp.eq.s32.totalorder %s23, 1
    %p214 = por %p212, %p213
    %p216 = scmp.ne.s32.totalorder %s201, %s215
    %p217 = scmp.eq.s32.totalorder %s23, 0
    %p218 = por %p216, %p217
    %s220 = sadd.s32 %s219, 1
    %p223 = scmp.eq.s32.totalorder %s17, 1
    %p224 = scmp.ne.s32.totalorder %s219, %s221
    %p225 = scmp.eq.s32.totalorder %s17, 0
    %p226 = por %p224, %p225
    %p227 = scmp.ne.s32.totalorder %s219, %s221
    %p228 = scmp.eq.s32.totalorder %s22, 1
    %p229 = por %p227, %p228
    %p230 = scmp.ne.s32.totalorder %s221, %s222
    %p231 = scmp.eq.s32.totalorder %s22, 0
    %p232 = por %p230, %p231
    %p233 = scmp.ne.s32.totalorder %s221, %s222
    %p234 = scmp.eq.s32.totalorder %s23, 1
    %p235 = por %p233, %p234
    %p237 = scmp.ne.s32.totalorder %s222, %s236
    %p238 = scmp.eq.s32.totalorder %s23, 0
    %p239 = por %p237, %p238
    %s241 = sadd.s32 %s240, 1
    %p244 = scmp.eq.s32.totalorder %s17, 1
    %p245 = scmp.ne.s32.totalorder %s240, %s242
    %p246 = scmp.eq.s32.totalorder %s17, 0
    %p247 = por %p245, %p246
    %p248 = scmp.ne.s32.totalorder %s240, %s242
    %p249 = scmp.eq.s32.totalorder %s22, 1
    %p250 = por %p248, %p249
    %p251 = scmp.ne.s32.totalorder %s242, %s243
    %p252 = scmp.eq.s32.totalorder %s22, 0
    %p253 = por %p251, %p252
    %p254 = scmp.ne.s32.totalorder %s242, %s243
    %p255 = scmp.eq.s32.totalorder %s23, 1
    %p256 = por %p254, %p255
    %p258 = scmp.ne.s32.totalorder %s243, %s257
    %p259 = scmp.eq.s32.totalorder %s23, 0
    %p260 = por %p258, %p259
    %s261 = ssub.s32 %s17, %s24
    %p262 = scmp.eq.s32.totalorder %s261, 0
    %s264 = sadd.s32 %s263, 1
    %s265 = scalar_select %p262, %s263, %s264
    %p268 = pneg %p262
    %p269 = scmp.eq.s32.totalorder %s17, 1
    %p270 = por %p268, %p269
    %p271 = scmp.ne.s32.totalorder %s263, %s266
    %p272 = scmp.eq.s32.totalorder %s17, 0
    %p273 = por %p271, %p272
    %p274 = scmp.ne.s32.totalorder %s263, %s266
    %p275 = scmp.eq.s32.totalorder %s22, 1
    %p276 = por %p274, %p275
    %p277 = scmp.ne.s32.totalorder %s266, %s267
    %p278 = scmp.eq.s32.totalorder %s22, 0
    %p279 = por %p277, %p278
    %p280 = scmp.ne.s32.totalorder %s266, %s267
    %p281 = scmp.eq.s32.totalorder %s23, 1
    %p282 = por %p280, %p281
    %p284 = scmp.ne.s32.totalorder %s267, %s283
    %p285 = scmp.eq.s32.totalorder %s23, 0
    %p286 = por %p284, %p285
    %p287 = scmp.le.s32.totalorder 1, %s17
    %p288 = scmp.lt.s32.totalorder %s17, 3
    %p289 = pnand %p287, %p288
    %p290 = pneg %p289
    // Predicated region
    $region9: #{inception_a.1} parent=5 // pred_check
      _
    $region10: #{inception_a.1} parent=5 // pred_check_branch
      %292 = sbr.rel (%p289) target = $region12
    $region11: #{inception_a.1} parent=5 // pred_region
      %s293 = ssub.s32 %s17, 1
      // Predicated region
      $region13: #{inception_a.1} parent=11 // pred_check
        %p294 = pneg %p64
      $region14: #{inception_a.1} parent=11 // pred_check_branch
        %296 = sbr.rel (%p294) target = $region16
      $region15: #{inception_a.1} parent=11 // pred_region
        _
      $region16: #{inception_a.1} parent=11 // pred_fallthru
        _
      // Predicated region
      $region17: #{inception_a.1} parent=11 // pred_check
        %p297 = pneg %p85
      $region18: #{inception_a.1} parent=11 // pred_check_branch
        %299 = sbr.rel (%p297) target = $region20
      $region19: #{inception_a.1} parent=11 // pred_region
        _
      $region20: #{inception_a.1} parent=11 // pred_fallthru
        _
      // Predicated region
      $region21: #{inception_a.1} parent=11 // pred_check
        %p300 = pneg %p106
      $region22: #{inception_a.1} parent=11 // pred_check_branch
        %302 = sbr.rel (%p300) target = $region24
      $region23: #{inception_a.1} parent=11 // pred_region
        _
      $region24: #{inception_a.1} parent=11 // pred_fallthru
        _
      // Predicated region
      $region25: #{inception_a.1} parent=11 // pred_check
        %p303 = pneg %p127
      $region26: #{inception_a.1} parent=11 // pred_check_branch
        %305 = sbr.rel (%p303) target = $region28
      $region27: #{inception_a.1} parent=11 // pred_region
        _
      $region28: #{inception_a.1} parent=11 // pred_fallthru
        _
      // Predicated region
      $region29: #{inception_a.1} parent=11 // pred_check
        %p306 = pneg %p148
      $region30: #{inception_a.1} parent=11 // pred_check_branch
        %308 = sbr.rel (%p306) target = $region32
      $region31: #{inception_a.1} parent=11 // pred_region
        _
      $region32: #{inception_a.1} parent=11 // pred_fallthru
        _
      // Predicated region
      $region33: #{inception_a.1} parent=11 // pred_check
        %p309 = pneg %p169
      $region34: #{inception_a.1} parent=11 // pred_check_branch
        %311 = sbr.rel (%p309) target = $region36
      $region35: #{inception_a.1} parent=11 // pred_region
        _
      $region36: #{inception_a.1} parent=11 // pred_fallthru
        _
      // Predicated region
      $region37: #{inception_a.1} parent=11 // pred_check
        %p312 = pneg %p190
      $region38: #{inception_a.1} parent=11 // pred_check_branch
        %314 = sbr.rel (%p312) target = $region40
      $region39: #{inception_a.1} parent=11 // pred_region
        _
      $region40: #{inception_a.1} parent=11 // pred_fallthru
        _
      // Predicated region
      $region41: #{inception_a.1} parent=11 // pred_check
        %p315 = pneg %p211
      $region42: #{inception_a.1} parent=11 // pred_check_branch
        %317 = sbr.rel (%p315) target = $region44
      $region43: #{inception_a.1} parent=11 // pred_region
        _
      $region44: #{inception_a.1} parent=11 // pred_fallthru
        _
      // Predicated region
      $region45: #{inception_a.1} parent=11 // pred_check
        %p318 = pneg %p232
      $region46: #{inception_a.1} parent=11 // pred_check_branch
        %320 = sbr.rel (%p318) target = $region48
      $region47: #{inception_a.1} parent=11 // pred_region
        _
      $region48: #{inception_a.1} parent=11 // pred_fallthru
        _
      // Predicated region
      $region49: #{inception_a.1} parent=11 // pred_check
        %p321 = pneg %p253
      $region50: #{inception_a.1} parent=11 // pred_check_branch
        %323 = sbr.rel (%p321) target = $region52
      $region51: #{inception_a.1} parent=11 // pred_region
        _
      $region52: #{inception_a.1} parent=11 // pred_fallthru
        _
    $region12: #{inception_a.1} parent=5 // pred_fallthru
      _
    %p324 = scmp.lt.s32.totalorder %s17, 2
    // Predicated region
    $region53: #{inception_a.1} parent=5 // pred_check
      %p325 = pneg %p324
    $region54: #{inception_a.1} parent=5 // pred_check_branch
      %327 = sbr.rel (%p325) target = $region56
    $region55: #{inception_a.1} parent=5 // pred_region
      // Predicated region
      $region57: #{inception_a.1} parent=55 // pred_check
        %p328 = pneg %p37
      $region58: #{inception_a.1} parent=55 // pred_check_branch
        %330 = sbr.rel (%p328) target = $region60
      $region59: #{inception_a.1} parent=55 // pred_region
        %p331 = scmp.lt.s32.totalorder %s17, 1
        %s332 = scalar_select %p331, %s17, 1
        %s333 = smul.addr %s332, 2
        %s334 = smul.addr %s333, 4
        %s335 = scalar_lea.vmem %s0, %s334
      $region60: #{inception_a.1} parent=55 // pred_fallthru
        _
    $region56: #{inception_a.1} parent=5 // pred_fallthru
      _
    %p336 = scmp.le.s32.totalorder 1, %s17
    %p337 = scmp.lt.s32.totalorder %s17, 3
    %p338 = pnand %p336, %p337
    %p339 = pneg %p338
    // Predicated region
    $region61: #{inception_a.1} parent=5 // pred_check
      _
    $region62: #{inception_a.1} parent=5 // pred_check_branch
      %341 = sbr.rel (%p338) target = $region64
    $region63: #{inception_a.1} parent=5 // pred_region
      %s342 = ssub.s32 %s17, 1
      %p343 = scmp.lt.s32.totalorder %s22, 1
      %s344 = scalar_select %p343, %s22, 1
      %s345 = smul.addr %s344, 2
      %s346 = smul.addr %s345, 4
      %s347 = scalar_lea.vmem %s0, %s346
      %p348 = pneg %p43
      %p349 = pneg %p40
      %p350 = pneg %p64
      %p351 = pneg %p61
      %p352 = pneg %p85
      %p353 = pneg %p82
      %p354 = pneg %p106
      %p355 = pneg %p103
      %p356 = pneg %p127
      %p357 = pneg %p124
      %p358 = pneg %p148
      %p359 = pneg %p145
      %p360 = pneg %p169
      %p361 = pneg %p166
      %p362 = pneg %p190
      %p363 = pneg %p187
      %p364 = pneg %p211
      %p365 = pneg %p208
      %p366 = pneg %p232
      %p367 = pneg %p229
      %p368 = pneg %p253
      %p369 = pneg %p250
      %p370 = pneg %p279
      %p371 = pneg %p276
      %p372 = scmp.lt.s32.totalorder %s22, 1
      %s373 = scalar_select %p372, %s22, 1
      %s374 = smul.addr %s373, 22
      %s375 = smul.addr %s374, 8
      %s376 = scalar_lea.vmem %s11, %s375
      %p377 = scmp.lt.s32.totalorder %s22, 1
      %s378 = scalar_select %p377, %s22, 1
      %s379 = smul.addr %s378, 2
      %s380 = smul.addr %s379, 4
      %s381 = scalar_lea.vmem %s0, %s380
      %p382 = scmp.lt.s32.totalorder %s22, 1
      %s383 = scalar_select %p382, %s22, 1
      %s384 = smul.addr %s383, 22
      %s385 = smul.addr %s384, 8
      %s386 = scalar_lea.vmem %s11, %s385
      %v387 = vlaneseq
      %v388 = vand.u32 %v387, 127
      %v389 = vadd.s32 %v388, 128
      %vm390 = vcmp.lt.s32.totalorder %v388, 0
      %v391 = vsub.s32 0, %v388
      %v392 = vsel %vm390, %v391, %v388
      %v393 = vshrl.u32 %v392, 4
      %v394 = vand.u32 %v392, 15
      %v395 = vsub.s32 0, %v394
      %v396 = vsel %vm390, %v395, %v394
      %vm397 = vcmp.lt.s32.totalorder %v389, 0
      %v398 = vsub.s32 0, %v389
      %v399 = vsel %vm397, %v398, %v389
      %v400 = vshrl.u32 %v399, 4
      %v401 = vand.u32 %v399, 15
      %v402 = vsub.s32 0, %v401
      %v403 = vsel %vm397, %v402, %v401
      %vm404 = vcmp.ne.s32.totalorder %v396, 0
      %vm405 = vcmp.ne.s32.totalorder %v403, 0
      %vm406 = vcmp.lt.s32.totalorder %v396, 0
      %vm407 = vcmp.lt.s32.totalorder %v403, 0
      %vm408 = vmand %vm406, %vm404
      %vm409 = vmand %vm407, %vm405
      %v410 = vadd.s32 %v396, 16
      %v411 = vadd.s32 %v403, 16
      %v412 = vsel %vm408, %v410, %v396
      %v413 = vsel %vm409, %v411, %v403
      %v414 = vld [vmem:[%s381] sm:$0xff]
      %v415 = vld [vmem:[%s1] sm:$0xff]
      %v416 = vld [vmem:[%s1 + $0x8] sm:$0xff]
      %v417 = vld [vmem:[%s1 + $0x10] sm:$0xff]
      %v418 = vld [vmem:[%s1 + $0x18] sm:$0xff]
      %v419 = vld [vmem:[%s1 + $0x20] sm:$0xff]
      %v420 = vld [vmem:[%s1 + $0x28] sm:$0xff]
      %v421 = vld [vmem:[%s2] sm:$0xff]
      %v422 = vld [vmem:[%s2 + $0x8] sm:$0xff]
      %v423 = vld [vmem:[%s2 + $0x10] sm:$0xff]
      %v424 = vld [vmem:[%s2 + $0x18] sm:$0xff]
      %v425 = vld [vmem:[%s2 + $0x20] sm:$0xff]
      %v426 = vld [vmem:[%s2 + $0x28] sm:$0xff]
      %428 = vset.pattern.permute.xlu0 0
      %429 = vperm.xlu0 %428, %v421
      %v430 = vpop.permute.xlu0 %429
      %433 = vset.pattern.permute.xlu0 0
      %434 = vperm.xlu0 %433, %v422
      %v435 = vpop.permute.xlu0 %434
      %438 = vset.pattern.permute.xlu0 0
      %439 = vperm.xlu0 %438, %v423
      %v440 = vpop.permute.xlu0 %439
      %443 = vset.pattern.permute.xlu0 0
      %444 = vperm.xlu0 %443, %v424
      %v445 = vpop.permute.xlu0 %444
      %448 = vset.pattern.permute.xlu0 0
      %449 = vperm.xlu0 %448, %v425
      %v450 = vpop.permute.xlu0 %449
      %453 = vset.pattern.permute.xlu0 0
      %454 = vperm.xlu0 %453, %v426
      %v455 = vpop.permute.xlu0 %454
      %v458 = vcombine.high %v414, %v414
      %vm459 = vcmask 31744
      %v461 = vsel %vm459, %v415, 0
      %v464 = vsel %vm459, %v416, 0
      %v467 = vsel %vm459, %v417, 0
      %v470 = vsel %vm459, %v418, 0
      %v473 = vsel %vm459, %v419, 0
      %v476 = vsel %vm459, %v420, 0
      %vm478 = vcmask 1043456
      %v479 = vsel %vm478, %v414, 0
      %v481 = vsel %vm478, %v458, 0
      %483 = vmatprep.subr.mxu0 %v481
      %484 = vmatpush1.msra.mxu0 %v479
      %485 = vmatprep.subr.mxu0 0.0
      %486 = vmatpush1.msra.mxu0 0.0
      %487 = vmatprep.subr.mxu0 0.0
      %488 = vmatpush1.msra.mxu0 0.0
      %489 = vmatprep.subr.mxu0 0.0
      %490 = vmatpush1.msra.mxu0 0.0
      %491 = vmatprep.subr.mxu0 0.0
      %492 = vmatpush1.msra.mxu0 0.0
      %493 = vmatprep.subr.mxu0 0.0
      %494 = vmatpush1.msra.mxu0 0.0
      %495 = vmatprep.subr.mxu0 0.0
      %496 = vmatpush1.msra.mxu0 0.0
      %497 = vmatprep.subr.mxu0 0.0
      %498 = vmatpush1.msra.mxu0 0.0
      %499 = vmatprep.subr.mxu0 0.0
      %500 = vmatpush1.msra.mxu0 0.0
      %501 = vmatprep.subr.mxu0 0.0
      %502 = vmatpush1.msra.mxu0 0.0
      %503 = vmatprep.subr.mxu0 0.0
      %504 = vmatpush1.msra.mxu0 0.0
      %505 = vmatprep.subr.mxu0 0.0
      %506 = vmatpush1.msra.mxu0 0.0
      %507 = vmatprep.subr.mxu0 0.0
      %508 = vmatpush1.msra.mxu0 0.0
      %509 = vmatprep.subr.mxu0 0.0
      %510 = vmatpush1.msra.mxu0 0.0
      %511 = vmatprep.subr.mxu0 0.0
      %512 = vmatpush1.msra.mxu0 0.0
      %513 = vmatprep.subr.mxu0 0.0
      %514 = vmatpush1.msra.mxu0 0.0
      %515 = vmatprep.subr.mxu0 0.0
      %516 = vmatpush1.msra.mxu0 0.0
      %517 = vmatprep.subr.mxu0 0.0
      %518 = vmatpush1.msra.mxu0 0.0
      %519 = vmatprep.subr.mxu0 0.0
      %520 = vmatpush1.msra.mxu0 0.0
      %521 = vmatprep.subr.mxu0 0.0
      %522 = vmatpush1.msra.mxu0 0.0
      %523 = vmatprep.subr.mxu0 0.0
      %524 = vmatpush1.msra.mxu0 0.0
      %525 = vmatprep.subr.mxu0 0.0
      %526 = vmatpush1.msra.mxu0 0.0
      %527 = vmatprep.subr.mxu0 0.0
      %528 = vmatpush1.msra.mxu0 0.0
      %529 = vmatprep.subr.mxu0 0.0
      %530 = vmatpush1.msra.mxu0 0.0
      %531 = vmatprep.subr.mxu0 0.0
      %532 = vmatpush1.msra.mxu0 0.0
      %533 = vmatprep.subr.mxu0 0.0
      %534 = vmatpush1.msra.mxu0 0.0
      %535 = vmatprep.subr.mxu0 0.0
      %536 = vmatpush1.msra.mxu0 0.0
      %537 = vmatprep.subr.mxu0 0.0
      %538 = vmatpush1.msra.mxu0 0.0
      %539 = vmatprep.subr.mxu0 0.0
      %540 = vmatpush1.msra.mxu0 0.0
      %541 = vmatprep.subr.mxu0 0.0
      %542 = vmatpush1.msra.mxu0 0.0
      %543 = vmatprep.subr.mxu0 0.0
      %544 = vmatpush1.msra.mxu0 0.0
      %545 = vmatprep.subr.mxu0 0.0
      %546 = vmatpush1.msra.mxu0 0.0
      %547 = vmatprep.mubr.f32.mxu0 0.0
      %548 = vmatmul.mubr.f32.gmra.mrb[0].mxu0 %v461
      %v549 = vpop.f32.mrb[0].mxu0
      %v550 = vadd.f32 %v430, %v549
      %v551 = vpop.f32.mrb[0].mxu0
      %v552 = vadd.f32 %v430, %v551
      %553 = vmatprep.mubr.f32.mxu0 0.0
      %554 = vmatmul.mubr.f32.gmra.mrb[0].mxu0 %v464
      %v555 = vpop.f32.mrb[0].mxu0
      %v556 = vadd.f32 %v435, %v555
      %v557 = vpop.f32.mrb[0].mxu0
      %v558 = vadd.f32 %v435, %v557
      %559 = vmatprep.mubr.f32.mxu0 0.0
      %560 = vmatmul.mubr.f32.gmra.mrb[0].mxu0 %v467
      %v561 = vpop.f32.mrb[0].mxu0
      %v562 = vadd.f32 %v440, %v561
      %v563 = vpop.f32.mrb[0].mxu0
      %v564 = vadd.f32 %v440, %v563
      %565 = vmatprep.mubr.f32.mxu0 0.0
      %566 = vmatmul.mubr.f32.gmra.mrb[0].mxu0 %v470
      %v567 = vpop.f32.mrb[0].mxu0
      %v568 = vadd.f32 %v445, %v567
      %v569 = vpop.f32.mrb[0].mxu0
      %v570 = vadd.f32 %v445, %v569
      %571 = vmatprep.mubr.f32.mxu0 0.0
      %572 = vmatmul.mubr.f32.gmra.mrb[0].mxu0 %v473
      %v573 = vpop.f32.mrb[0].mxu0
      %v574 = vadd.f32 %v450, %v573
      %v575 = vpop.f32.mrb[0].mxu0
      %v576 = vadd.f32 %v450, %v575
      %577 = vmatprep.mubr.f32.mxu0 0.0
      %578 = vmatmul.mubr.f32.gmra.mrb[0].mxu0 %v476
      %v579 = vpop.f32.mrb[0].mxu0
      %v580 = vadd.f32 %v455, %v579
      %v581 = vpop.f32.mrb[0].mxu0
      %v582 = vadd.f32 %v455, %v581
      %583 = vdwg.mxu0
      %588 = vrot.lane.b32.xlu0 %v562, 17
      %v589 = vpop.permute.xlu0 %588
      %590 = vrot.lane.b32.xlu0 %v564, 17
      %v591 = vpop.permute.xlu0 %590
      %592 = vrot.lane.b32.xlu0 %v568, 17
      %v593 = vpop.permute.xlu0 %592
      %594 = vrot.lane.b32.xlu0 %v570, 17
      %v595 = vpop.permute.xlu0 %594
      %vm596 = vcmask 138240
      %v597 = vsel %vm596, %v589, %v591
      %v598 = vsel %vm596, %v593, %v595
      %v605 = vsel %vm596, 0.0, %v589
      %v606 = vsel %vm596, 0.0, %v593
      %v607 = vsel %vm596, %v591, 0.0
      %v608 = vsel %vm596, %v595, 0.0
      %v609 = vadd.s32 %v412, 4294967295
      %v610 = vadd.s32 %v413, 4294967295
      %vm611 = vcmp.ge.s32.totalorder %v609, 0
      %vm612 = vcmp.ge.s32.totalorder %v610, 0
      %vm613 = vcmp.lt.s32.totalorder %v609, 16
      %vm614 = vcmp.lt.s32.totalorder %v610, 16
      %vm615 = vmand %vm611, %vm613
      %vm616 = vmand %vm612, %vm614
      %v617 = vsel %vm615, 1, 0
      %v618 = vsel %vm616, 1, 0
      %vm619 = vcmp.eq.s32.totalorder %v617, 1
      %vm620 = vcmp.eq.s32.totalorder %v618, 1
      %v621 = vsel %vm619, %v605, 0.0
      %v622 = vsel %vm620, %v597, 0.0
      %v623 = vsel %vm619, %v606, 0.0
      %v624 = vsel %vm620, %v598, 0.0
      %v625 = vadd.s32 %v412, 1
      %v626 = vadd.s32 %v413, 1
      %vm627 = vcmp.ge.s32.totalorder %v625, 0
      %vm628 = vcmp.ge.s32.totalorder %v626, 0
      %vm629 = vcmp.lt.s32.totalorder %v625, 16
      %vm630 = vcmp.lt.s32.totalorder %v626, 16
      %vm631 = vmand %vm627, %vm629
      %vm632 = vmand %vm628, %vm630
      %v633 = vsel %vm631, 1, 0
      %v634 = vsel %vm632, 1, 0
      %vm635 = vcmp.eq.s32.totalorder %v633, 1
      %vm636 = vcmp.eq.s32.totalorder %v634, 1
      %641 = vrot.lane.b32.xlu0 %v605, 126
      %v642 = vpop.permute.xlu0 %641
      %643 = vrot.lane.b32.xlu0 %v597, 126
      %v644 = vpop.permute.xlu0 %643
      %645 = vrot.lane.b32.xlu0 %v607, 126
      %v646 = vpop.permute.xlu0 %645
      %647 = vrot.lane.b32.xlu0 %v606, 126
      %v648 = vpop.permute.xlu0 %647
      %649 = vrot.lane.b32.xlu0 %v598, 126
      %v650 = vpop.permute.xlu0 %649
      %651 = vrot.lane.b32.xlu0 %v608, 126
      %v652 = vpop.permute.xlu0 %651
      %vm653 = vcmask 1031168
      %v654 = vsel %vm653, %v642, %v644
      %v655 = vsel %vm653, %v644, %v646
      %v656 = vsel %vm653, %v648, %v650
      %v657 = vsel %vm653, %v650, %v652
      %v662 = vsel %vm635, %v654, 0.0
      %v663 = vsel %vm636, %v655, 0.0
      %v664 = vsel %vm635, %v656, 0.0
      %v665 = vsel %vm636, %v657, 0.0
      %666 = vrot.lane.b32.xlu0 %v605, 112
      %v667 = vpop.permute.xlu0 %666
      %668 = vrot.lane.b32.xlu0 %v597, 112
      %v669 = vpop.permute.xlu0 %668
      %670 = vrot.lane.b32.xlu0 %v607, 112
      %v671 = vpop.permute.xlu0 %670
      %672 = vrot.lane.b32.xlu0 %v606, 112
      %v673 = vpop.permute.xlu0 %672
      %674 = vrot.lane.b32.xlu0 %v598, 112
      %v675 = vpop.permute.xlu0 %674
      %676 = vrot.lane.b32.xlu0 %v608, 112
      %v677 = vpop.permute.xlu0 %676
      %vm678 = vcmask 916480
      %v679 = vsel %vm678, %v667, %v669
      %v680 = vsel %vm678, %v669, %v671
      %v681 = vsel %vm678, %v673, %v675
      %v682 = vsel %vm678, %v675, %v677
      %v687 = vsel %vm619, %v679, 0.0
      %v688 = vsel %vm620, %v680, 0.0
      %v689 = vsel %vm619, %v681, 0.0
      %v690 = vsel %vm620, %v682, 0.0
      %691 = vrot.lane.b32.xlu0 %v605, 110
      %v692 = vpop.permute.xlu0 %691
      %693 = vrot.lane.b32.xlu0 %v597, 110
      %v694 = vpop.permute.xlu0 %693
      %695 = vrot.lane.b32.xlu0 %v607, 110
      %v696 = vpop.permute.xlu0 %695
      %697 = vrot.lane.b32.xlu0 %v606, 110
      %v698 = vpop.permute.xlu0 %697
      %699 = vrot.lane.b32.xlu0 %v598, 110
      %v700 = vpop.permute.xlu0 %699
      %701 = vrot.lane.b32.xlu0 %v608, 110
      %v702 = vpop.permute.xlu0 %701
      %vm703 = vcmask 900096
      %v704 = vsel %vm703, %v692, %v694
      %v705 = vsel %vm703, %v694, %v696
      %v706 = vsel %vm703, %v698, %v700
      %v707 = vsel %vm703, %v700, %v702
      %v712 = vsel %vm635, %v704, 0.0
      %v713 = vsel %vm636, %v705, 0.0
      %v714 = vsel %vm635, %v706, 0.0
      %v715 = vsel %vm636, %v707, 0.0
      %716 = vrot.lane.b32.xlu0 %v605, 96
      %v717 = vpop.permute.xlu0 %716
      %718 = vrot.lane.b32.xlu0 %v597, 96
      %v719 = vpop.permute.xlu0 %718
      %720 = vrot.lane.b32.xlu0 %v607, 96
      %v721 = vpop.permute.xlu0 %720
      %722 = vrot.lane.b32.xlu0 %v606, 96
      %v723 = vpop.permute.xlu0 %722
      %724 = vrot.lane.b32.xlu0 %v598, 96
      %v725 = vpop.permute.xlu0 %724
      %726 = vrot.lane.b32.xlu0 %v608, 96
      %v727 = vpop.permute.xlu0 %726
      %vm728 = vcmask 785408
      %v729 = vsel %vm728, %v717, %v719
      %v730 = vsel %vm728, %v719, %v721
      %v731 = vsel %vm728, %v723, %v725
      %v732 = vsel %vm728, %v725, %v727
      %v737 = vsel %vm619, %v729, 0.0
      %v738 = vsel %vm620, %v730, 0.0
      %v739 = vsel %vm619, %v731, 0.0
      %v740 = vsel %vm620, %v732, 0.0
      %741 = vrot.lane.b32.xlu0 %v605, 94
      %v742 = vpop.permute.xlu0 %741
      %743 = vrot.lane.b32.xlu0 %v597, 94
      %v744 = vpop.permute.xlu0 %743
      %745 = vrot.lane.b32.xlu0 %v607, 94
      %v746 = vpop.permute.xlu0 %745
      %747 = vrot.lane.b32.xlu0 %v606, 94
      %v748 = vpop.permute.xlu0 %747
      %749 = vrot.lane.b32.xlu0 %v598, 94
      %v750 = vpop.permute.xlu0 %749
      %751 = vrot.lane.b32.xlu0 %v608, 94
      %v752 = vpop.permute.xlu0 %751
      %vm753 = vcmask 769024
      %v754 = vsel %vm753, %v742, %v744
      %v755 = vsel %vm753, %v744, %v746
      %v756 = vsel %vm753, %v748, %v750
      %v757 = vsel %vm753, %v750, %v752
      %v762 = vsel %vm635, %v754, 0.0
      %v763 = vsel %vm636, %v755, 0.0
      %v764 = vsel %vm635, %v756, 0.0
      %v765 = vsel %vm636, %v757, 0.0
      %766 = vrot.lane.b32.xlu0 %v605, 127
      %v767 = vpop.permute.xlu0 %766
      %768 = vrot.lane.b32.xlu0 %v597, 127
      %v769 = vpop.permute.xlu0 %768
      %770 = vrot.lane.b32.xlu0 %v607, 127
      %v771 = vpop.permute.xlu0 %770
      %772 = vrot.lane.b32.xlu0 %v606, 127
      %v773 = vpop.permute.xlu0 %772
      %774 = vrot.lane.b32.xlu0 %v598, 127
      %v775 = vpop.permute.xlu0 %774
      %776 = vrot.lane.b32.xlu0 %v608, 127
      %v777 = vpop.permute.xlu0 %776
      %vm778 = vcmask 1039360
      %v779 = vsel %vm778, %v767, %v769
      %v780 = vsel %vm778, %v769, %v771
      %v781 = vsel %vm778, %v773, %v775
      %v782 = vsel %vm778, %v775, %v777
      %787 = vrot.lane.b32.xlu0 %v605, 111
      %v788 = vpop.permute.xlu0 %787
      %789 = vrot.lane.b32.xlu0 %v597, 111
      %v790 = vpop.permute.xlu0 %789
      %791 = vrot.lane.b32.xlu0 %v607, 111
      %v792 = vpop.permute.xlu0 %791
      %793 = vrot.lane.b32.xlu0 %v606, 111
      %v794 = vpop.permute.xlu0 %793
      %795 = vrot.lane.b32.xlu0 %v598, 111
      %v796 = vpop.permute.xlu0 %795
      %797 = vrot.lane.b32.xlu0 %v608, 111
      %v798 = vpop.permute.xlu0 %797
      %vm799 = vcmask 908288
      %v800 = vsel %vm799, %v788, %v790
      %v801 = vsel %vm799, %v790, %v792
      %v802 = vsel %vm799, %v794, %v796
      %v803 = vsel %vm799, %v796, %v798
      %808 = vrot.lane.b32.xlu0 %v605, 95
      %v809 = vpop.permute.xlu0 %808
      %810 = vrot.lane.b32.xlu0 %v597, 95
      %v811 = vpop.permute.xlu0 %810
      %812 = vrot.lane.b32.xlu0 %v607, 95
      %v813 = vpop.permute.xlu0 %812
      %814 = vrot.lane.b32.xlu0 %v606, 95
      %v815 = vpop.permute.xlu0 %814
      %816 = vrot.lane.b32.xlu0 %v598, 95
      %v817 = vpop.permute.xlu0 %816
      %818 = vrot.lane.b32.xlu0 %v608, 95
      %v819 = vpop.permute.xlu0 %818
      %vm820 = vcmask 777216
      %v821 = vsel %vm820, %v809, %v811
      %v822 = vsel %vm820, %v811, %v813
      %v823 = vsel %vm820, %v815, %v817
      %v824 = vsel %vm820, %v817, %v819
      %v829 = vld [vmem:[%s3] sm:$0xff]
      %v830 = vld [vmem:[%s3 + $0x8] sm:$0xff]
      %v831 = vld [vmem:[%s3 + $0x10] sm:$0xff]
      %v832 = vld [vmem:[%s3 + $0x18] sm:$0xff]
      %v833 = vld [vmem:[%s3 + $0x20] sm:$0xff]
      %v834 = vld [vmem:[%s3 + $0x28] sm:$0xff]
      %v835 = vld [vmem:[%s4] sm:$0xff]
      %v836 = vld [vmem:[%s4 + $0x8] sm:$0xff]
      %v837 = vld [vmem:[%s4 + $0x10] sm:$0xff]
      %839 = vset.pattern.permute.xlu0 0
      %840 = vperm.xlu0 %839, %v835
      %v841 = vpop.permute.xlu0 %840
      %844 = vset.pattern.permute.xlu0 0
      %845 = vperm.xlu0 %844, %v836
      %v846 = vpop.permute.xlu0 %845
      %849 = vset.pattern.permute.xlu0 0
      %850 = vperm.xlu0 %849, %v837
      %v851 = vpop.permute.xlu0 %850
      %vm853 = vcmask 130048
      %v855 = vsel %vm853, %v830, 0
      %v858 = vsel %vm853, %v832, 0
      %v861 = vsel %vm853, %v834, 0
      %863 = vmatprep.subr.mxu0 %v622
      %864 = vmatpush1.msra.mxu0 %v621
      %865 = vmatprep.subr.mxu0 %v624
      %866 = vmatpush1.msra.mxu0 %v623
      %867 = vmatprep.subr.mxu0 %v780
      %868 = vmatpush1.msra.mxu0 %v779
      %869 = vmatprep.subr.mxu0 %v782
      %870 = vmatpush1.msra.mxu0 %v781
      %871 = vmatprep.subr.mxu0 %v663
      %872 = vmatpush1.msra.mxu0 %v662
      %873 = vmatprep.subr.mxu0 %v665
      %874 = vmatpush1.msra.mxu0 %v664
      %875 = vmatprep.subr.mxu0 %v688
      %876 = vmatpush1.msra.mxu0 %v687
      %877 = vmatprep.subr.mxu0 %v690
      %878 = vmatpush1.msra.mxu0 %v689
      %879 = vmatprep.subr.mxu0 %v801
      %880 = vmatpush1.msra.mxu0 %v800
      %881 = vmatprep.subr.mxu0 %v803
      %882 = vmatpush1.msra.mxu0 %v802
      %883 = vmatprep.subr.mxu0 %v713
      %884 = vmatpush1.msra.mxu0 %v712
      %885 = vmatprep.subr.mxu0 %v715
      %886 = vmatpush1.msra.mxu0 %v714
      %887 = vmatprep.subr.mxu0 %v738
      %888 = vmatpush1.msra.mxu0 %v737
      %889 = vmatprep.subr.mxu0 %v740
      %890 = vmatpush1.msra.mxu0 %v739
      %891 = vmatprep.subr.mxu0 %v822
      %892 = vmatpush1.msra.mxu0 %v821
      %893 = vmatprep.subr.mxu0 %v824
      %894 = vmatpush1.msra.mxu0 %v823
      %895 = vmatprep.subr.mxu0 %v763
      %896 = vmatpush1.msra.mxu0 %v762
      %897 = vmatprep.subr.mxu0 %v765
      %898 = vmatpush1.msra.mxu0 %v764
      %899 = vmatprep.subr.mxu0 0.0
      %900 = vmatpush1.msra.mxu0 0.0
      %901 = vmatprep.subr.mxu0 0.0
      %902 = vmatpush1.msra.mxu0 0.0
      %903 = vmatprep.subr.mxu0 0.0
      %904 = vmatpush1.msra.mxu0 0.0
      %905 = vmatprep.subr.mxu0 0.0
      %906 = vmatpush1.msra.mxu0 0.0
      %907 = vmatprep.subr.mxu0 0.0
      %908 = vmatpush1.msra.mxu0 0.0
      %909 = vmatprep.subr.mxu0 0.0
      %910 = vmatpush1.msra.mxu0 0.0
      %911 = vmatprep.subr.mxu0 0.0
      %912 = vmatpush1.msra.mxu0 0.0
      %913 = vmatprep.subr.mxu0 0.0
      %914 = vmatpush1.msra.mxu0 0.0
      %915 = vmatprep.subr.mxu0 0.0
      %916 = vmatpush1.msra.mxu0 0.0
      %917 = vmatprep.subr.mxu0 0.0
      %918 = vmatpush1.msra.mxu0 0.0
      %919 = vmatprep.subr.mxu0 0.0
      %920 = vmatpush1.msra.mxu0 0.0
      %921 = vmatprep.subr.mxu0 0.0
      %922 = vmatpush1.msra.mxu0 0.0
      %923 = vmatprep.subr.mxu0 0.0
      %924 = vmatpush1.msra.mxu0 0.0
      %925 = vmatprep.subr.mxu0 0.0
      %926 = vmatpush1.msra.mxu0 0.0
      %927 = vmatprep.mubr.f32.mxu0 %v855
      %928 = vmatmul.mubr.f32.gmra.mrb[0].mxu0 %v829
      %v929 = vpop.f32.mrb[0].mxu0
      %v930 = vadd.f32 %v841, %v929
      %v931 = vpop.f32.mrb[0].mxu0
      %v932 = vadd.f32 %v841, %v931
      %933 = vmatprep.mubr.f32.mxu0 %v858
      %934 = vmatmul.mubr.f32.gmra.mrb[0].mxu0 %v831
      %v935 = vpop.f32.mrb[0].mxu0
      %v936 = vadd.f32 %v846, %v935
      %v937 = vpop.f32.mrb[0].mxu0
      %v938 = vadd.f32 %v846, %v937
      %939 = vmatprep.mubr.f32.mxu0 %v861
      %940 = vmatmul.mubr.f32.gmra.mrb[0].mxu0 %v833
      %v941 = vpop.f32.mrb[0].mxu0
      %v942 = vadd.f32 %v851, %v941
      %v943 = vpop.f32.mrb[0].mxu0
      %v944 = vadd.f32 %v851, %v943
      %945 = vdwg.mxu0
      %952 = vrot.lane.b32.xlu0 %v930, 17
      %v953 = vpop.permute.xlu0 %952
      %954 = vrot.lane.b32.xlu0 %v932, 17
      %v955 = vpop.permute.xlu0 %954
      %956 = vrot.lane.b32.xlu0 %v936, 17
      %v957 = vpop.permute.xlu0 %956
      %958 = vrot.lane.b32.xlu0 %v938, 17
      %v959 = vpop.permute.xlu0 %958
      %960 = vrot.lane.b32.xlu0 %v942, 17
      %v961 = vpop.permute.xlu0 %960
      %962 = vrot.lane.b32.xlu0 %v944, 17
      %v963 = vpop.permute.xlu0 %962
      %v964 = vsel %vm596, %v953, %v955
      %v965 = vsel %vm596, %v957, %v959
      %v966 = vsel %vm596, %v961, %v963
      %v976 = vsel %vm596, 0.0, %v953
      %v977 = vsel %vm596, 0.0, %v957
      %v978 = vsel %vm596, 0.0, %v961
      %v979 = vsel %vm596, %v955, 0.0
      %v980 = vsel %vm596, %v959, 0.0
      %v981 = vsel %vm596, %v963, 0.0
      %v982 = vsel %vm619, %v976, 0.0
      %v983 = vsel %vm620, %v964, 0.0
      %v984 = vsel %vm619, %v977, 0.0
      %v985 = vsel %vm620, %v965, 0.0
      %v986 = vsel %vm619, %v978, 0.0
      %v987 = vsel %vm620, %v966, 0.0
      %994 = vrot.lane.b32.xlu0 %v976, 126
      %v995 = vpop.permute.xlu0 %994
      %996 = vrot.lane.b32.xlu0 %v964, 126
      %v997 = vpop.permute.xlu0 %996
      %998 = vrot.lane.b32.xlu0 %v979, 126
      %v999 = vpop.permute.xlu0 %998
      %1000 = vrot.lane.b32.xlu0 %v977, 126
      %v1001 = vpop.permute.xlu0 %1000
      %1002 = vrot.lane.b32.xlu0 %v965, 126
      %v1003 = vpop.permute.xlu0 %1002
      %1004 = vrot.lane.b32.xlu0 %v980, 126
      %v1005 = vpop.permute.xlu0 %1004
      %1006 = vrot.lane.b32.xlu0 %v978, 126
      %v1007 = vpop.permute.xlu0 %1006
      %1008 = vrot.lane.b32.xlu0 %v966, 126
      %v1009 = vpop.permute.xlu0 %1008
      %1010 = vrot.lane.b32.xlu0 %v981, 126
      %v1011 = vpop.permute.xlu0 %1010
      %v1012 = vsel %vm653, %v995, %v997
      %v1013 = vsel %vm653, %v997, %v999
      %v1014 = vsel %vm653, %v1001, %v1003
      %v1015 = vsel %vm653, %v1003, %v1005
      %v1016 = vsel %vm653, %v1007, %v1009
      %v1017 = vsel %vm653, %v1009, %v1011
      %v1024 = vsel %vm635, %v1012, 0.0
      %v1025 = vsel %vm636, %v1013, 0.0
      %v1026 = vsel %vm635, %v1014, 0.0
      %v1027 = vsel %vm636, %v1015, 0.0
      %v1028 = vsel %vm635, %v1016, 0.0
      %v1029 = vsel %vm636, %v1017, 0.0
      %1030 = vrot.lane.b32.xlu0 %v976, 112
      %v1031 = vpop.permute.xlu0 %1030
      %1032 = vrot.lane.b32.xlu0 %v964, 112
      %v1033 = vpop.permute.xlu0 %1032
      %1034 = vrot.lane.b32.xlu0 %v979, 112
      %v1035 = vpop.permute.xlu0 %1034
      %1036 = vrot.lane.b32.xlu0 %v977, 112
      %v1037 = vpop.permute.xlu0 %1036
      %1038 = vrot.lane.b32.xlu0 %v965, 112
      %v1039 = vpop.permute.xlu0 %1038
      %1040 = vrot.lane.b32.xlu0 %v980, 112
      %v1041 = vpop.permute.xlu0 %1040
      %1042 = vrot.lane.b32.xlu0 %v978, 112
      %v1043 = vpop.permute.xlu0 %1042
      %1044 = vrot.lane.b32.xlu0 %v966, 112
      %v1045 = vpop.permute.xlu0 %1044
      %1046 = vrot.lane.b32.xlu0 %v981, 112
      %v1047 = vpop.permute.xlu0 %1046
      %v1048 = vsel %vm678, %v1031, %v1033
      %v1049 = vsel %vm678, %v1033, %v1035
      %v1050 = vsel %vm678, %v1037, %v1039
      %v1051 = vsel %vm678, %v1039, %v1041
      %v1052 = vsel %vm678, %v1043, %v1045
      %v1053 = vsel %vm678, %v1045, %v1047
      %v1060 = vsel %vm619, %v1048, 0.0
      %v1061 = vsel %vm620, %v1049, 0.0
      %v1062 = vsel %vm619, %v1050, 0.0
      %v1063 = vsel %vm620, %v1051, 0.0
      %v1064 = vsel %vm619, %v1052, 0.0
      %v1065 = vsel %vm620, %v1053, 0.0
      %1066 = vrot.lane.b32.xlu0 %v976, 110
      %v1067 = vpop.permute.xlu0 %1066
      %1068 = vrot.lane.b32.xlu0 %v964, 110
      %v1069 = vpop.permute.xlu0 %1068
      %1070 = vrot.lane.b32.xlu0 %v979, 110
      %v1071 = vpop.permute.xlu0 %1070
      %1072 = vrot.lane.b32.xlu0 %v977, 110
      %v1073 = vpop.permute.xlu0 %1072
      %1074 = vrot.lane.b32.xlu0 %v965, 110
      %v1075 = vpop.permute.xlu0 %1074
      %1076 = vrot.lane.b32.xlu0 %v980, 110
      %v1077 = vpop.permute.xlu0 %1076
      %1078 = vrot.lane.b32.xlu0 %v978, 110
      %v1079 = vpop.permute.xlu0 %1078
      %1080 = vrot.lane.b32.xlu0 %v966, 110
      %v1081 = vpop.permute.xlu0 %1080
      %1082 = vrot.lane.b32.xlu0 %v981, 110
      %v1083 = vpop.permute.xlu0 %1082
      %v1084 = vsel %vm703, %v1067, %v1069
      %v1085 = vsel %vm703, %v1069, %v1071
      %v1086 = vsel %vm703, %v1073, %v1075
      %v1087 = vsel %vm703, %v1075, %v1077
      %v1088 = vsel %vm703, %v1079, %v1081
      %v1089 = vsel %vm703, %v1081, %v1083
      %v1096 = vsel %vm635, %v1084, 0.0
      %v1097 = vsel %vm636, %v1085, 0.0
      %v1098 = vsel %vm635, %v1086, 0.0
      %v1099 = vsel %vm636, %v1087, 0.0
      %v1100 = vsel %vm635, %v1088, 0.0
      %v1101 = vsel %vm636, %v1089, 0.0
      %1102 = vrot.lane.b32.xlu0 %v976, 96
      %v1103 = vpop.permute.xlu0 %1102
      %1104 = vrot.lane.b32.xlu0 %v964, 96
      %v1105 = vpop.permute.xlu0 %1104
      %1106 = vrot.lane.b32.xlu0 %v979, 96
      %v1107 = vpop.permute.xlu0 %1106
      %1108 = vrot.lane.b32.xlu0 %v977, 96
      %v1109 = vpop.permute.xlu0 %1108
      %1110 = vrot.lane.b32.xlu0 %v965, 96
      %v1111 = vpop.permute.xlu0 %1110
      %1112 = vrot.lane.b32.xlu0 %v980, 96
      %v1113 = vpop.permute.xlu0 %1112
      %1114 = vrot.lane.b32.xlu0 %v978, 96
      %v1115 = vpop.permute.xlu0 %1114
      %1116 = vrot.lane.b32.xlu0 %v966, 96
      %v1117 = vpop.permute.xlu0 %1116
      %1118 = vrot.lane.b32.xlu0 %v981, 96
      %v1119 = vpop.permute.xlu0 %1118
      %v1120 = vsel %vm728, %v1103, %v1105
      %v1121 = vsel %vm728, %v1105, %v1107
      %v1122 = vsel %vm728, %v1109, %v1111
      %v1123 = vsel %vm728, %v1111, %v1113
      %v1124 = vsel %vm728, %v1115, %v1117
      %v1125 = vsel %vm728, %v1117, %v1119
      %v1132 = vsel %vm619, %v1120, 0.0
      %v1133 = vsel %vm620, %v1121, 0.0
      %v1134 = vsel %vm619, %v1122, 0.0
      %v1135 = vsel %vm620, %v1123, 0.0
      %v1136 = vsel %vm619, %v1124, 0.0
      %v1137 = vsel %vm620, %v1125, 0.0
      %1138 = vrot.lane.b32.xlu0 %v976, 94
      %v1139 = vpop.permute.xlu0 %1138
      %1140 = vrot.lane.b32.xlu0 %v964, 94
      %v1141 = vpop.permute.xlu0 %1140
      %1142 = vrot.lane.b32.xlu0 %v979, 94
      %v1143 = vpop.permute.xlu0 %1142
      %1144 = vrot.lane.b32.xlu0 %v977, 94
      %v1145 = vpop.permute.xlu0 %1144
      %1146 = vrot.lane.b32.xlu0 %v965, 94
      %v1147 = vpop.permute.xlu0 %1146
      %1148 = vrot.lane.b32.xlu0 %v980, 94
      %v1149 = vpop.permute.xlu0 %1148
      %1150 = vrot.lane.b32.xlu0 %v978, 94
      %v1151 = vpop.permute.xlu0 %1150
      %1152 = vrot.lane.b32.xlu0 %v966, 94
      %v1153 = vpop.permute.xlu0 %1152
      %1154 = vrot.lane.b32.xlu0 %v981, 94
      %v1155 = vpop.permute.xlu0 %1154
      %v1156 = vsel %vm753, %v1139, %v1141
      %v1157 = vsel %vm753, %v1141, %v1143
      %v1158 = vsel %vm753, %v1145, %v1147
      %v1159 = vsel %vm753, %v1147, %v1149
      %v1160 = vsel %vm753, %v1151, %v1153
      %v1161 = vsel %vm753, %v1153, %v1155
      %v1168 = vsel %vm635, %v1156, 0.0
      %v1169 = vsel %vm636, %v1157, 0.0
      %v1170 = vsel %vm635, %v1158, 0.0
      %v1171 = vsel %vm636, %v1159, 0.0
      %v1172 = vsel %vm635, %v1160, 0.0
      %v1173 = vsel %vm636, %v1161, 0.0
      %1174 = vrot.lane.b32.xlu0 %v976, 127
      %v1175 = vpop.permute.xlu0 %1174
      %1176 = vrot.lane.b32.xlu0 %v964, 127
      %v1177 = vpop.permute.xlu0 %1176
      %1178 = vrot.lane.b32.xlu0 %v979, 127
      %v1179 = vpop.permute.xlu0 %1178
      %1180 = vrot.lane.b32.xlu0 %v977, 127
      %v1181 = vpop.permute.xlu0 %1180
      %1182 = vrot.lane.b32.xlu0 %v965, 127
      %v1183 = vpop.permute.xlu0 %1182
      %1184 = vrot.lane.b32.xlu0 %v980, 127
      %v1185 = vpop.permute.xlu0 %1184
      %1186 = vrot.lane.b32.xlu0 %v978, 127
      %v1187 = vpop.permute.xlu0 %1186
      %1188 = vrot.lane.b32.xlu0 %v966, 127
      %v1189 = vpop.permute.xlu0 %1188
      %1190 = vrot.lane.b32.xlu0 %v981, 127
      %v1191 = vpop.permute.xlu0 %1190
      %v1192 = vsel %vm778, %v1175, %v1177
      %v1193 = vsel %vm778, %v1177, %v1179
      %v1194 = vsel %vm778, %v1181, %v1183
      %v1195 = vsel %vm778, %v1183, %v1185
      %v1196 = vsel %vm778, %v1187, %v1189
      %v1197 = vsel %vm778, %v1189, %v1191
      %1204 = vrot.lane.b32.xlu0 %v976, 111
      %v1205 = vpop.permute.xlu0 %1204
      %1206 = vrot.lane.b32.xlu0 %v964, 111
      %v1207 = vpop.permute.xlu0 %1206
      %1208 = vrot.lane.b32.xlu0 %v979, 111
      %v1209 = vpop.permute.xlu0 %1208
      %1210 = vrot.lane.b32.xlu0 %v977, 111
      %v1211 = vpop.permute.xlu0 %1210
      %1212 = vrot.lane.b32.xlu0 %v965, 111
      %v1213 = vpop.permute.xlu0 %1212
      %1214 = vrot.lane.b32.xlu0 %v980, 111
      %v1215 = vpop.permute.xlu0 %1214
      %1216 = vrot.lane.b32.xlu0 %v978, 111
      %v1217 = vpop.permute.xlu0 %1216
      %1218 = vrot.lane.b32.xlu0 %v966, 111
      %v1219 = vpop.permute.xlu0 %1218
      %1220 = vrot.lane.b32.xlu0 %v981, 111
      %v1221 = vpop.permute.xlu0 %1220
      %v1222 = vsel %vm799, %v1205, %v1207
      %v1223 = vsel %vm799, %v1207, %v1209
      %v1224 = vsel %vm799, %v1211, %v1213
      %v1225 = vsel %vm799, %v1213, %v1215
      %v1226 = vsel %vm799, %v1217, %v1219
      %v1227 = vsel %vm799, %v1219, %v1221
      %1234 = vrot.lane.b32.xlu0 %v976, 95
      %v1235 = vpop.permute.xlu0 %1234
      %1236 = vrot.lane.b32.xlu0 %v964, 95
      %v1237 = vpop.permute.xlu0 %1236
      %1238 = vrot.lane.b32.xlu0 %v979, 95
      %v1239 = vpop.permute.xlu0 %1238
      %1240 = vrot.lane.b32.xlu0 %v977, 95
      %v1241 = vpop.permute.xlu0 %1240
      %1242 = vrot.lane.b32.xlu0 %v965, 95
      %v1243 = vpop.permute.xlu0 %1242
      %1244 = vrot.lane.b32.xlu0 %v980, 95
      %v1245 = vpop.permute.xlu0 %1244
      %1246 = vrot.lane.b32.xlu0 %v978, 95
      %v1247 = vpop.permute.xlu0 %1246
      %1248 = vrot.lane.b32.xlu0 %v966, 95
      %v1249 = vpop.permute.xlu0 %1248
      %1250 = vrot.lane.b32.xlu0 %v981, 95
      %v1251 = vpop.permute.xlu0 %1250
      %v1252 = vsel %vm820, %v1235, %v1237
      %v1253 = vsel %vm820, %v1237, %v1239
      %v1254 = vsel %vm820, %v1241, %v1243
      %v1255 = vsel %vm820, %v1243, %v1245
      %v1256 = vsel %vm820, %v1247, %v1249
      %v1257 = vsel %vm820, %v1249, %v1251
      %v1264 = vld [vmem:[%s5] sm:$0xff]
      %v1265 = vld [vmem:[%s5 + $0x8] sm:$0xff]
      %v1266 = vld [vmem:[%s5 + $0x10] sm:$0xff]
      %v1267 = vld [vmem:[%s5 + $0x18] sm:$0xff]
      %v1268 = vld [vmem:[%s5 + $0x20] sm:$0xff]
      %v1269 = vld [vmem:[%s5 + $0x28] sm:$0xff]
      %v1270 = vld [vmem:[%s6] sm:$0xff]
      %v1271 = vld [vmem:[%s6 + $0x8] sm:$0xff]
      %v1272 = vld [vmem:[%s6 + $0x10] sm:$0xff]
      %1274 = vset.pattern.permute.xlu0 0
      %1275 = vperm.xlu0 %1274, %v1270
      %v1276 = vpop.permute.xlu0 %1275
      %1279 = vset.pattern.permute.xlu0 0
      %1280 = vperm.xlu0 %1279, %v1271
      %v1281 = vpop.permute.xlu0 %1280
      %1284 = vset.pattern.permute.xlu0 0
      %1285 = vperm.xlu0 %1284, %v1272
      %v1286 = vpop.permute.xlu0 %1285
      %vm1288 = vcmask 719872
      %v1290 = vsel %vm1288, %v1265, 0
      %v1293 = vsel %vm1288, %v1267, 0
      %v1296 = vsel %vm1288, %v1269, 0
      %1298 = vmatprep.subr.mxu0 %v983
      %1299 = vmatpush1.msra.mxu0 %v982
      %1300 = vmatprep.subr.mxu0 %v985
      %1301 = vmatpush1.msra.mxu0 %v984
      %1302 = vmatprep.subr.mxu0 %v987
      %1303 = vmatpush1.msra.mxu0 %v986
      %1304 = vmatprep.subr.mxu0 %v1193
      %1305 = vmatpush1.msra.mxu0 %v1192
      %1306 = vmatprep.subr.mxu0 %v1195
      %1307 = vmatpush1.msra.mxu0 %v1194
      %1308 = vmatprep.subr.mxu0 %v1197
      %1309 = vmatpush1.msra.mxu0 %v1196
      %1310 = vmatprep.subr.mxu0 %v1025
      %1311 = vmatpush1.msra.mxu0 %v1024
      %1312 = vmatprep.subr.mxu0 %v1027
      %1313 = vmatpush1.msra.mxu0 %v1026
      %1314 = vmatprep.subr.mxu0 %v1029
      %1315 = vmatpush1.msra.mxu0 %v1028
      %1316 = vmatprep.subr.mxu0 %v1061
      %1317 = vmatpush1.msra.mxu0 %v1060
      %1318 = vmatprep.subr.mxu0 %v1063
      %1319 = vmatpush1.msra.mxu0 %v1062
      %1320 = vmatprep.subr.mxu0 %v1065
      %1321 = vmatpush1.msra.mxu0 %v1064
      %1322 = vmatprep.subr.mxu0 %v1223
      %1323 = vmatpush1.msra.mxu0 %v1222
      %1324 = vmatprep.subr.mxu0 %v1225
      %1325 = vmatpush1.msra.mxu0 %v1224
      %1326 = vmatprep.subr.mxu0 %v1227
      %1327 = vmatpush1.msra.mxu0 %v1226
      %1328 = vmatprep.subr.mxu0 %v1097
      %1329 = vmatpush1.msra.mxu0 %v1096
      %1330 = vmatprep.subr.mxu0 %v1099
      %1331 = vmatpush1.msra.mxu0 %v1098
      %1332 = vmatprep.subr.mxu0 %v1101
      %1333 = vmatpush1.msra.mxu0 %v1100
      %1334 = vmatprep.subr.mxu0 %v1133
      %1335 = vmatpush1.msra.mxu0 %v1132
      %1336 = vmatprep.subr.mxu0 %v1135
      %1337 = vmatpush1.msra.mxu0 %v1134
      %1338 = vmatprep.subr.mxu0 %v1137
      %1339 = vmatpush1.msra.mxu0 %v1136
      %1340 = vmatprep.subr.mxu0 %v1253
      %1341 = vmatpush1.msra.mxu0 %v1252
      %1342 = vmatprep.subr.mxu0 %v1255
      %1343 = vmatpush1.msra.mxu0 %v1254
      %1344 = vmatprep.subr.mxu0 %v1257
      %1345 = vmatpush1.msra.mxu0 %v1256
      %1346 = vmatprep.subr.mxu0 %v1169
      %1347 = vmatpush1.msra.mxu0 %v1168
      %1348 = vmatprep.subr.mxu0 %v1171
      %1349 = vmatpush1.msra.mxu0 %v1170
      %1350 = vmatprep.subr.mxu0 %v1173
      %1351 = vmatpush1.msra.mxu0 %v1172
      %1352 = vmatprep.subr.mxu0 0.0
      %1353 = vmatpush1.msra.mxu0 0.0
      %1354 = vmatprep.subr.mxu0 0.0
      %1355 = vmatpush1.msra.mxu0 0.0
      %1356 = vmatprep.subr.mxu0 0.0
      %1357 = vmatpush1.msra.mxu0 0.0
      %1358 = vmatprep.subr.mxu0 0.0
      %1359 = vmatpush1.msra.mxu0 0.0
      %1360 = vmatprep.subr.mxu0 0.0
      %1361 = vmatpush1.msra.mxu0 0.0
      %1362 = vmatprep.mubr.f32.mxu0 %v1290
      %1363 = vmatmul.mubr.f32.gmra.mrb[0].mxu0 %v1264
      %v1364 = vpop.f32.mrb[0].mxu0
      %v1365 = vadd.f32 %v1276, %v1364
      %v1366 = vpop.f32.mrb[0].mxu0
      %v1367 = vadd.f32 %v1276, %v1366
      %1368 = vmatprep.mubr.f32.mxu0 %v1293
      %1369 = vmatmul.mubr.f32.gmra.mrb[0].mxu0 %v1266
      %v1370 = vpop.f32.mrb[0].mxu0
      %v1371 = vadd.f32 %v1281, %v1370
      %v1372 = vpop.f32.mrb[0].mxu0
      %v1373 = vadd.f32 %v1281, %v1372
      %1374 = vmatprep.mubr.f32.mxu0 %v1296
      %1375 = vmatmul.mubr.f32.gmra.mrb[0].mxu0 %v1268
      %v1376 = vpop.f32.mrb[0].mxu0
      %v1377 = vadd.f32 %v1286, %v1376
      %v1378 = vpop.f32.mrb[0].mxu0
      %v1379 = vadd.f32 %v1286, %v1378
      %1380 = vdwg.mxu0
      %1385 = vrot.lane.b32.xlu0 %v574, 34
      %v1386 = vpop.permute.xlu0 %1385
      %1387 = vrot.lane.b32.xlu0 %v576, 34
      %v1388 = vpop.permute.xlu0 %1387
      %1389 = vrot.lane.b32.xlu0 %v580, 34
      %v1390 = vpop.permute.xlu0 %1389
      %1391 = vrot.lane.b32.xlu0 %v582, 34
      %v1392 = vpop.permute.xlu0 %1391
      %vm1393 = vcmask 277504
      %v1394 = vsel %vm1393, %v1386, %v1388
      %v1395 = vsel %vm1393, %v1390, %v1392
      %v1402 = vsel %vm1393, 0.0, %v1386
      %v1403 = vsel %vm1393, 0.0, %v1390
      %v1404 = vsel %vm1393, %v1388, 0.0
      %v1405 = vsel %vm1393, %v1392, 0.0
      %v1406 = vadd.s32 %v412, 4294967294
      %v1407 = vadd.s32 %v413, 4294967294
      %vm1408 = vcmp.ge.s32.totalorder %v1406, 0
      %vm1409 = vcmp.ge.s32.totalorder %v1407, 0
      %vm1410 = vcmp.lt.s32.totalorder %v1406, 16
      %vm1411 = vcmp.lt.s32.totalorder %v1407, 16
      %vm1412 = vmand %vm1408, %vm1410
      %vm1413 = vmand %vm1409, %vm1411
      %v1414 = vsel %vm1412, 1, 0
      %v1415 = vsel %vm1413, 1, 0
      %vm1416 = vcmp.eq.s32.totalorder %v1414, 1
      %vm1417 = vcmp.eq.s32.totalorder %v1415, 1
      %v1418 = vsel %vm1416, %v1402, 0.0
      %v1419 = vsel %vm1417, %v1394, 0.0
      %v1420 = vsel %vm1416, %v1403, 0.0
      %v1421 = vsel %vm1417, %v1395, 0.0
      %1426 = vrot.lane.b32.xlu0 %v1402, 127
      %v1427 = vpop.permute.xlu0 %1426
      %1428 = vrot.lane.b32.xlu0 %v1394, 127
      %v1429 = vpop.permute.xlu0 %1428
      %1430 = vrot.lane.b32.xlu0 %v1404, 127
      %v1431 = vpop.permute.xlu0 %1430
      %1432 = vrot.lane.b32.xlu0 %v1403, 127
      %v1433 = vpop.permute.xlu0 %1432
      %1434 = vrot.lane.b32.xlu0 %v1395, 127
      %v1435 = vpop.permute.xlu0 %1434
      %1436 = vrot.lane.b32.xlu0 %v1405, 127
      %v1437 = vpop.permute.xlu0 %1436
      %v1438 = vsel %vm778, %v1427, %v1429
      %v1439 = vsel %vm778, %v1429, %v1431
      %v1440 = vsel %vm778, %v1433, %v1435
      %v1441 = vsel %vm778, %v1435, %v1437
      %v1446 = vsel %vm619, %v1438, 0.0
      %v1447 = vsel %vm620, %v1439, 0.0
      %v1448 = vsel %vm619, %v1440, 0.0
      %v1449 = vsel %vm620, %v1441, 0.0
      %1450 = vrot.lane.b32.xlu0 %v1402, 125
      %v1451 = vpop.permute.xlu0 %1450
      %1452 = vrot.lane.b32.xlu0 %v1394, 125
      %v1453 = vpop.permute.xlu0 %1452
      %1454 = vrot.lane.b32.xlu0 %v1404, 125
      %v1455 = vpop.permute.xlu0 %1454
      %1456 = vrot.lane.b32.xlu0 %v1403, 125
      %v1457 = vpop.permute.xlu0 %1456
      %1458 = vrot.lane.b32.xlu0 %v1395, 125
      %v1459 = vpop.permute.xlu0 %1458
      %1460 = vrot.lane.b32.xlu0 %v1405, 125
      %v1461 = vpop.permute.xlu0 %1460
      %vm1462 = vcmask 1022976
      %v1463 = vsel %vm1462, %v1451, %v1453
      %v1464 = vsel %vm1462, %v1453, %v1455
      %v1465 = vsel %vm1462, %v1457, %v1459
      %v1466 = vsel %vm1462, %v1459, %v1461
      %v1471 = vsel %vm635, %v1463, 0.0
      %v1472 = vsel %vm636, %v1464, 0.0
      %v1473 = vsel %vm635, %v1465, 0.0
      %v1474 = vsel %vm636, %v1466, 0.0
      %v1475 = vadd.s32 %v412, 2
      %v1476 = vadd.s32 %v413, 2
      %vm1477 = vcmp.ge.s32.totalorder %v1475, 0
      %vm1478 = vcmp.ge.s32.totalorder %v1476, 0
      %vm1479 = vcmp.lt.s32.totalorder %v1475, 16
      %vm1480 = vcmp.lt.s32.totalorder %v1476, 16
      %vm1481 = vmand %vm1477, %vm1479
      %vm1482 = vmand %vm1478, %vm1480
      %v1483 = vsel %vm1481, 1, 0
      %v1484 = vsel %vm1482, 1, 0
      %vm1485 = vcmp.eq.s32.totalorder %v1483, 1
      %vm1486 = vcmp.eq.s32.totalorder %v1484, 1
      %1487 = vrot.lane.b32.xlu0 %v1402, 124
      %v1488 = vpop.permute.xlu0 %1487
      %1489 = vrot.lane.b32.xlu0 %v1394, 124
      %v1490 = vpop.permute.xlu0 %1489
      %1491 = vrot.lane.b32.xlu0 %v1404, 124
      %v1492 = vpop.permute.xlu0 %1491
      %1493 = vrot.lane.b32.xlu0 %v1403, 124
      %v1494 = vpop.permute.xlu0 %1493
      %1495 = vrot.lane.b32.xlu0 %v1395, 124
      %v1496 = vpop.permute.xlu0 %1495
      %1497 = vrot.lane.b32.xlu0 %v1405, 124
      %v1498 = vpop.permute.xlu0 %1497
      %vm1499 = vcmask 1014784
      %v1500 = vsel %vm1499, %v1488, %v1490
      %v1501 = vsel %vm1499, %v1490, %v1492
      %v1502 = vsel %vm1499, %v1494, %v1496
      %v1503 = vsel %vm1499, %v1496, %v1498
      %v1508 = vsel %vm1485, %v1500, 0.0
      %v1509 = vsel %vm1486, %v1501, 0.0
      %v1510 = vsel %vm1485, %v1502, 0.0
      %v1511 = vsel %vm1486, %v1503, 0.0
      %1512 = vrot.lane.b32.xlu0 %v1402, 112
      %v1513 = vpop.permute.xlu0 %1512
      %1514 = vrot.lane.b32.xlu0 %v1394, 112
      %v1515 = vpop.permute.xlu0 %1514
      %1516 = vrot.lane.b32.xlu0 %v1404, 112
      %v1517 = vpop.permute.xlu0 %1516
      %1518 = vrot.lane.b32.xlu0 %v1403, 112
      %v1519 = vpop.permute.xlu0 %1518
      %1520 = vrot.lane.b32.xlu0 %v1395, 112
      %v1521 = vpop.permute.xlu0 %1520
      %1522 = vrot.lane.b32.xlu0 %v1405, 112
      %v1523 = vpop.permute.xlu0 %1522
      %v1524 = vsel %vm678, %v1513, %v1515
      %v1525 = vsel %vm678, %v1515, %v1517
      %v1526 = vsel %vm678, %v1519, %v1521
      %v1527 = vsel %vm678, %v1521, %v1523
      %v1532 = vsel %vm1416, %v1524, 0.0
      %v1533 = vsel %vm1417, %v1525, 0.0
      %v1534 = vsel %vm1416, %v1526, 0.0
      %v1535 = vsel %vm1417, %v1527, 0.0
      %1536 = vrot.lane.b32.xlu0 %v1402, 111
      %v1537 = vpop.permute.xlu0 %1536
      %1538 = vrot.lane.b32.xlu0 %v1394, 111
      %v1539 = vpop.permute.xlu0 %1538
      %1540 = vrot.lane.b32.xlu0 %v1404, 111
      %v1541 = vpop.permute.xlu0 %1540
      %1542 = vrot.lane.b32.xlu0 %v1403, 111
      %v1543 = vpop.permute.xlu0 %1542
      %1544 = vrot.lane.b32.xlu0 %v1395, 111
      %v1545 = vpop.permute.xlu0 %1544
      %1546 = vrot.lane.b32.xlu0 %v1405, 111
      %v1547 = vpop.permute.xlu0 %1546
      %v1548 = vsel %vm799, %v1537, %v1539
      %v1549 = vsel %vm799, %v1539, %v1541
      %v1550 = vsel %vm799, %v1543, %v1545
      %v1551 = vsel %vm799, %v1545, %v1547
      %v1556 = vsel %vm619, %v1548, 0.0
      %v1557 = vsel %vm620, %v1549, 0.0
      %v1558 = vsel %vm619, %v1550, 0.0
      %v1559 = vsel %vm620, %v1551, 0.0
      %1560 = vrot.lane.b32.xlu0 %v1402, 109
      %v1561 = vpop.permute.xlu0 %1560
      %1562 = vrot.lane.b32.xlu0 %v1394, 109
      %v1563 = vpop.permute.xlu0 %1562
      %1564 = vrot.lane.b32.xlu0 %v1404, 109
      %v1565 = vpop.permute.xlu0 %1564
      %1566 = vrot.lane.b32.xlu0 %v1403, 109
      %v1567 = vpop.permute.xlu0 %1566
      %1568 = vrot.lane.b32.xlu0 %v1395, 109
      %v1569 = vpop.permute.xlu0 %1568
      %1570 = vrot.lane.b32.xlu0 %v1405, 109
      %v1571 = vpop.permute.xlu0 %1570
      %vm1572 = vcmask 891904
      %v1573 = vsel %vm1572, %v1561, %v1563
      %v1574 = vsel %vm1572, %v1563, %v1565
      %v1575 = vsel %vm1572, %v1567, %v1569
      %v1576 = vsel %vm1572, %v1569, %v1571
      %v1581 = vsel %vm635, %v1573, 0.0
      %v1582 = vsel %vm636, %v1574, 0.0
      %v1583 = vsel %vm635, %v1575, 0.0
      %v1584 = vsel %vm636, %v1576, 0.0
      %1585 = vrot.lane.b32.xlu0 %v1402, 108
      %v1586 = vpop.permute.xlu0 %1585
      %1587 = vrot.lane.b32.xlu0 %v1394, 108
      %v1588 = vpop.permute.xlu0 %1587
      %1589 = vrot.lane.b32.xlu0 %v1404, 108
      %v1590 = vpop.permute.xlu0 %1589
      %1591 = vrot.lane.b32.xlu0 %v1403, 108
      %v1592 = vpop.permute.xlu0 %1591
      %1593 = vrot.lane.b32.xlu0 %v1395, 108
      %v1594 = vpop.permute.xlu0 %1593
      %1595 = vrot.lane.b32.xlu0 %v1405, 108
      %v1596 = vpop.permute.xlu0 %1595
      %vm1597 = vcmask 883712
      %v1598 = vsel %vm1597, %v1586, %v1588
      %v1599 = vsel %vm1597, %v1588, %v1590
      %v1600 = vsel %vm1597, %v1592, %v1594
      %v1601 = vsel %vm1597, %v1594, %v1596
      %v1606 = vsel %vm1485, %v1598, 0.0
      %v1607 = vsel %vm1486, %v1599, 0.0
      %v1608 = vsel %vm1485, %v1600, 0.0
      %v1609 = vsel %vm1486, %v1601, 0.0
      %1610 = vrot.lane.b32.xlu0 %v1402, 96
      %v1611 = vpop.permute.xlu0 %1610
      %1612 = vrot.lane.b32.xlu0 %v1394, 96
      %v1613 = vpop.permute.xlu0 %1612
      %1614 = vrot.lane.b32.xlu0 %v1404, 96
      %v1615 = vpop.permute.xlu0 %1614
      %1616 = vrot.lane.b32.xlu0 %v1403, 96
      %v1617 = vpop.permute.xlu0 %1616
      %1618 = vrot.lane.b32.xlu0 %v1395, 96
      %v1619 = vpop.permute.xlu0 %1618
      %1620 = vrot.lane.b32.xlu0 %v1405, 96
      %v1621 = vpop.permute.xlu0 %1620
      %v1622 = vsel %vm728, %v1611, %v1613
      %v1623 = vsel %vm728, %v1613, %v1615
      %v1624 = vsel %vm728, %v1617, %v1619
      %v1625 = vsel %vm728, %v1619, %v1621
      %v1630 = vsel %vm1416, %v1622, 0.0
      %v1631 = vsel %vm1417, %v1623, 0.0
      %v1632 = vsel %vm1416, %v1624, 0.0
      %v1633 = vsel %vm1417, %v1625, 0.0
      %1634 = vrot.lane.b32.xlu0 %v1402, 95
      %v1635 = vpop.permute.xlu0 %1634
      %1636 = vrot.lane.b32.xlu0 %v1394, 95
      %v1637 = vpop.permute.xlu0 %1636
      %1638 = vrot.lane.b32.xlu0 %v1404, 95
      %v1639 = vpop.permute.xlu0 %1638
      %1640 = vrot.lane.b32.xlu0 %v1403, 95
      %v1641 = vpop.permute.xlu0 %1640
      %1642 = vrot.lane.b32.xlu0 %v1395, 95
      %v1643 = vpop.permute.xlu0 %1642
      %1644 = vrot.lane.b32.xlu0 %v1405, 95
      %v1645 = vpop.permute.xlu0 %1644
      %v1646 = vsel %vm820, %v1635, %v1637
      %v1647 = vsel %vm820, %v1637, %v1639
      %v1648 = vsel %vm820, %v1641, %v1643
      %v1649 = vsel %vm820, %v1643, %v1645
      %v1654 = vsel %vm619, %v1646, 0.0
      %v1655 = vsel %vm620, %v1647, 0.0
      %v1656 = vsel %vm619, %v1648, 0.0
      %v1657 = vsel %vm620, %v1649, 0.0
      %1658 = vrot.lane.b32.xlu0 %v1402, 93
      %v1659 = vpop.permute.xlu0 %1658
      %1660 = vrot.lane.b32.xlu0 %v1394, 93
      %v1661 = vpop.permute.xlu0 %1660
      %1662 = vrot.lane.b32.xlu0 %v1404, 93
      %v1663 = vpop.permute.xlu0 %1662
      %1664 = vrot.lane.b32.xlu0 %v1403, 93
      %v1665 = vpop.permute.xlu0 %1664
      %1666 = vrot.lane.b32.xlu0 %v1395, 93
      %v1667 = vpop.permute.xlu0 %1666
      %1668 = vrot.lane.b32.xlu0 %v1405, 93
      %v1669 = vpop.permute.xlu0 %1668
      %vm1670 = vcmask 760832
      %v1671 = vsel %vm1670, %v1659, %v1661
      %v1672 = vsel %vm1670, %v1661, %v1663
      %v1673 = vsel %vm1670, %v1665, %v1667
      %v1674 = vsel %vm1670, %v1667, %v1669
      %v1679 = vsel %vm635, %v1671, 0.0
      %v1680 = vsel %vm636, %v1672, 0.0
      %v1681 = vsel %vm635, %v1673, 0.0
      %v1682 = vsel %vm636, %v1674, 0.0
      %1683 = vrot.lane.b32.xlu0 %v1402, 92
      %v1684 = vpop.permute.xlu0 %1683
      %1685 = vrot.lane.b32.xlu0 %v1394, 92
      %v1686 = vpop.permute.xlu0 %1685
      %1687 = vrot.lane.b32.xlu0 %v1404, 92
      %v1688 = vpop.permute.xlu0 %1687
      %1689 = vrot.lane.b32.xlu0 %v1403, 92
      %v1690 = vpop.permute.xlu0 %1689
      %1691 = vrot.lane.b32.xlu0 %v1395, 92
      %v1692 = vpop.permute.xlu0 %1691
      %1693 = vrot.lane.b32.xlu0 %v1405, 92
      %v1694 = vpop.permute.xlu0 %1693
      %vm1695 = vcmask 752640
      %v1696 = vsel %vm1695, %v1684, %v1686
      %v1697 = vsel %vm1695, %v1686, %v1688
      %v1698 = vsel %vm1695, %v1690, %v1692
      %v1699 = vsel %vm1695, %v1692, %v1694
      %v1704 = vsel %vm1485, %v1696, 0.0
      %v1705 = vsel %vm1486, %v1697, 0.0
      %v1706 = vsel %vm1485, %v1698, 0.0
      %v1707 = vsel %vm1486, %v1699, 0.0
      %1708 = vrot.lane.b32.xlu0 %v1402, 80
      %v1709 = vpop.permute.xlu0 %1708
      %1710 = vrot.lane.b32.xlu0 %v1394, 80
      %v1711 = vpop.permute.xlu0 %1710
      %1712 = vrot.lane.b32.xlu0 %v1404, 80
      %v1713 = vpop.permute.xlu0 %1712
      %1714 = vrot.lane.b32.xlu0 %v1403, 80
      %v1715 = vpop.permute.xlu0 %1714
      %1716 = vrot.lane.b32.xlu0 %v1395, 80
      %v1717 = vpop.permute.xlu0 %1716
      %1718 = vrot.lane.b32.xlu0 %v1405, 80
      %v1719 = vpop.permute.xlu0 %1718
      %vm1720 = vcmask 654336
      %v1721 = vsel %vm1720, %v1709, %v1711
      %v1722 = vsel %vm1720, %v1711, %v1713
      %v1723 = vsel %vm1720, %v1715, %v1717
      %v1724 = vsel %vm1720, %v1717, %v1719
      %v1729 = vsel %vm1416, %v1721, 0.0
      %v1730 = vsel %vm1417, %v1722, 0.0
      %v1731 = vsel %vm1416, %v1723, 0.0
      %v1732 = vsel %vm1417, %v1724, 0.0
      %1733 = vrot.lane.b32.xlu0 %v1402, 79
      %v1734 = vpop.permute.xlu0 %1733
      %1735 = vrot.lane.b32.xlu0 %v1394, 79
      %v1736 = vpop.permute.xlu0 %1735
      %1737 = vrot.lane.b32.xlu0 %v1404, 79
      %v1738 = vpop.permute.xlu0 %1737
      %1739 = vrot.lane.b32.xlu0 %v1403, 79
      %v1740 = vpop.permute.xlu0 %1739
      %1741 = vrot.lane.b32.xlu0 %v1395, 79
      %v1742 = vpop.permute.xlu0 %1741
      %1743 = vrot.lane.b32.xlu0 %v1405, 79
      %v1744 = vpop.permute.xlu0 %1743
      %vm1745 = vcmask 646144
      %v1746 = vsel %vm1745, %v1734, %v1736
      %v1747 = vsel %vm1745, %v1736, %v1738
      %v1748 = vsel %vm1745, %v1740, %v1742
      %v1749 = vsel %vm1745, %v1742, %v1744
      %v1754 = vsel %vm619, %v1746, 0.0
      %v1755 = vsel %vm620, %v1747, 0.0
      %v1756 = vsel %vm619, %v1748, 0.0
      %v1757 = vsel %vm620, %v1749, 0.0
      %1758 = vrot.lane.b32.xlu0 %v1402, 77
      %v1759 = vpop.permute.xlu0 %1758
      %1760 = vrot.lane.b32.xlu0 %v1394, 77
      %v1761 = vpop.permute.xlu0 %1760
      %1762 = vrot.lane.b32.xlu0 %v1404, 77
      %v1763 = vpop.permute.xlu0 %1762
      %1764 = vrot.lane.b32.xlu0 %v1403, 77
      %v1765 = vpop.permute.xlu0 %1764
      %1766 = vrot.lane.b32.xlu0 %v1395, 77
      %v1767 = vpop.permute.xlu0 %1766
      %1768 = vrot.lane.b32.xlu0 %v1405, 77
      %v1769 = vpop.permute.xlu0 %1768
      %vm1770 = vcmask 629760
      %v1771 = vsel %vm1770, %v1759, %v1761
      %v1772 = vsel %vm1770, %v1761, %v1763
      %v1773 = vsel %vm1770, %v1765, %v1767
      %v1774 = vsel %vm1770, %v1767, %v1769
      %v1779 = vsel %vm635, %v1771, 0.0
      %v1780 = vsel %vm636, %v1772, 0.0
      %v1781 = vsel %vm635, %v1773, 0.0
      %v1782 = vsel %vm636, %v1774, 0.0
      %1783 = vrot.lane.b32.xlu0 %v1402, 76
      %v1784 = vpop.permute.xlu0 %1783
      %1785 = vrot.lane.b32.xlu0 %v1394, 76
      %v1786 = vpop.permute.xlu0 %1785
      %1787 = vrot.lane.b32.xlu0 %v1404, 76
      %v1788 = vpop.permute.xlu0 %1787
      %1789 = vrot.lane.b32.xlu0 %v1403, 76
      %v1790 = vpop.permute.xlu0 %1789
      %1791 = vrot.lane.b32.xlu0 %v1395, 76
      %v1792 = vpop.permute.xlu0 %1791
      %1793 = vrot.lane.b32.xlu0 %v1405, 76
      %v1794 = vpop.permute.xlu0 %1793
      %vm1795 = vcmask 621568
      %v1796 = vsel %vm1795, %v1784, %v1786
      %v1797 = vsel %vm1795, %v1786, %v1788
      %v1798 = vsel %vm1795, %v1790, %v1792
      %v1799 = vsel %vm1795, %v1792, %v1794
      %v1804 = vsel %vm1485, %v1796, 0.0
      %v1805 = vsel %vm1486, %v1797, 0.0
      %v1806 = vsel %vm1485, %v1798, 0.0
      %v1807 = vsel %vm1486, %v1799, 0.0
      %1808 = vrot.lane.b32.xlu0 %v1402, 64
      %v1809 = vpop.permute.xlu0 %1808
      %1810 = vrot.lane.b32.xlu0 %v1394, 64
      %v1811 = vpop.permute.xlu0 %1810
      %1812 = vrot.lane.b32.xlu0 %v1404, 64
      %v1813 = vpop.permute.xlu0 %1812
      %1814 = vrot.lane.b32.xlu0 %v1403, 64
      %v1815 = vpop.permute.xlu0 %1814
      %1816 = vrot.lane.b32.xlu0 %v1395, 64
      %v1817 = vpop.permute.xlu0 %1816
      %1818 = vrot.lane.b32.xlu0 %v1405, 64
      %v1819 = vpop.permute.xlu0 %1818
      %vm1820 = vcmask 523264
      %v1821 = vsel %vm1820, %v1809, %v1811
      %v1822 = vsel %vm1820, %v1811, %v1813
      %v1823 = vsel %vm1820, %v1815, %v1817
      %v1824 = vsel %vm1820, %v1817, %v1819
      %v1829 = vsel %vm1416, %v1821, 0.0
      %v1830 = vsel %vm1417, %v1822, 0.0
      %v1831 = vsel %vm1416, %v1823, 0.0
      %v1832 = vsel %vm1417, %v1824, 0.0
      %1833 = vrot.lane.b32.xlu0 %v1402, 63
      %v1834 = vpop.permute.xlu0 %1833
      %1835 = vrot.lane.b32.xlu0 %v1394, 63
      %v1836 = vpop.permute.xlu0 %1835
      %1837 = vrot.lane.b32.xlu0 %v1404, 63
      %v1838 = vpop.permute.xlu0 %1837
      %1839 = vrot.lane.b32.xlu0 %v1403, 63
      %v1840 = vpop.permute.xlu0 %1839
      %1841 = vrot.lane.b32.xlu0 %v1395, 63
      %v1842 = vpop.permute.xlu0 %1841
      %1843 = vrot.lane.b32.xlu0 %v1405, 63
      %v1844 = vpop.permute.xlu0 %1843
      %vm1845 = vcmask 515072
      %v1846 = vsel %vm1845, %v1834, %v1836
      %v1847 = vsel %vm1845, %v1836, %v1838
      %v1848 = vsel %vm1845, %v1840, %v1842
      %v1849 = vsel %vm1845, %v1842, %v1844
      %v1854 = vsel %vm619, %v1846, 0.0
      %v1855 = vsel %vm620, %v1847, 0.0
      %v1856 = vsel %vm619, %v1848, 0.0
      %v1857 = vsel %vm620, %v1849, 0.0
      %1858 = vrot.lane.b32.xlu0 %v1402, 61
      %v1859 = vpop.permute.xlu0 %1858
      %1860 = vrot.lane.b32.xlu0 %v1394, 61
      %v1861 = vpop.permute.xlu0 %1860
      %1862 = vrot.lane.b32.xlu0 %v1404, 61
      %v1863 = vpop.permute.xlu0 %1862
      %1864 = vrot.lane.b32.xlu0 %v1403, 61
      %v1865 = vpop.permute.xlu0 %1864
      %1866 = vrot.lane.b32.xlu0 %v1395, 61
      %v1867 = vpop.permute.xlu0 %1866
      %1868 = vrot.lane.b32.xlu0 %v1405, 61
      %v1869 = vpop.permute.xlu0 %1868
      %vm1870 = vcmask 498688
      %v1871 = vsel %vm1870, %v1859, %v1861
      %v1872 = vsel %vm1870, %v1861, %v1863
      %v1873 = vsel %vm1870, %v1865, %v1867
      %v1874 = vsel %vm1870, %v1867, %v1869
      %v1879 = vsel %vm635, %v1871, 0.0
      %v1880 = vsel %vm636, %v1872, 0.0
      %v1881 = vsel %vm635, %v1873, 0.0
      %v1882 = vsel %vm636, %v1874, 0.0
      %1883 = vrot.lane.b32.xlu0 %v1402, 60
      %v1884 = vpop.permute.xlu0 %1883
      %1885 = vrot.lane.b32.xlu0 %v1394, 60
      %v1886 = vpop.permute.xlu0 %1885
      %1887 = vrot.lane.b32.xlu0 %v1404, 60
      %v1888 = vpop.permute.xlu0 %1887
      %1889 = vrot.lane.b32.xlu0 %v1403, 60
      %v1890 = vpop.permute.xlu0 %1889
      %1891 = vrot.lane.b32.xlu0 %v1395, 60
      %v1892 = vpop.permute.xlu0 %1891
      %1893 = vrot.lane.b32.xlu0 %v1405, 60
      %v1894 = vpop.permute.xlu0 %1893
      %vm1895 = vcmask 490496
      %v1896 = vsel %vm1895, %v1884, %v1886
      %v1897 = vsel %vm1895, %v1886, %v1888
      %v1898 = vsel %vm1895, %v1890, %v1892
      %v1899 = vsel %vm1895, %v1892, %v1894
      %v1904 = vsel %vm1485, %v1896, 0.0
      %v1905 = vsel %vm1486, %v1897, 0.0
      %v1906 = vsel %vm1485, %v1898, 0.0
      %v1907 = vsel %vm1486, %v1899, 0.0
      %1908 = vrot.lane.b32.xlu0 %v1402, 126
      %v1909 = vpop.permute.xlu0 %1908
      %1910 = vrot.lane.b32.xlu0 %v1394, 126
      %v1911 = vpop.permute.xlu0 %1910
      %1912 = vrot.lane.b32.xlu0 %v1404, 126
      %v1913 = vpop.permute.xlu0 %1912
      %1914 = vrot.lane.b32.xlu0 %v1403, 126
      %v1915 = vpop.permute.xlu0 %1914
      %1916 = vrot.lane.b32.xlu0 %v1395, 126
      %v1917 = vpop.permute.xlu0 %1916
      %1918 = vrot.lane.b32.xlu0 %v1405, 126
      %v1919 = vpop.permute.xlu0 %1918
      %v1920 = vsel %vm653, %v1909, %v1911
      %v1921 = vsel %vm653, %v1911, %v1913
      %v1922 = vsel %vm653, %v1915, %v1917
      %v1923 = vsel %vm653, %v1917, %v1919
      %1928 = vrot.lane.b32.xlu0 %v1402, 110
      %v1929 = vpop.permute.xlu0 %1928
      %1930 = vrot.lane.b32.xlu0 %v1394, 110
      %v1931 = vpop.permute.xlu0 %1930
      %1932 = vrot.lane.b32.xlu0 %v1404, 110
      %v1933 = vpop.permute.xlu0 %1932
      %1934 = vrot.lane.b32.xlu0 %v1403, 110
      %v1935 = vpop.permute.xlu0 %1934
      %1936 = vrot.lane.b32.xlu0 %v1395, 110
      %v1937 = vpop.permute.xlu0 %1936
      %1938 = vrot.lane.b32.xlu0 %v1405, 110
      %v1939 = vpop.permute.xlu0 %1938
      %v1940 = vsel %vm703, %v1929, %v1931
      %v1941 = vsel %vm703, %v1931, %v1933
      %v1942 = vsel %vm703, %v1935, %v1937
      %v1943 = vsel %vm703, %v1937, %v1939
      %1948 = vrot.lane.b32.xlu0 %v1402, 94
      %v1949 = vpop.permute.xlu0 %1948
      %1950 = vrot.lane.b32.xlu0 %v1394, 94
      %v1951 = vpop.permute.xlu0 %1950
      %1952 = vrot.lane.b32.xlu0 %v1404, 94
      %v1953 = vpop.permute.xlu0 %1952
      %1954 = vrot.lane.b32.xlu0 %v1403, 94
      %v1955 = vpop.permute.xlu0 %1954
      %1956 = vrot.lane.b32.xlu0 %v1395, 94
      %v1957 = vpop.permute.xlu0 %1956
      %1958 = vrot.lane.b32.xlu0 %v1405, 94
      %v1959 = vpop.permute.xlu0 %1958
      %v1960 = vsel %vm753, %v1949, %v1951
      %v1961 = vsel %vm753, %v1951, %v1953
      %v1962 = vsel %vm753, %v1955, %v1957
      %v1963 = vsel %vm753, %v1957, %v1959
      %1968 = vrot.lane.b32.xlu0 %v1402, 78
      %v1969 = vpop.permute.xlu0 %1968
      %1970 = vrot.lane.b32.xlu0 %v1394, 78
      %v1971 = vpop.permute.xlu0 %1970
      %1972 = vrot.lane.b32.xlu0 %v1404, 78
      %v1973 = vpop.permute.xlu0 %1972
      %1974 = vrot.lane.b32.xlu0 %v1403, 78
      %v1975 = vpop.permute.xlu0 %1974
      %1976 = vrot.lane.b32.xlu0 %v1395, 78
      %v1977 = vpop.permute.xlu0 %1976
      %1978 = vrot.lane.b32.xlu0 %v1405, 78
      %v1979 = vpop.permute.xlu0 %1978
      %vm1980 = vcmask 637952
      %v1981 = vsel %vm1980, %v1969, %v1971
      %v1982 = vsel %vm1980, %v1971, %v1973
      %v1983 = vsel %vm1980, %v1975, %v1977
      %v1984 = vsel %vm1980, %v1977, %v1979
      %1989 = vrot.lane.b32.xlu0 %v1402, 62
      %v1990 = vpop.permute.xlu0 %1989
      %1991 = vrot.lane.b32.xlu0 %v1394, 62
      %v1992 = vpop.permute.xlu0 %1991
      %1993 = vrot.lane.b32.xlu0 %v1404, 62
      %v1994 = vpop.permute.xlu0 %1993
      %1995 = vrot.lane.b32.xlu0 %v1403, 62
      %v1996 = vpop.permute.xlu0 %1995
      %1997 = vrot.lane.b32.xlu0 %v1395, 62
      %v1998 = vpop.permute.xlu0 %1997
      %1999 = vrot.lane.b32.xlu0 %v1405, 62
      %v2000 = vpop.permute.xlu0 %1999
      %vm2001 = vcmask 506880
      %v2002 = vsel %vm2001, %v1990, %v1992
      %v2003 = vsel %vm2001, %v1992, %v1994
      %v2004 = vsel %vm2001, %v1996, %v1998
      %v2005 = vsel %vm2001, %v1998, %v2000
      %v2010 = vld [vmem:[%s7] sm:$0xff]
      %v2011 = vld [vmem:[%s7 + $0x8] sm:$0xff]
      %v2012 = vld [vmem:[%s7 + $0x10] sm:$0xff]
      %v2013 = vld [vmem:[%s7 + $0x18] sm:$0xff]
      %v2014 = vld [vmem:[%s7 + $0x20] sm:$0xff]
      %v2015 = vld [vmem:[%s7 + $0x28] sm:$0xff]
      %v2016 = vld [vmem:[%s7 + $0x30] sm:$0xff]
      %v2017 = vld [vmem:[%s7 + $0x38] sm:$0xff]
      %v2018 = vld [vmem:[%s7 + $0x40] sm:$0xff]
      %v2019 = vld [vmem:[%s7 + $0x48] sm:$0xff]
      %v2020 = vld [vmem:[%s7 + $0x50] sm:$0xff]
      %v2021 = vld [vmem:[%s7 + $0x58] sm:$0xff]
      %v2022 = vld [vmem:[%s8] sm:$0xff]
      %v2023 = vld [vmem:[%s8 + $0x8] sm:$0xff]
      %v2024 = vld [vmem:[%s8 + $0x10] sm:$0xff]
      %2026 = vset.pattern.permute.xlu0 0
      %2027 = vperm.xlu0 %2026, %v2022
      %v2028 = vpop.permute.xlu0 %2027
      %2031 = vset.pattern.permute.xlu0 0
      %2032 = vperm.xlu0 %2031, %v2023
      %v2033 = vpop.permute.xlu0 %2032
      %2036 = vset.pattern.permute.xlu0 0
      %2037 = vperm.xlu0 %2036, %v2024
      %v2038 = vpop.permute.xlu0 %2037
      %v2041 = vsel %vm853, %v2013, 0
      %v2044 = vsel %vm853, %v2017, 0
      %v2047 = vsel %vm853, %v2021, 0
      %2049 = vmatprep.subr.mxu0 %v1419
      %2050 = vmatpush1.msra.mxu0 %v1418
      %2051 = vmatprep.subr.mxu0 %v1421
      %2052 = vmatpush1.msra.mxu0 %v1420
      %2053 = vmatprep.subr.mxu0 %v1447
      %2054 = vmatpush1.msra.mxu0 %v1446
      %2055 = vmatprep.subr.mxu0 %v1449
      %2056 = vmatpush1.msra.mxu0 %v1448
      %2057 = vmatprep.subr.mxu0 %v1921
      %2058 = vmatpush1.msra.mxu0 %v1920
      %2059 = vmatprep.subr.mxu0 %v1923
      %2060 = vmatpush1.msra.mxu0 %v1922
      %2061 = vmatprep.subr.mxu0 %v1472
      %2062 = vmatpush1.msra.mxu0 %v1471
      %2063 = vmatprep.subr.mxu0 %v1474
      %2064 = vmatpush1.msra.mxu0 %v1473
      %2065 = vmatprep.subr.mxu0 %v1509
      %2066 = vmatpush1.msra.mxu0 %v1508
      %2067 = vmatprep.subr.mxu0 %v1511
      %2068 = vmatpush1.msra.mxu0 %v1510
      %2069 = vmatprep.subr.mxu0 %v1533
      %2070 = vmatpush1.msra.mxu0 %v1532
      %2071 = vmatprep.subr.mxu0 %v1535
      %2072 = vmatpush1.msra.mxu0 %v1534
      %2073 = vmatprep.subr.mxu0 %v1557
      %2074 = vmatpush1.msra.mxu0 %v1556
      %2075 = vmatprep.subr.mxu0 %v1559
      %2076 = vmatpush1.msra.mxu0 %v1558
      %2077 = vmatprep.subr.mxu0 %v1941
      %2078 = vmatpush1.msra.mxu0 %v1940
      %2079 = vmatprep.subr.mxu0 %v1943
      %2080 = vmatpush1.msra.mxu0 %v1942
      %2081 = vmatprep.subr.mxu0 %v1582
      %2082 = vmatpush1.msra.mxu0 %v1581
      %2083 = vmatprep.subr.mxu0 %v1584
      %2084 = vmatpush1.msra.mxu0 %v1583
      %2085 = vmatprep.subr.mxu0 %v1607
      %2086 = vmatpush1.msra.mxu0 %v1606
      %2087 = vmatprep.subr.mxu0 %v1609
      %2088 = vmatpush1.msra.mxu0 %v1608
      %2089 = vmatprep.subr.mxu0 %v1631
      %2090 = vmatpush1.msra.mxu0 %v1630
      %2091 = vmatprep.subr.mxu0 %v1633
      %2092 = vmatpush1.msra.mxu0 %v1632
      %2093 = vmatprep.subr.mxu0 %v1655
      %2094 = vmatpush1.msra.mxu0 %v1654
      %2095 = vmatprep.subr.mxu0 %v1657
      %2096 = vmatpush1.msra.mxu0 %v1656
      %2097 = vmatprep.subr.mxu0 %v1961
      %2098 = vmatpush1.msra.mxu0 %v1960
      %2099 = vmatprep.subr.mxu0 %v1963
      %2100 = vmatpush1.msra.mxu0 %v1962
      %2101 = vmatprep.subr.mxu0 %v1680
      %2102 = vmatpush1.msra.mxu0 %v1679
      %2103 = vmatprep.subr.mxu0 %v1682
      %2104 = vmatpush1.msra.mxu0 %v1681
      %2105 = vmatprep.subr.mxu0 %v1705
      %2106 = vmatpush1.msra.mxu0 %v1704
      %2107 = vmatprep.subr.mxu0 %v1707
      %2108 = vmatpush1.msra.mxu0 %v1706
      %2109 = vmatprep.subr.mxu0 %v1730
      %2110 = vmatpush1.msra.mxu0 %v1729
      %2111 = vmatprep.subr.mxu0 %v1732
      %2112 = vmatpush1.msra.mxu0 %v1731
      %2113 = vmatprep.mubr.f32.mxu0 %v2011
      %2114 = vmatmul.mubr.f32.gmra.mrb[0].mxu0 %v2010
      %v2115 = vpop.f32.mrb[0].mxu0
      %v2116 = vadd.f32 %v2028, %v2115
      %v2117 = vpop.f32.mrb[0].mxu0
      %v2118 = vadd.f32 %v2028, %v2117
      %2119 = vmatprep.mubr.f32.mxu0 %v2015
      %2120 = vmatmul.mubr.f32.gmra.mrb[0].mxu0 %v2014
      %v2121 = vpop.f32.mrb[0].mxu0
      %v2122 = vadd.f32 %v2033, %v2121
      %v2123 = vpop.f32.mrb[0].mxu0
      %v2124 = vadd.f32 %v2033, %v2123
      %2125 = vmatprep.mubr.f32.mxu0 %v2019
      %2126 = vmatmul.mubr.f32.gmra.mrb[0].mxu0 %v2018
      %v2127 = vpop.f32.mrb[0].mxu0
      %v2128 = vadd.f32 %v2038, %v2127
      %v2129 = vpop.f32.mrb[0].mxu0
      %v2130 = vadd.f32 %v2038, %v2129
      %2131 = vdwg.mxu0
      %2132 = vmatprep.subr.mxu0 %v1755
      %2133 = vmatpush1.msra.mxu0 %v1754
      %2134 = vmatprep.subr.mxu0 %v1757
      %2135 = vmatpush1.msra.mxu0 %v1756
      %2136 = vmatprep.subr.mxu0 %v1982
      %2137 = vmatpush1.msra.mxu0 %v1981
      %2138 = vmatprep.subr.mxu0 %v1984
      %2139 = vmatpush1.msra.mxu0 %v1983
      %2140 = vmatprep.subr.mxu0 %v1780
      %2141 = vmatpush1.msra.mxu0 %v1779
      %2142 = vmatprep.subr.mxu0 %v1782
      %2143 = vmatpush1.msra.mxu0 %v1781
      %2144 = vmatprep.subr.mxu0 %v1805
      %2145 = vmatpush1.msra.mxu0 %v1804
      %2146 = vmatprep.subr.mxu0 %v1807
      %2147 = vmatpush1.msra.mxu0 %v1806
      %2148 = vmatprep.subr.mxu0 %v1830
      %2149 = vmatpush1.msra.mxu0 %v1829
      %2150 = vmatprep.subr.mxu0 %v1832
      %2151 = vmatpush1.msra.mxu0 %v1831
      %2152 = vmatprep.subr.mxu0 %v1855
      %2153 = vmatpush1.msra.mxu0 %v1854
      %2154 = vmatprep.subr.mxu0 %v1857
      %2155 = vmatpush1.msra.mxu0 %v1856
      %2156 = vmatprep.subr.mxu0 %v2003
      %2157 = vmatpush1.msra.mxu0 %v2002
      %2158 = vmatprep.subr.mxu0 %v2005
      %2159 = vmatpush1.msra.mxu0 %v2004
      %2160 = vmatprep.subr.mxu0 %v1880
      %2161 = vmatpush1.msra.mxu0 %v1879
      %2162 = vmatprep.subr.mxu0 %v1882
      %2163 = vmatpush1.msra.mxu0 %v1881
      %2164 = vmatprep.subr.mxu0 %v1905
      %2165 = vmatpush1.msra.mxu0 %v1904
      %2166 = vmatprep.subr.mxu0 %v1907
      %2167 = vmatpush1.msra.mxu0 %v1906
      %2168 = vmatprep.subr.mxu0 0.0
      %2169 = vmatpush1.msra.mxu0 0.0
      %2170 = vmatprep.subr.mxu0 0.0
      %2171 = vmatpush1.msra.mxu0 0.0
      %2172 = vmatprep.subr.mxu0 0.0
      %2173 = vmatpush1.msra.mxu0 0.0
      %2174 = vmatprep.subr.mxu0 0.0
      %2175 = vmatpush1.msra.mxu0 0.0
      %2176 = vmatprep.subr.mxu0 0.0
      %2177 = vmatpush1.msra.mxu0 0.0
      %2178 = vmatprep.subr.mxu0 0.0
      %2179 = vmatpush1.msra.mxu0 0.0
      %2180 = vmatprep.subr.mxu0 0.0
      %2181 = vmatpush1.msra.mxu0 0.0
      %2182 = vmatprep.subr.mxu0 0.0
      %2183 = vmatpush1.msra.mxu0 0.0
      %2184 = vmatprep.subr.mxu0 0.0
      %2185 = vmatpush1.msra.mxu0 0.0
      %2186 = vmatprep.subr.mxu0 0.0
      %2187 = vmatpush1.msra.mxu0 0.0
      %2188 = vmatprep.subr.mxu0 0.0
      %2189 = vmatpush1.msra.mxu0 0.0
      %2190 = vmatprep.subr.mxu0 0.0
      %2191 = vmatpush1.msra.mxu0 0.0
      %2192 = vmatprep.subr.mxu0 0.0
      %2193 = vmatpush1.msra.mxu0 0.0
      %2194 = vmatprep.subr.mxu0 0.0
      %2195 = vmatpush1.msra.mxu0 0.0
      %2196 = vmatprep.mubr.f32.mxu0 %v2041
      %2197 = vmatmul.mubr.f32.gmra.mrb[0].mxu0 %v2012
      %v2198 = vpop.f32.mrb[0].mxu0
      %v2199 = vadd.f32 %v2116, %v2198
      %v2200 = vpop.f32.mrb[0].mxu0
      %v2201 = vadd.f32 %v2118, %v2200
      %2202 = vmatprep.mubr.f32.mxu0 %v2044
      %2203 = vmatmul.mubr.f32.gmra.mrb[0].mxu0 %v2016
      %v2204 = vpop.f32.mrb[0].mxu0
      %v2205 = vadd.f32 %v2122, %v2204
      %v2206 = vpop.f32.mrb[0].mxu0
      %v2207 = vadd.f32 %v2124, %v2206
      %2208 = vmatprep.mubr.f32.mxu0 %v2047
      %2209 = vmatmul.mubr.f32.gmra.mrb[0].mxu0 %v2020
      %v2210 = vpop.f32.mrb[0].mxu0
      %v2211 = vadd.f32 %v2128, %v2210
      %v2212 = vpop.f32.mrb[0].mxu0
      %v2213 = vadd.f32 %v2130, %v2212
      %2214 = vdwg.mxu0
      %2215 = vrot.lane.b32.xlu0 %v414, 17
      %v2216 = vpop.permute.xlu0 %2215
      %2217 = vrot.lane.b32.xlu0 %v458, 17
      %v2218 = vpop.permute.xlu0 %2217
      %v2219 = vsel %vm596, %v2216, %v2218
      %v2223 = vsel %vm596, 0.0, %v2216
      %v2224 = vsel %vm596, %v2218, 0.0
      %v2225 = vsel %vm619, %v2223, 0.0
      %v2226 = vsel %vm620, %v2219, 0.0
      %2229 = vrot.lane.b32.xlu0 %v2223, 126
      %v2230 = vpop.permute.xlu0 %2229
      %2231 = vrot.lane.b32.xlu0 %v2219, 126
      %v2232 = vpop.permute.xlu0 %2231
      %2233 = vrot.lane.b32.xlu0 %v2224, 126
      %v2234 = vpop.permute.xlu0 %2233
      %v2235 = vsel %vm653, %v2230, %v2232
      %v2236 = vsel %vm653, %v2232, %v2234
      %v2239 = vsel %vm635, %v2235, 0.0
      %v2240 = vsel %vm636, %v2236, 0.0
      %2241 = vrot.lane.b32.xlu0 %v2223, 112
      %v2242 = vpop.permute.xlu0 %2241
      %2243 = vrot.lane.b32.xlu0 %v2219, 112
      %v2244 = vpop.permute.xlu0 %2243
      %2245 = vrot.lane.b32.xlu0 %v2224, 112
      %v2246 = vpop.permute.xlu0 %2245
      %v2247 = vsel %vm678, %v2242, %v2244
      %v2248 = vsel %vm678, %v2244, %v2246
      %v2251 = vsel %vm619, %v2247, 0.0
      %v2252 = vsel %vm620, %v2248, 0.0
      %2253 = vrot.lane.b32.xlu0 %v2223, 110
      %v2254 = vpop.permute.xlu0 %2253
      %2255 = vrot.lane.b32.xlu0 %v2219, 110
      %v2256 = vpop.permute.xlu0 %2255
      %2257 = vrot.lane.b32.xlu0 %v2224, 110
      %v2258 = vpop.permute.xlu0 %2257
      %v2259 = vsel %vm703, %v2254, %v2256
      %v2260 = vsel %vm703, %v2256, %v2258
      %v2263 = vsel %vm635, %v2259, 0.0
      %v2264 = vsel %vm636, %v2260, 0.0
      %2265 = vrot.lane.b32.xlu0 %v2223, 96
      %v2266 = vpop.permute.xlu0 %2265
      %2267 = vrot.lane.b32.xlu0 %v2219, 96
      %v2268 = vpop.permute.xlu0 %2267
      %2269 = vrot.lane.b32.xlu0 %v2224, 96
      %v2270 = vpop.permute.xlu0 %2269
      %v2271 = vsel %vm728, %v2266, %v2268
      %v2272 = vsel %vm728, %v2268, %v2270
      %v2275 = vsel %vm619, %v2271, 0.0
      %v2276 = vsel %vm620, %v2272, 0.0
      %2277 = vrot.lane.b32.xlu0 %v2223, 94
      %v2278 = vpop.permute.xlu0 %2277
      %2279 = vrot.lane.b32.xlu0 %v2219, 94
      %v2280 = vpop.permute.xlu0 %2279
      %2281 = vrot.lane.b32.xlu0 %v2224, 94
      %v2282 = vpop.permute.xlu0 %2281
      %v2283 = vsel %vm753, %v2278, %v2280
      %v2284 = vsel %vm753, %v2280, %v2282
      %v2287 = vsel %vm635, %v2283, 0.0
      %v2288 = vsel %vm636, %v2284, 0.0
      %v2289 = vrot.slane %v2223, 4
      %v2290 = vrot.slane %v2219, 4
      %v2291 = vrot.slane %v2224, 4
      %2292 = vrot.lane.b32.xlu0 %v2289, 127
      %v2293 = vpop.permute.xlu0 %2292
      %2294 = vrot.lane.b32.xlu0 %v2290, 127
      %v2295 = vpop.permute.xlu0 %2294
      %2296 = vrot.lane.b32.xlu0 %v2291, 127
      %v2297 = vpop.permute.xlu0 %2296
      %v2298 = vsel %vm778, %v2293, %v2295
      %v2299 = vsel %vm778, %v2295, %v2297
      %v2304 = vrot.slane %v2251, 4
      %v2305 = vrot.slane %v2252, 4
      %2308 = vrot.lane.b32.xlu0 %v2223, 111
      %v2309 = vpop.permute.xlu0 %2308
      %2310 = vrot.lane.b32.xlu0 %v2219, 111
      %v2311 = vpop.permute.xlu0 %2310
      %2312 = vrot.lane.b32.xlu0 %v2224, 111
      %v2313 = vpop.permute.xlu0 %2312
      %v2314 = vsel %vm799, %v2309, %v2311
      %v2315 = vsel %vm799, %v2311, %v2313
      %v2320 = vrot.slane %v2263, 4
      %v2321 = vrot.slane %v2264, 4
      %2324 = vrot.lane.b32.xlu0 %v2289, 95
      %v2325 = vpop.permute.xlu0 %2324
      %2326 = vrot.lane.b32.xlu0 %v2290, 95
      %v2327 = vpop.permute.xlu0 %2326
      %2328 = vrot.lane.b32.xlu0 %v2291, 95
      %v2329 = vpop.permute.xlu0 %2328
      %v2330 = vsel %vm820, %v2325, %v2327
      %v2331 = vsel %vm820, %v2327, %v2329
      %v2334 = vsel %vm478, %v2225, %v2298
      %v2335 = vsel %vm478, %v2226, %v2299
      %v2336 = vsel %vm478, %v2239, %v2304
      %v2337 = vsel %vm478, %v2240, %v2305
      %v2338 = vsel %vm478, %v2314, %v2320
      %v2339 = vsel %vm478, %v2315, %v2321
      %v2340 = vsel %vm478, %v2275, %v2330
      %v2341 = vsel %vm478, %v2276, %v2331
      %v2342 = vld [vmem:[%s9] sm:$0xff]
      %v2343 = vld [vmem:[%s9 + $0x8] sm:$0xff]
      %v2344 = vld [vmem:[%s9 + $0x10] sm:$0xff]
      %v2345 = vld [vmem:[%s10] sm:$0xff]
      %v2346 = vld [vmem:[%s10 + $0x8] sm:$0xff]
      %v2347 = vld [vmem:[%s10 + $0x10] sm:$0xff]
      %2349 = vset.pattern.permute.xlu0 0
      %2350 = vperm.xlu0 %2349, %v2345
      %v2351 = vpop.permute.xlu0 %2350
      %2354 = vset.pattern.permute.xlu0 0
      %2355 = vperm.xlu0 %2354, %v2346
      %v2356 = vpop.permute.xlu0 %2355
      %2359 = vset.pattern.permute.xlu0 0
      %2360 = vperm.xlu0 %2359, %v2347
      %v2361 = vpop.permute.xlu0 %2360
      %vm2363 = vcmask 293888
      %v2365 = vsel %vm2363, %v2342, 0
      %v2368 = vsel %vm2363, %v2343, 0
      %v2371 = vsel %vm2363, %v2344, 0
      %v2374 = vsel %vm478, %v2287, 0
      %v2377 = vsel %vm478, %v2288, 0
      %2379 = vmatprep.subr.mxu0 %v2335
      %2380 = vmatpush1.msra.mxu0 %v2334
      %2381 = vmatprep.subr.mxu0 %v2337
      %2382 = vmatpush1.msra.mxu0 %v2336
      %2383 = vmatprep.subr.mxu0 %v2339
      %2384 = vmatpush1.msra.mxu0 %v2338
      %2385 = vmatprep.subr.mxu0 %v2341
      %2386 = vmatpush1.msra.mxu0 %v2340
      %2387 = vmatprep.subr.mxu0 %v2377
      %2388 = vmatpush1.msra.mxu0 %v2374
      %2389 = vmatprep.subr.mxu0 0.0
      %2390 = vmatpush1.msra.mxu0 0.0
      %2391 = vmatprep.subr.mxu0 0.0
      %2392 = vmatpush1.msra.mxu0 0.0
      %2393 = vmatprep.subr.mxu0 0.0
      %2394 = vmatpush1.msra.mxu0 0.0
      %2395 = vmatprep.subr.mxu0 0.0
      %2396 = vmatpush1.msra.mxu0 0.0
      %2397 = vmatprep.subr.mxu0 0.0
      %2398 = vmatpush1.msra.mxu0 0.0
      %2399 = vmatprep.subr.mxu0 0.0
      %2400 = vmatpush1.msra.mxu0 0.0
      %2401 = vmatprep.subr.mxu0 0.0
      %2402 = vmatpush1.msra.mxu0 0.0
      %2403 = vmatprep.subr.mxu0 0.0
      %2404 = vmatpush1.msra.mxu0 0.0
      %2405 = vmatprep.subr.mxu0 0.0
      %2406 = vmatpush1.msra.mxu0 0.0
      %2407 = vmatprep.subr.mxu0 0.0
      %2408 = vmatpush1.msra.mxu0 0.0
      %2409 = vmatprep.subr.mxu0 0.0
      %2410 = vmatpush1.msra.mxu0 0.0
      %2411 = vmatprep.subr.mxu0 0.0
      %2412 = vmatpush1.msra.mxu0 0.0
      %2413 = vmatprep.subr.mxu0 0.0
      %2414 = vmatpush1.msra.mxu0 0.0
      %2415 = vmatprep.subr.mxu0 0.0
      %2416 = vmatpush1.msra.mxu0 0.0
      %2417 = vmatprep.subr.mxu0 0.0
      %2418 = vmatpush1.msra.mxu0 0.0
      %2419 = vmatprep.subr.mxu0 0.0
      %2420 = vmatpush1.msra.mxu0 0.0
      %2421 = vmatprep.subr.mxu0 0.0
      %2422 = vmatpush1.msra.mxu0 0.0
      %2423 = vmatprep.subr.mxu0 0.0
      %2424 = vmatpush1.msra.mxu0 0.0
      %2425 = vmatprep.subr.mxu0 0.0
      %2426 = vmatpush1.msra.mxu0 0.0
      %2427 = vmatprep.subr.mxu0 0.0
      %2428 = vmatpush1.msra.mxu0 0.0
      %2429 = vmatprep.subr.mxu0 0.0
      %2430 = vmatpush1.msra.mxu0 0.0
      %2431 = vmatprep.subr.mxu0 0.0
      %2432 = vmatpush1.msra.mxu0 0.0
      %2433 = vmatprep.subr.mxu0 0.0
      %2434 = vmatpush1.msra.mxu0 0.0
      %2435 = vmatprep.subr.mxu0 0.0
      %2436 = vmatpush1.msra.mxu0 0.0
      %2437 = vmatprep.subr.mxu0 0.0
      %2438 = vmatpush1.msra.mxu0 0.0
      %2439 = vmatprep.subr.mxu0 0.0
      %2440 = vmatpush1.msra.mxu0 0.0
      %2441 = vmatprep.subr.mxu0 0.0
      %2442 = vmatpush1.msra.mxu0 0.0
      %2443 = vmatprep.mubr.f32.mxu0 0.0
      %2444 = vmatmul.mubr.f32.gmra.mrb[0].mxu0 %v2365
      %v2445 = vpop.f32.mrb[0].mxu0
      %v2446 = vadd.f32 %v2351, %v2445
      %v2447 = vpop.f32.mrb[0].mxu0
      %v2448 = vadd.f32 %v2351, %v2447
      %2449 = vmatprep.mubr.f32.mxu0 0.0
      %2450 = vmatmul.mubr.f32.gmra.mrb[0].mxu0 %v2368
      %v2451 = vpop.f32.mrb[0].mxu0
      %v2452 = vadd.f32 %v2356, %v2451
      %v2453 = vpop.f32.mrb[0].mxu0
      %v2454 = vadd.f32 %v2356, %v2453
      %2455 = vmatprep.mubr.f32.mxu0 0.0
      %2456 = vmatmul.mubr.f32.gmra.mrb[0].mxu0 %v2371
      %v2457 = vpop.f32.mrb[0].mxu0
      %v2458 = vadd.f32 %v2361, %v2457
      %v2459 = vpop.f32.mrb[0].mxu0
      %v2460 = vadd.f32 %v2361, %v2459
      %2461 = vdwg.mxu0
      %2462 = vst [vmem:[%s386] sm:$0xff] %v550
      %2463 = vst [vmem:[%s386 + $0x8] sm:$0xff] %v552
      %2464 = vst [vmem:[%s386 + $0x10] sm:$0xff] %v556
      %2465 = vst [vmem:[%s386 + $0x18] sm:$0xff] %v558
      %2466 = vst [vmem:[%s386 + $0x20] sm:$0xff] %v1365
      %2467 = vst [vmem:[%s386 + $0x28] sm:$0xff] %v1367
      %2468 = vst [vmem:[%s386 + $0x30] sm:$0xff] %v1371
      %2469 = vst [vmem:[%s386 + $0x38] sm:$0xff] %v1373
      %2470 = vst [vmem:[%s386 + $0x40] sm:$0xff] %v1377
      %2471 = vst [vmem:[%s386 + $0x48] sm:$0xff] %v1379
      %2472 = vst [vmem:[%s386 + $0x50] sm:$0xff] %v2199
      %2473 = vst [vmem:[%s386 + $0x58] sm:$0xff] %v2201
      %2474 = vst [vmem:[%s386 + $0x60] sm:$0xff] %v2205
      %2475 = vst [vmem:[%s386 + $0x68] sm:$0xff] %v2207
      %2476 = vst [vmem:[%s386 + $0x70] sm:$0xff] %v2211
      %2477 = vst [vmem:[%s386 + $0x78] sm:$0xff] %v2213
      %2478 = vst [vmem:[%s386 + $0x80] sm:$0xff] %v2446
      %2479 = vst [vmem:[%s386 + $0x88] sm:$0xff] %v2448
      %2480 = vst [vmem:[%s386 + $0x90] sm:$0xff] %v2452
      %2481 = vst [vmem:[%s386 + $0x98] sm:$0xff] %v2454
      %2482 = vst [vmem:[%s386 + $0xa0] sm:$0xff] %v2458
      %2483 = vst [vmem:[%s386 + $0xa8] sm:$0xff] %v2460
      %p2484 = scmp.lt.s32.totalorder %s22, 1
      %s2485 = scalar_select %p2484, %s22, 1
      %s2486 = smul.addr %s2485, 22
      %s2487 = smul.addr %s2486, 8
      %s2488 = scalar_lea.vmem %s11, %s2487
      // Predicated region
      $region65: #{inception_a.1} parent=63 // pred_check
        %p2489 = pneg %p276
      $region66: #{inception_a.1} parent=63 // pred_check_branch
        %2491 = sbr.rel (%p2489) target = $region68
      $region67: #{inception_a.1} parent=63 // pred_region
        _
      $region68: #{inception_a.1} parent=63 // pred_fallthru
        _
    $region64: #{inception_a.1} parent=5 // pred_fallthru
      _
    %p2492 = scmp.le.s32.totalorder 2, %s17
    // Predicated region
    $region69: #{inception_a.1} parent=5 // pred_check
      %p2493 = pneg %p2492
    $region70: #{inception_a.1} parent=5 // pred_check_branch
      %2495 = sbr.rel (%p2493) target = $region72
    $region71: #{inception_a.1} parent=5 // pred_region
      %s2496 = ssub.s32 %s17, 2
      // Predicated region
      $region73: #{inception_a.1} parent=71 // pred_check
        %p2497 = pneg %p282
      $region74: #{inception_a.1} parent=71 // pred_check_branch
        %2499 = sbr.rel (%p2497) target = $region76
      $region75: #{inception_a.1} parent=71 // pred_region
        %p2500 = scmp.lt.s32.totalorder %s23, 1
        %s2501 = scalar_select %p2500, %s23, 1
        %s2502 = smul.addr %s2501, 22
        %s2503 = smul.addr %s2502, 8
        %s2504 = scalar_lea.vmem %s11, %s2503
      $region76: #{inception_a.1} parent=71 // pred_fallthru
        _
    $region72: #{inception_a.1} parent=5 // pred_fallthru
      _
  $region6: #{inception_a.1} parent=0 // loop_footer
    %s21 = sadd.s32 1, %s17
  $region7: #{inception_a.1} parent=0 // loop_footer_branch
    %16 = sbr.rel target = $region3
  $region8: #{inception_a.1} parent=0 // loop_exit
    _

</llo_original>
